<compile_context>
chip_gen: v5e
topology: v5e:2x2
jax: 0.10.0
libtpu: 0.0.40
codegen_flags: <defaults>
</compile_context>

<pallas_src>
import functools

import jax
import jax.numpy as jnp
from jax import lax
from jax.experimental import pallas as pl
from jax.experimental.pallas import tpu as pltpu

# Full-precision XLA matmuls/convs so the pure-JAX reference is a trustworthy
# f32 baseline for the tightened correctness check below.
jax.config.update("jax_default_matmul_precision", "highest")

_DOT_PREC = lax.Precision.HIGHEST


def _round_up(x, m):
    return (x + m - 1) // m * m


# =============================================================================
# Kernel A: fused conv1(1x1x1)+bn1+relu -> conv2(3x3x3, pad=dilation)+bn2+relu
# =============================================================================
def _conv_stage_kernel(x_ref, w1_ref, s1_ref, b1_ref, w2_ref, s2_ref, b2_ref,
                       o_ref, acc_ref, pad_ref,
                       *, D, H, W, Cin, Cmid, dilation, compute_dtype):
    d = pl.program_id(1)
    kd = pl.program_id(2)
    dil = dilation
    d_in = d + (kd - 1) * dil                      # input depth row for this tap
    valid = jnp.logical_and(d_in >= 0, d_in < D)   # out-of-range == zero padding

    @pl.when(kd == 0)
    def _init():
        acc_ref[...] = jnp.zeros_like(acc_ref)
        # Zero once per (n, d): only the interior is rewritten below, so the
        # halo stays zero and implements conv2's H/W "same" (zero) padding.
        pad_ref[...] = jnp.zeros_like(pad_ref)

    @pl.when(valid)
    def _accumulate():
        # ---- conv1 (1x1x1 as matmul) + folded bn1 + relu, fused in VMEM -----
        x2d = x_ref[...].reshape(H * W, Cin)
        mid = jnp.dot(x2d.astype(compute_dtype),
                      w1_ref[...].astype(compute_dtype),
                      preferred_element_type=jnp.float32, precision=_DOT_PREC)
        mid = jnp.maximum(mid * s1_ref[...] + b1_ref[...], 0.0)
        pad_ref[dil:dil + H, dil:dil + W, :] = mid.reshape(H, W, Cmid)

        # ---- accumulate the 9 (kh, kw) taps of the current kd plane ---------
        w2k = w2_ref[...]                          # (1, 3, 3, Cmid, Cmid)
        acc = acc_ref[...]
        for kh in range(3):
            for kw in range(3):
                patch = pad_ref[kh * dil:kh * dil + H, kw * dil:kw * dil + W, :]
                acc = acc + jnp.dot(
                    patch.reshape(H * W, Cmid).astype(compute_dtype),
                    w2k[0, kh, kw].astype(compute_dtype),
                    preferred_element_type=jnp.float32, precision=_DOT_PREC)
        acc_ref[...] = acc

    @pl.when(kd == pl.num_programs(2) - 1)
    def _finalize():
        y = jnp.maximum(acc_ref[...] * s2_ref[...] + b2_ref[...], 0.0)
        o_ref[...] = y.reshape(1, 1, H, W, Cmid).astype(o_ref.dtype)


def conv_stage(x, w1, s1, b1, w2, s2, b2, *, dilation, compute_dtype):
    """y2 = relu(bn2(conv2_3x3x3(relu(bn1(conv1_1x1x1(x)))))), stride=1."""
    N, D, H, W, Cin = x.shape
    Cmid = w1.shape[1]
    dil = dilation
    Hp, Wp = H + 2 * dil, W + 2 * dil

    def x_index_map(n, d, kd):
        # Depth row needed for tap kd (clamped; out-of-range taps are skipped
        # inside the kernel, the clamped DMA is just a dummy fetch).
        d_in = d + (kd - 1) * dil
        return (n, jnp.maximum(0, jnp.minimum(d_in, D - 1)), 0, 0, 0)

    flops = int(N * D * 3 * (2 * H * W * Cin * Cmid
                             + 9 * 2 * H * W * Cmid * Cmid))
    bytes_accessed = int(4 * (N * D * 3 * H * W * Cin       # x rows (per tap)
                              + N * D * H * W * Cmid        # out2 write
                              + Cin * Cmid + 27 * Cmid * Cmid + 4 * Cmid))

    kern = functools.partial(
        _conv_stage_kernel, D=D, H=H, W=W, Cin=Cin, Cmid=Cmid,
        dilation=dil, compute_dtype=compute_dtype)

    return pl.pallas_call(
        kern,
        out_shape=jax.ShapeDtypeStruct((N, D, H, W, Cmid), x.dtype),
        grid_spec=pltpu.PrefetchScalarGridSpec(
            num_scalar_prefetch=0,
            grid=(N, D, 3),
            in_specs=[
                pl.BlockSpec((1, 1, H, W, Cin), x_index_map),
                pl.BlockSpec((Cin, Cmid), lambda n, d, kd: (0, 0)),
                pl.BlockSpec((1, Cmid), lambda n, d, kd: (0, 0)),
                pl.BlockSpec((1, Cmid), lambda n, d, kd: (0, 0)),
                # only the current kd plane of the 3x3x3 weight is resident
                pl.BlockSpec((1, 3, 3, Cmid, Cmid),
                             lambda n, d, kd: (kd, 0, 0, 0, 0)),
                pl.BlockSpec((1, Cmid), lambda n, d, kd: (0, 0)),
                pl.BlockSpec((1, Cmid), lambda n, d, kd: (0, 0)),
            ],
            out_specs=pl.BlockSpec((1, 1, H, W, Cmid),
                                   lambda n, d, kd: (n, d, 0, 0, 0)),
            scratch_shapes=[
                pltpu.VMEM((H * W, Cmid), jnp.float32),    # conv2 accumulator
                pltpu.VMEM((Hp, Wp, Cmid), jnp.float32),   # zero-bordered slab
            ],
        ),
        compiler_params=pltpu.CompilerParams(
            dimension_semantics=("parallel", "parallel", "arbitrary")),
        cost_estimate=pl.CostEstimate(flops=flops, transcendentals=0,
                                      bytes_accessed=bytes_accessed),
    )(x, w1, s1, b1, w2, s2, b2)


# =============================================================================
# Kernel B: fused conv3(1x1x1)+bn3 + residual (identity / conv4) + final relu
# =============================================================================
def _output_stage_kernel(y_ref, x_ref, w3_ref, s3_ref, b3_ref, wr_ref, o_ref,
                         *, compute_dtype):
    y = jnp.dot(y_ref[...].astype(compute_dtype),
                w3_ref[...].astype(compute_dtype),
                preferred_element_type=jnp.float32, precision=_DOT_PREC)
    y = y * s3_ref[...] + b3_ref[...]
    res = jnp.dot(x_ref[...].astype(compute_dtype),
                  wr_ref[...].astype(compute_dtype),
                  preferred_element_type=jnp.float32, precision=_DOT_PREC)
    o_ref[...] = jnp.maximum(y + res, 0.0).astype(o_ref.dtype)


def output_stage(y2d, x2d, w3, s3, b3, w_res, *, block_m, compute_dtype):
    """out = relu((y2d @ w3) * s3 + b3 + x2d @ w_res), tiled over rows."""
    assert block_m % 8 == 0
    M, Cmid = y2d.shape
    Cin = x2d.shape[1]
    Cout = w3.shape[1]

    bm = min(block_m, _round_up(M, 8))
    Mp = _round_up(M, bm)
    if Mp != M:  # ragged tail: pad rows (sliced off below)
        y2d = jnp.pad(y2d, ((0, Mp - M), (0, 0)))
        x2d = jnp.pad(x2d, ((0, Mp - M), (0, 0)))

    flops = int(2 * Mp * (Cmid + Cin) * Cout)
    bytes_accessed = int(4 * (Mp * (Cmid + Cin + Cout)
                              + (Cmid + Cin + 2) * Cout))

    out = pl.pallas_call(
        functools.partial(_output_stage_kernel, compute_dtype=compute_dtype),
        out_shape=jax.ShapeDtypeStruct((Mp, Cout), y2d.dtype),
        grid_spec=pltpu.PrefetchScalarGridSpec(
            num_scalar_prefetch=0,
            grid=(Mp // bm,),
            in_specs=[
                pl.BlockSpec((bm, Cmid), lambda i: (i, 0)),
                pl.BlockSpec((bm, Cin), lambda i: (i, 0)),
                pl.BlockSpec((Cmid, Cout), lambda i: (0, 0)),
                pl.BlockSpec((1, Cout), lambda i: (0, 0)),
                pl.BlockSpec((1, Cout), lambda i: (0, 0)),
                pl.BlockSpec((Cin, Cout), lambda i: (0, 0)),
            ],
            out_specs=pl.BlockSpec((bm, Cout), lambda i: (i, 0)),
        ),
        compiler_params=pltpu.CompilerParams(
            dimension_semantics=("parallel",)),
        cost_estimate=pl.CostEstimate(flops=flops, transcendentals=0,
                                      bytes_accessed=bytes_accessed),
    )(y2d, x2d, w3, s3, b3, w_res)
    return out[:M]


# =============================================================================
# BottleneckAG forward
# =============================================================================
def _bn_fold(gamma, beta, mean, var, eps=1e-5):
    scale = gamma / jnp.sqrt(var + eps)
    bias = beta - mean * scale
    return (scale.reshape(1, -1).astype(jnp.float32),
            bias.reshape(1, -1).astype(jnp.float32))


def bottleneck_ag_forward(x, p, *, inplanes, outplanes, stride=1, dilation=1,
                          block_m=512, compute_dtype=jnp.float32):
    """x: (N, D, H, W, inplanes) float32 -> (N, D, H, W, outplanes)."""
    # TODO(synk): stride > 1 (strided conv2 + conv4 downsample) not implemented.
    assert stride == 1, "Pallas BottleneckAG kernels support stride=1 only"
    N, D, H, W, Cin = x.shape
    assert Cin == inplanes
    mid = outplanes // 4
    M = N * D * H * W

    s1, b1 = _bn_fold(p["gamma1"], p["beta1"], p["mean1"], p["var1"])
    s2, b2 = _bn_fold(p["gamma2"], p["beta2"], p["mean2"], p["var2"])
    s3, b3 = _bn_fold(p["gamma3"], p["beta3"], p["mean3"], p["var3"])

    # conv1+bn1+relu fused into conv2+bn2+relu (single pallas_call, no out1 HBM
    # round trip, no padded copy of the activation in HBM).
    out2 = conv_stage(x, p["w1"], s1, b1, p["w2"], s2, b2,
                      dilation=dilation, compute_dtype=compute_dtype)

    # Residual path: conv4 projection when shapes change, identity otherwise
    # (expressed as an identity matrix so kernel B has a single fused code path;
    # as in the PyTorch module, no BN is applied on the conv4 branch).
    if inplanes != outplanes or stride != 1:
        w_res = p["w4"]
    else:
        w_res = jnp.eye(inplanes, dtype=x.dtype)

    out = output_stage(out2.reshape(M, mid), x.reshape(M, inplanes),
                       p["w3"], s3, b3, w_res,
                       block_m=block_m, compute_dtype=compute_dtype)
    return out.reshape(N, D, H, W, outplanes)


# =============================================================================
# Pure-JAX reference (for correctness check)
# =============================================================================
def reference_forward(x, p, *, inplanes, outplanes, stride=1, dilation=1):
    s1, b1 = _bn_fold(p["gamma1"], p["beta1"], p["mean1"], p["var1"])
    s2, b2 = _bn_fold(p["gamma2"], p["beta2"], p["mean2"], p["var2"])
    s3, b3 = _bn_fold(p["gamma3"], p["beta3"], p["mean3"], p["var3"])

    out = jnp.einsum("ndhwc,cm->ndhwm", x, p["w1"]) * s1 + b1
    out = jax.nn.relu(out)
    out = lax.conv_general_dilated(
        out, p["w2"], window_strides=(stride,) * 3,
        padding=[(dilation, dilation)] * 3, rhs_dilation=(dilation,) * 3,
        dimension_numbers=("NDHWC", "DHWIO", "NDHWC"))
    out = jax.nn.relu(out * s2 + b2)
    out = jnp.einsum("ndhwc,cm->ndhwm", out, p["w3"]) * s3 + b3
    if inplanes != outplanes or stride != 1:
        residual = jnp.einsum("ndhwc,cm->ndhwm",
                              x[:, ::stride, ::stride, ::stride, :], p["w4"])
    else:
        residual = x
    return jax.nn.relu(out + residual)


# =============================================================================
# Test harness
# =============================================================================
def make_params(key, inplanes, outplanes):
    mid = outplanes // 4
    ks = jax.random.split(key, 16)
    return {
        "w1": 0.1 * jax.random.normal(ks[0], (inplanes, mid), jnp.float32),
        "w2": 0.1 * jax.random.normal(ks[1], (3, 3, 3, mid, mid), jnp.float32),
        "w3": 0.1 * jax.random.normal(ks[2], (mid, outplanes), jnp.float32),
        "w4": 0.1 * jax.random.normal(ks[3], (inplanes, outplanes), jnp.float32),
        "gamma1": 1.0 + 0.1 * jax.random.normal(ks[4], (mid,), jnp.float32),
        "beta1": 0.1 * jax.random.normal(ks[5], (mid,), jnp.float32),
        "mean1": 0.1 * jax.random.normal(ks[6], (mid,), jnp.float32),
        "var1": jax.random.uniform(ks[7], (mid,), jnp.float32, 0.5, 1.5),
        "gamma2": 1.0 + 0.1 * jax.random.normal(ks[8], (mid,), jnp.float32),
        "beta2": 0.1 * jax.random.normal(ks[9], (mid,), jnp.float32),
        "mean2": 0.1 * jax.random.normal(ks[10], (mid,), jnp.float32),
        "var2": jax.random.uniform(ks[11], (mid,), jnp.float32, 0.5, 1.5),
        "gamma3": 1.0 + 0.1 * jax.random.normal(ks[12], (outplanes,), jnp.float32),
        "beta3": 0.1 * jax.random.normal(ks[13], (outplanes,), jnp.float32),
        "mean3": 0.1 * jax.random.normal(ks[14], (outplanes,), jnp.float32),
        "var3": jax.random.uniform(ks[15], (outplanes,), jnp.float32, 0.5, 1.5),
    }


def run_case(key, *, N, D, H, W, inplanes, outplanes, dilation,
             compute_dtype, block_m, tol):
    kx, kp = jax.random.split(key)
    x = jax.random.normal(kx, (N, D, H, W, inplanes), jnp.float32)
    params = make_params(kp, inplanes, outplanes)

    out = bottleneck_ag_forward(x, params, inplanes=inplanes,
                                outplanes=outplanes, stride=1,
                                dilation=dilation, block_m=block_m,
                                compute_dtype=compute_dtype)
    out = jax.block_until_ready(out)

    ref = jax.block_until_ready(
        reference_forward(x, params, inplanes=inplanes, outplanes=outplanes,
                          stride=1, dilation=dilation))

    assert out.shape == (N, D, H, W, outplanes), out.shape
    err = float(jnp.max(jnp.abs(out - ref)))
    assert err < tol, f"max abs error {err} (tol {tol})"


if __name__ == "__main__":
    key = jax.random.PRNGKey(0)
    k1, k2, k3 = jax.random.split(key, 3)

    # block_m=128 exercises the multi-tile pipelined path at these toy sizes;
    # sweep 512-2048 rows in production.

    # 1) projection residual (inplanes != outplanes), dilation 1, f32 MXU,
    #    tight tolerance (2 orders of magnitude tighter than before).
    run_case(k1, N=2, D=4, H=8, W=8, inplanes=8, outplanes=16, dilation=1,
             compute_dtype=jnp.float32, block_m=128, tol=2e-4)

    # 2) identity residual, dilation 2 (exercises depth-tap skipping and the
    #    wider H/W halo), f32 MXU.
    run_case(k2, N=2, D=4, H=8, W=8, inplanes=16, outplanes=16, dilation=2,
             compute_dtype=jnp.float32, block_m=128, tol=2e-4)

    # 3) bf16 MXU operands (v6e/v7x fast path) with f32 accumulation.
    run_case(k3, N=2, D=4, H=8, W=8, inplanes=8, outplanes=16, dilation=1,
             compute_dtype=jnp.bfloat16, block_m=128, tol=5e-2)

    print("KERNEL_OK")
</pallas_src>

<mosaic_0001>
module attributes {stable_mosaic.version = 11 : i64} {
  func.func @_conv_stage_kernel(%arg0: i32, %arg1: i32, %arg2: i32, %arg3: memref<1x1x8x8x8xf32, #tpu.memory_space<vmem>>, %arg4: memref<8x4xf32, #tpu.memory_space<vmem>>, %arg5: memref<1x4xf32, #tpu.memory_space<vmem>>, %arg6: memref<1x4xf32, #tpu.memory_space<vmem>>, %arg7: memref<1x3x3x4x4xf32, #tpu.memory_space<vmem>>, %arg8: memref<1x4xf32, #tpu.memory_space<vmem>>, %arg9: memref<1x4xf32, #tpu.memory_space<vmem>>, %arg10: memref<1x1x8x8x4xf32, #tpu.memory_space<vmem>>, %arg11: memref<64x4xf32, #tpu.memory_space<vmem>>, %arg12: memref<10x10x4xf32, #tpu.memory_space<vmem>>) attributes {dimension_semantics = [#tpu.dimension_semantics<parallel>, #tpu.dimension_semantics<parallel>, #tpu.dimension_semantics<arbitrary>], iteration_bounds = array<i64: 2, 4, 3>, scalar_prefetch = 0 : i64, scratch_operands = 2 : i64, tpu.core_type = #tpu.core_type<tc>, window_params = [{transform_indices = @transform_0, window_bounds = array<i64: 1, 1, 8, 8, 8>}, {pipeline_mode = #tpu.pipeline_mode<synchronous>, transform_indices = @transform_1, window_bounds = array<i64: 8, 4>}, {pipeline_mode = #tpu.pipeline_mode<synchronous>, transform_indices = @transform_2, window_bounds = array<i64: 1, 4>}, {pipeline_mode = #tpu.pipeline_mode<synchronous>, transform_indices = @transform_3, window_bounds = array<i64: 1, 4>}, {transform_indices = @transform_4, window_bounds = array<i64: 1, 3, 3, 4, 4>}, {pipeline_mode = #tpu.pipeline_mode<synchronous>, transform_indices = @transform_5, window_bounds = array<i64: 1, 4>}, {pipeline_mode = #tpu.pipeline_mode<synchronous>, transform_indices = @transform_6, window_bounds = array<i64: 1, 4>}, {transform_indices = @transform_7, window_bounds = array<i64: 1, 1, 8, 8, 4>}]} {
    %c1_i32 = arith.constant 1 : i32
    %0 = arith.subi %arg2, %c1_i32 : i32
    %c1_i32_0 = arith.constant 1 : i32
    %1 = arith.muli %0, %c1_i32_0 : i32
    %2 = arith.addi %arg1, %1 : i32
    %c0_i32 = arith.constant 0 : i32
    %3 = arith.cmpi sge, %2, %c0_i32 : i32
    %c4_i32 = arith.constant 4 : i32
    %4 = arith.cmpi slt, %2, %c4_i32 : i32
    %5 = arith.andi %3, %4 : i1
    %c0_i32_1 = arith.constant 0 : i32
    %6 = arith.cmpi eq, %arg2, %c0_i32_1 : i32
    %7 = arith.extui %6 : i1 to i32
    %c0_i32_2 = arith.constant 0 : i32
    %8 = arith.cmpi ne, %7, %c0_i32_2 : i32
    scf.if %8 {
      %cst = arith.constant 0.000000e+00 : f32
      %14 = vector.broadcast %cst : f32 to vector<64x4xf32>
      %c0 = arith.constant 0 : index
      %c0_5 = arith.constant 0 : index
      %15 = vector.load %arg11[%c0, %c0_5] : memref<64x4xf32, #tpu.memory_space<vmem>>, vector<64x4xf32>
      tpu.vector_store %arg11[%c0, %c0_5], %14 {strides = array<i32>} : memref<64x4xf32, #tpu.memory_space<vmem>>, vector<64x4xf32>,
      %cst_6 = arith.constant 0.000000e+00 : f32
      %16 = vector.broadcast %cst_6 : f32 to vector<10x10x4xf32>
      %c0_7 = arith.constant 0 : index
      %c0_8 = arith.constant 0 : index
      %c0_9 = arith.constant 0 : index
      %17 = vector.load %arg12[%c0_7, %c0_8, %c0_9] : memref<10x10x4xf32, #tpu.memory_space<vmem>>, vector<10x10x4xf32>
      tpu.vector_store %arg12[%c0_7, %c0_8, %c0_9], %16 {strides = array<i32>} : memref<10x10x4xf32, #tpu.memory_space<vmem>>, vector<10x10x4xf32>,
    } else {
    }
    %9 = arith.extui %5 : i1 to i32
    %c0_i32_3 = arith.constant 0 : i32
    %10 = arith.cmpi ne, %9, %c0_i32_3 : i32
    scf.if %10 {
      %c0 = arith.constant 0 : index
      %c0_5 = arith.constant 0 : index
      %c0_6 = arith.constant 0 : index
      %c0_7 = arith.constant 0 : index
      %c0_8 = arith.constant 0 : index
      %14 = vector.load %arg3[%c0, %c0_5, %c0_6, %c0_7, %c0_8] : memref<1x1x8x8x8xf32, #tpu.memory_space<vmem>>, vector<1x1x8x8x8xf32>
      %15 = vector.shape_cast %14 : vector<1x1x8x8x8xf32> to vector<64x8xf32>
      %c0_9 = arith.constant 0 : index
      %c0_10 = arith.constant 0 : index
      %16 = vector.load %arg4[%c0_9, %c0_10] : memref<8x4xf32, #tpu.memory_space<vmem>>, vector<8x4xf32>
      %cst = arith.constant dense<0.000000e+00> : vector<64x4xf32>
      %17 = tpu.matmul %15, %16, %cst {dimension_numbers = #tpu.dot_dimension_numbers<[1], [0], [0], [1], [0, 0, 1, 1], [], []>, precision = #tpu.contract_precision<fp32>} : vector<64x8xf32>, vector<8x4xf32>, vector<64x4xf32> -> vector<64x4xf32>
      %c0_11 = arith.constant 0 : index
      %c0_12 = arith.constant 0 : index
      %18 = vector.load %arg5[%c0_11, %c0_12] : memref<1x4xf32, #tpu.memory_space<vmem>>, vector<1x4xf32>
      %19 = vector.broadcast %18 : vector<1x4xf32> to vector<64x4xf32>
      %20 = arith.mulf %17, %19 : vector<64x4xf32>
      %c0_13 = arith.constant 0 : index
      %c0_14 = arith.constant 0 : index
      %21 = vector.load %arg6[%c0_13, %c0_14] : memref<1x4xf32, #tpu.memory_space<vmem>>, vector<1x4xf32>
      %22 = vector.broadcast %21 : vector<1x4xf32> to vector<64x4xf32>
      %23 = arith.addf %20, %22 : vector<64x4xf32>
      %cst_15 = arith.constant 0.000000e+00 : f32
      %24 = vector.broadcast %cst_15 : f32 to vector<64x4xf32>
      %25 = arith.maximumf %23, %24 : vector<64x4xf32>
      %26 = vector.shape_cast %25 : vector<64x4xf32> to vector<8x8x4xf32>
      %c1 = arith.constant 1 : index
      %c1_16 = arith.constant 1 : index
      %c0_17 = arith.constant 0 : index
      %27 = vector.load %arg12[%c1, %c1_16, %c0_17] : memref<10x10x4xf32, #tpu.memory_space<vmem>>, vector<8x8x4xf32>
      tpu.vector_store %arg12[%c1, %c1_16, %c0_17], %26 {strides = array<i32>} : memref<10x10x4xf32, #tpu.memory_space<vmem>>, vector<8x8x4xf32>,
      %c0_18 = arith.constant 0 : index
      %c0_19 = arith.constant 0 : index
      %c0_20 = arith.constant 0 : index
      %c0_21 = arith.constant 0 : index
      %c0_22 = arith.constant 0 : index
      %28 = vector.load %arg7[%c0_18, %c0_19, %c0_20, %c0_21, %c0_22] : memref<1x3x3x4x4xf32, #tpu.memory_space<vmem>>, vector<1x3x3x4x4xf32>
      %c0_23 = arith.constant 0 : index
      %c0_24 = arith.constant 0 : index
      %29 = vector.load %arg11[%c0_23, %c0_24] : memref<64x4xf32, #tpu.memory_space<vmem>>, vector<64x4xf32>
      %c0_25 = arith.constant 0 : index
      %c0_26 = arith.constant 0 : index
      %c0_27 = arith.constant 0 : index
      %30 = vector.load %arg12[%c0_25, %c0_26, %c0_27] : memref<10x10x4xf32, #tpu.memory_space<vmem>>, vector<8x8x4xf32>
      %31 = vector.shape_cast %30 : vector<8x8x4xf32> to vector<64x4xf32>
      %32 = vector.extract_strided_slice %28 {offsets = [0, 0, 0, 0, 0], sizes = [1, 1, 1, 4, 4], strides = [1, 1, 1, 1, 1]} : vector<1x3x3x4x4xf32> to vector<1x1x1x4x4xf32>
      %33 = vector.shape_cast %32 : vector<1x1x1x4x4xf32> to vector<4x4xf32>
      %cst_28 = arith.constant dense<0.000000e+00> : vector<64x4xf32>
      %34 = tpu.matmul %31, %33, %cst_28 {dimension_numbers = #tpu.dot_dimension_numbers<[1], [0], [0], [1], [0, 0, 1, 1], [], []>, precision = #tpu.contract_precision<fp32>} : vector<64x4xf32>, vector<4x4xf32>, vector<64x4xf32> -> vector<64x4xf32>
      %35 = arith.addf %29, %34 : vector<64x4xf32>
      %c0_29 = arith.constant 0 : index
      %c1_30 = arith.constant 1 : index
      %c0_31 = arith.constant 0 : index
      %36 = vector.load %arg12[%c0_29, %c1_30, %c0_31] : memref<10x10x4xf32, #tpu.memory_space<vmem>>, vector<8x8x4xf32>
      %37 = vector.shape_cast %36 : vector<8x8x4xf32> to vector<64x4xf32>
      %38 = vector.extract_strided_slice %28 {offsets = [0, 0, 1, 0, 0], sizes = [1, 1, 1, 4, 4], strides = [1, 1, 1, 1, 1]} : vector<1x3x3x4x4xf32> to vector<1x1x1x4x4xf32>
      %39 = vector.shape_cast %38 : vector<1x1x1x4x4xf32> to vector<4x4xf32>
      %cst_32 = arith.constant dense<0.000000e+00> : vector<64x4xf32>
      %40 = tpu.matmul %37, %39, %cst_32 {dimension_numbers = #tpu.dot_dimension_numbers<[1], [0], [0], [1], [0, 0, 1, 1], [], []>, precision = #tpu.contract_precision<fp32>} : vector<64x4xf32>, vector<4x4xf32>, vector<64x4xf32> -> vector<64x4xf32>
      %41 = arith.addf %35, %40 : vector<64x4xf32>
      %c0_33 = arith.constant 0 : index
      %c2 = arith.constant 2 : index
      %c0_34 = arith.constant 0 : index
      %42 = vector.load %arg12[%c0_33, %c2, %c0_34] : memref<10x10x4xf32, #tpu.memory_space<vmem>>, vector<8x8x4xf32>
      %43 = vector.shape_cast %42 : vector<8x8x4xf32> to vector<64x4xf32>
      %44 = vector.extract_strided_slice %28 {offsets = [0, 0, 2, 0, 0], sizes = [1, 1, 1, 4, 4], strides = [1, 1, 1, 1, 1]} : vector<1x3x3x4x4xf32> to vector<1x1x1x4x4xf32>
      %45 = vector.shape_cast %44 : vector<1x1x1x4x4xf32> to vector<4x4xf32>
      %cst_35 = arith.constant dense<0.000000e+00> : vector<64x4xf32>
      %46 = tpu.matmul %43, %45, %cst_35 {dimension_numbers = #tpu.dot_dimension_numbers<[1], [0], [0], [1], [0, 0, 1, 1], [], []>, precision = #tpu.contract_precision<fp32>} : vector<64x4xf32>, vector<4x4xf32>, vector<64x4xf32> -> vector<64x4xf32>
      %47 = arith.addf %41, %46 : vector<64x4xf32>
      %c1_36 = arith.constant 1 : index
      %c0_37 = arith.constant 0 : index
      %c0_38 = arith.constant 0 : index
      %48 = vector.load %arg12[%c1_36, %c0_37, %c0_38] : memref<10x10x4xf32, #tpu.memory_space<vmem>>, vector<8x8x4xf32>
      %49 = vector.shape_cast %48 : vector<8x8x4xf32> to vector<64x4xf32>
      %50 = vector.extract_strided_slice %28 {offsets = [0, 1, 0, 0, 0], sizes = [1, 1, 1, 4, 4], strides = [1, 1, 1, 1, 1]} : vector<1x3x3x4x4xf32> to vector<1x1x1x4x4xf32>
      %51 = vector.shape_cast %50 : vector<1x1x1x4x4xf32> to vector<4x4xf32>
      %cst_39 = arith.constant dense<0.000000e+00> : vector<64x4xf32>
      %52 = tpu.matmul %49, %51, %cst_39 {dimension_numbers = #tpu.dot_dimension_numbers<[1], [0], [0], [1], [0, 0, 1, 1], [], []>, precision = #tpu.contract_precision<fp32>} : vector<64x4xf32>, vector<4x4xf32>, vector<64x4xf32> -> vector<64x4xf32>
      %53 = arith.addf %47, %52 : vector<64x4xf32>
      %c1_40 = arith.constant 1 : index
      %c1_41 = arith.constant 1 : index
      %c0_42 = arith.constant 0 : index
      %54 = vector.load %arg12[%c1_40, %c1_41, %c0_42] : memref<10x10x4xf32, #tpu.memory_space<vmem>>, vector<8x8x4xf32>
      %55 = vector.shape_cast %54 : vector<8x8x4xf32> to vector<64x4xf32>
      %56 = vector.extract_strided_slice %28 {offsets = [0, 1, 1, 0, 0], sizes = [1, 1, 1, 4, 4], strides = [1, 1, 1, 1, 1]} : vector<1x3x3x4x4xf32> to vector<1x1x1x4x4xf32>
      %57 = vector.shape_cast %56 : vector<1x1x1x4x4xf32> to vector<4x4xf32>
      %cst_43 = arith.constant dense<0.000000e+00> : vector<64x4xf32>
      %58 = tpu.matmul %55, %57, %cst_43 {dimension_numbers = #tpu.dot_dimension_numbers<[1], [0], [0], [1], [0, 0, 1, 1], [], []>, precision = #tpu.contract_precision<fp32>} : vector<64x4xf32>, vector<4x4xf32>, vector<64x4xf32> -> vector<64x4xf32>
      %59 = arith.addf %53, %58 : vector<64x4xf32>
      %c1_44 = arith.constant 1 : index
      %c2_45 = arith.constant 2 : index
      %c0_46 = arith.constant 0 : index
      %60 = vector.load %arg12[%c1_44, %c2_45, %c0_46] : memref<10x10x4xf32, #tpu.memory_space<vmem>>, vector<8x8x4xf32>
      %61 = vector.shape_cast %60 : vector<8x8x4xf32> to vector<64x4xf32>
      %62 = vector.extract_strided_slice %28 {offsets = [0, 1, 2, 0, 0], sizes = [1, 1, 1, 4, 4], strides = [1, 1, 1, 1, 1]} : vector<1x3x3x4x4xf32> to vector<1x1x1x4x4xf32>
      %63 = vector.shape_cast %62 : vector<1x1x1x4x4xf32> to vector<4x4xf32>
      %cst_47 = arith.constant dense<0.000000e+00> : vector<64x4xf32>
      %64 = tpu.matmul %61, %63, %cst_47 {dimension_numbers = #tpu.dot_dimension_numbers<[1], [0], [0], [1], [0, 0, 1, 1], [], []>, precision = #tpu.contract_precision<fp32>} : vector<64x4xf32>, vector<4x4xf32>, vector<64x4xf32> -> vector<64x4xf32>
      %65 = arith.addf %59, %64 : vector<64x4xf32>
      %c2_48 = arith.constant 2 : index
      %c0_49 = arith.constant 0 : index
      %c0_50 = arith.constant 0 : index
      %66 = vector.load %arg12[%c2_48, %c0_49, %c0_50] : memref<10x10x4xf32, #tpu.memory_space<vmem>>, vector<8x8x4xf32>
      %67 = vector.shape_cast %66 : vector<8x8x4xf32> to vector<64x4xf32>
      %68 = vector.extract_strided_slice %28 {offsets = [0, 2, 0, 0, 0], sizes = [1, 1, 1, 4, 4], strides = [1, 1, 1, 1, 1]} : vector<1x3x3x4x4xf32> to vector<1x1x1x4x4xf32>
      %69 = vector.shape_cast %68 : vector<1x1x1x4x4xf32> to vector<4x4xf32>
      %cst_51 = arith.constant dense<0.000000e+00> : vector<64x4xf32>
      %70 = tpu.matmul %67, %69, %cst_51 {dimension_numbers = #tpu.dot_dimension_numbers<[1], [0], [0], [1], [0, 0, 1, 1], [], []>, precision = #tpu.contract_precision<fp32>} : vector<64x4xf32>, vector<4x4xf32>, vector<64x4xf32> -> vector<64x4xf32>
      %71 = arith.addf %65, %70 : vector<64x4xf32>
      %c2_52 = arith.constant 2 : index
      %c1_53 = arith.constant 1 : index
      %c0_54 = arith.constant 0 : index
      %72 = vector.load %arg12[%c2_52, %c1_53, %c0_54] : memref<10x10x4xf32, #tpu.memory_space<vmem>>, vector<8x8x4xf32>
      %73 = vector.shape_cast %72 : vector<8x8x4xf32> to vector<64x4xf32>
      %74 = vector.extract_strided_slice %28 {offsets = [0, 2, 1, 0, 0], sizes = [1, 1, 1, 4, 4], strides = [1, 1, 1, 1, 1]} : vector<1x3x3x4x4xf32> to vector<1x1x1x4x4xf32>
      %75 = vector.shape_cast %74 : vector<1x1x1x4x4xf32> to vector<4x4xf32>
      %cst_55 = arith.constant dense<0.000000e+00> : vector<64x4xf32>
      %76 = tpu.matmul %73, %75, %cst_55 {dimension_numbers = #tpu.dot_dimension_numbers<[1], [0], [0], [1], [0, 0, 1, 1], [], []>, precision = #tpu.contract_precision<fp32>} : vector<64x4xf32>, vector<4x4xf32>, vector<64x4xf32> -> vector<64x4xf32>
      %77 = arith.addf %71, %76 : vector<64x4xf32>
      %c2_56 = arith.constant 2 : index
      %c2_57 = arith.constant 2 : index
      %c0_58 = arith.constant 0 : index
      %78 = vector.load %arg12[%c2_56, %c2_57, %c0_58] : memref<10x10x4xf32, #tpu.memory_space<vmem>>, vector<8x8x4xf32>
      %79 = vector.shape_cast %78 : vector<8x8x4xf32> to vector<64x4xf32>
      %80 = vector.extract_strided_slice %28 {offsets = [0, 2, 2, 0, 0], sizes = [1, 1, 1, 4, 4], strides = [1, 1, 1, 1, 1]} : vector<1x3x3x4x4xf32> to vector<1x1x1x4x4xf32>
      %81 = vector.shape_cast %80 : vector<1x1x1x4x4xf32> to vector<4x4xf32>
      %cst_59 = arith.constant dense<0.000000e+00> : vector<64x4xf32>
      %82 = tpu.matmul %79, %81, %cst_59 {dimension_numbers = #tpu.dot_dimension_numbers<[1], [0], [0], [1], [0, 0, 1, 1], [], []>, precision = #tpu.contract_precision<fp32>} : vector<64x4xf32>, vector<4x4xf32>, vector<64x4xf32> -> vector<64x4xf32>
      %83 = arith.addf %77, %82 : vector<64x4xf32>
      %c0_60 = arith.constant 0 : index
      %c0_61 = arith.constant 0 : index
      %84 = vector.load %arg11[%c0_60, %c0_61] : memref<64x4xf32, #tpu.memory_space<vmem>>, vector<64x4xf32>
      tpu.vector_store %arg11[%c0_60, %c0_61], %83 {strides = array<i32>} : memref<64x4xf32, #tpu.memory_space<vmem>>, vector<64x4xf32>,
    } else {
    }
    %c2_i32 = arith.constant 2 : i32
    %11 = arith.cmpi eq, %arg2, %c2_i32 : i32
    %12 = arith.extui %11 : i1 to i32
    %c0_i32_4 = arith.constant 0 : i32
    %13 = arith.cmpi ne, %12, %c0_i32_4 : i32
    scf.if %13 {
      %c0 = arith.constant 0 : index
      %c0_5 = arith.constant 0 : index
      %14 = vector.load %arg11[%c0, %c0_5] : memref<64x4xf32, #tpu.memory_space<vmem>>, vector<64x4xf32>
      %c0_6 = arith.constant 0 : index
      %c0_7 = arith.constant 0 : index
      %15 = vector.load %arg8[%c0_6, %c0_7] : memref<1x4xf32, #tpu.memory_space<vmem>>, vector<1x4xf32>
      %16 = vector.broadcast %15 : vector<1x4xf32> to vector<64x4xf32>
      %17 = arith.mulf %14, %16 : vector<64x4xf32>
      %c0_8 = arith.constant 0 : index
      %c0_9 = arith.constant 0 : index
      %18 = vector.load %arg9[%c0_8, %c0_9] : memref<1x4xf32, #tpu.memory_space<vmem>>, vector<1x4xf32>
      %19 = vector.broadcast %18 : vector<1x4xf32> to vector<64x4xf32>
      %20 = arith.addf %17, %19 : vector<64x4xf32>
      %cst = arith.constant 0.000000e+00 : f32
      %21 = vector.broadcast %cst : f32 to vector<64x4xf32>
      %22 = arith.maximumf %20, %21 : vector<64x4xf32>
      %23 = vector.shape_cast %22 : vector<64x4xf32> to vector<1x1x8x8x4xf32>
      %c0_10 = arith.constant 0 : index
      %c0_11 = arith.constant 0 : index
      %c0_12 = arith.constant 0 : index
      %c0_13 = arith.constant 0 : index
      %c0_14 = arith.constant 0 : index
      %24 = vector.load %arg10[%c0_10, %c0_11, %c0_12, %c0_13, %c0_14] : memref<1x1x8x8x4xf32, #tpu.memory_space<vmem>>, vector<1x1x8x8x4xf32>
      tpu.vector_store %arg10[%c0_10, %c0_11, %c0_12, %c0_13, %c0_14], %23 {strides = array<i32>} : memref<1x1x8x8x4xf32, #tpu.memory_space<vmem>>, vector<1x1x8x8x4xf32>,
    } else {
    }
    return
  }
  func.func @transform_0(%arg0: i32, %arg1: i32, %arg2: i32) -> (i32, i32, i32, i32, i32) {
    %c1_i32 = arith.constant 1 : i32
    %0 = arith.subi %arg2, %c1_i32 : i32
    %c1_i32_0 = arith.constant 1 : i32
    %1 = arith.muli %0, %c1_i32_0 : i32
    %2 = arith.addi %arg1, %1 : i32
    %c3_i32 = arith.constant 3 : i32
    %3 = arith.minsi %2, %c3_i32 : i32
    %c0_i32 = arith.constant 0 : i32
    %4 = arith.maxsi %c0_i32, %3 : i32
    %c0_i32_1 = arith.constant 0 : i32
    %c0_i32_2 = arith.constant 0 : i32
    %c0_i32_3 = arith.constant 0 : i32
    %c0_i32_4 = arith.constant 0 : i32
    return %arg0, %4, %c0_i32_1, %c0_i32_2, %c0_i32_3 : i32, i32, i32, i32, i32
  }
  func.func @transform_1(%arg0: i32, %arg1: i32, %arg2: i32) -> (i32, i32) {
    %c0_i32 = arith.constant 0 : i32
    %c0_i32_0 = arith.constant 0 : i32
    %c0_i32_1 = arith.constant 0 : i32
    return %c0_i32, %c0_i32_0 : i32, i32
  }
  func.func @transform_2(%arg0: i32, %arg1: i32, %arg2: i32) -> (i32, i32) {
    %c0_i32 = arith.constant 0 : i32
    %c0_i32_0 = arith.constant 0 : i32
    %c0_i32_1 = arith.constant 0 : i32
    return %c0_i32, %c0_i32_0 : i32, i32
  }
  func.func @transform_3(%arg0: i32, %arg1: i32, %arg2: i32) -> (i32, i32) {
    %c0_i32 = arith.constant 0 : i32
    %c0_i32_0 = arith.constant 0 : i32
    %c0_i32_1 = arith.constant 0 : i32
    return %c0_i32, %c0_i32_0 : i32, i32
  }
  func.func @transform_4(%arg0: i32, %arg1: i32, %arg2: i32) -> (i32, i32, i32, i32, i32) {
    %c0_i32 = arith.constant 0 : i32
    %c0_i32_0 = arith.constant 0 : i32
    %c0_i32_1 = arith.constant 0 : i32
    %c0_i32_2 = arith.constant 0 : i32
    %c0_i32_3 = arith.constant 0 : i32
    return %arg2, %c0_i32, %c0_i32_0, %c0_i32_1, %c0_i32_2 : i32, i32, i32, i32, i32
  }
  func.func @transform_5(%arg0: i32, %arg1: i32, %arg2: i32) -> (i32, i32) {
    %c0_i32 = arith.constant 0 : i32
    %c0_i32_0 = arith.constant 0 : i32
    %c0_i32_1 = arith.constant 0 : i32
    return %c0_i32, %c0_i32_0 : i32, i32
  }
  func.func @transform_6(%arg0: i32, %arg1: i32, %arg2: i32) -> (i32, i32) {
    %c0_i32 = arith.constant 0 : i32
    %c0_i32_0 = arith.constant 0 : i32
    %c0_i32_1 = arith.constant 0 : i32
    return %c0_i32, %c0_i32_0 : i32, i32
  }
  func.func @transform_7(%arg0: i32, %arg1: i32, %arg2: i32) -> (i32, i32, i32, i32, i32) {
    %c0_i32 = arith.constant 0 : i32
    %c0_i32_0 = arith.constant 0 : i32
    %c0_i32_1 = arith.constant 0 : i32
    %c0_i32_2 = arith.constant 0 : i32
    return %arg0, %arg1, %c0_i32, %c0_i32_0, %c0_i32_1 : i32, i32, i32, i32, i32
  }
}

</mosaic_0001>

<llo_original>
// kernel: tpu_custom_call.1
$region0: #{tpu_custom_call.1}
  #allocation0 [shape = 'u32[]', space=smem, size = 0x4, offset = 0x4, fixed_abs, tag = 'smem constant byte address 0x4 - core index']
  #allocation1 [shape = 'u32[72,128]{1,0:T(1,128)}', space=vmem, size = 0x9000, scoped, tag = 'internal scratch']
  #allocation2 [shape = 'f32[64,4]{1,0:T(8,128)}', space=vmem, size = 0x8000, scoped, tag = 'scratch operand']
  #allocation3 [shape = 'f32[10,10,4]{2,1,0:T(8,128)}', space=vmem, size = 0x14000, scoped, tag = 'scratch operand']
  %s0 = inlined_call_operand.hbm [shape: f32[2,4,8,8,8], index: 0, kind: input, shape index: {}]
  %s1 = inlined_call_operand.vmem [shape: f32[8,4], index: 1, kind: input, shape index: {}]
  %s2 = inlined_call_operand.vmem [shape: f32[1,4], index: 2, kind: input, shape index: {}]
  %s3 = inlined_call_operand.vmem [shape: f32[1,4], index: 3, kind: input, shape index: {}]
  %s4 = inlined_call_operand.hbm [shape: f32[3,3,3,4,4], index: 4, kind: input, shape index: {}]
  %s5 = inlined_call_operand.vmem [shape: f32[1,4], index: 5, kind: input, shape index: {}]
  %s6 = inlined_call_operand.vmem [shape: f32[1,4], index: 6, kind: input, shape index: {}]
  %s7 = inlined_call_operand.vmem [shape: f32[2,4,8,8,4], index: 7, kind: output, shape index: {}]
  %s8 = sld [smem:[#allocation0]]
  $region81: #{tpu_custom_call.1} parent=0
    _
  %s10 = ssub.s32 1, %s8
  %s11 = scalar_select 0, %s10, %s8
  $region1: #{tpu_custom_call.1} parent=0
    #allocation4 [shape = 'u8[65536]{0}', space=vmem, size = 0x10000, scoped, tag = 'input window, operand 0']
    #allocation5 [shape = 's32[2]{0}', space=sflag, size = 0x8, scoped, tag = 'scoped memory for tpu_custom_call.1']
    #allocation6 [shape = 'u8[36864]{0}', space=vmem, size = 0x9000, scoped, tag = 'input window, operand 4']
    #allocation7 [shape = 's32[2]{0}', space=sflag, size = 0x8, scoped, tag = 'scoped memory for tpu_custom_call.1']
    %12 = vsyncpa [#allocation5], 0
    %s13 = scalar_lea.sflag [#allocation5], 1
    %14 = vsyncpa %s13, 0
    %15 = vsyncpa [#allocation7], 0
    %s16 = scalar_lea.sflag [#allocation7], 1
    %17 = vsyncpa %s16, 0
    loop: start=0, step=1, limit=26
    $region2: #{tpu_custom_call.1} parent=1 // loop_pre_header
      _
    $region3: #{tpu_custom_call.1} parent=1 // loop_header
      %s19 = sphi 0, %s23
      %p20 = scmp.ge.s32.totalorder %s19, 26
      %s26 = sphi 0, %s45
      %s27 = sphi 0, %s41
      %s28 = sphi 0, %s37
      %s29 = sphi 0, %s26
      %s30 = sphi 0, %s27
      %s31 = sphi 0, %s28
      %s32 = sphi 0, %s29
      %s33 = sphi 0, %s30
      %s34 = sphi 0, %s31
      %s62 = sphi 0, %s64
      %s65 = sphi 0, %s62
      %s66 = sphi 0, %s65
      %s82 = sphi 0, %s66
      %s86 = sphi 0, %s86
      %s88 = sphi 0, %s86
      %s89 = sphi 0, %s88
      %s103 = sphi 0, %s89
      %s107 = sphi 0, %s107
      %s109 = sphi 0, %s107
      %s110 = sphi 0, %s109
      %s124 = sphi 0, %s110
      %s128 = sphi 0, %s128
      %s130 = sphi 0, %s128
      %s131 = sphi 0, %s130
      %s145 = sphi 0, %s131
      %s151 = sphi 0, %s153
      %s154 = sphi 0, %s151
      %s155 = sphi 0, %s154
      %s171 = sphi 0, %s155
      %s175 = sphi 0, %s175
      %s177 = sphi 0, %s175
      %s178 = sphi 0, %s177
      %s192 = sphi 0, %s178
      %s196 = sphi 0, %s196
      %s198 = sphi 0, %s196
      %s199 = sphi 0, %s198
      %s213 = sphi 0, %s199
      %s221 = sphi 0, %s223
      %s224 = sphi 0, %s221
      %s225 = sphi 0, %s224
      %s241 = sphi 0, %s225
    $region4: #{tpu_custom_call.1} parent=1 // loop_header_branch
      %22 = sbr.rel (%p20) target = $region8
    $region5: #{tpu_custom_call.1} parent=1 // loop_body
      %s24 = ssub.s32 %s19, 1
      %s25 = ssub.s32 %s19, 2
      %s35 = sadd.s32 1, %s28
      %p36 = scmp.ge.s32.totalorder %s35, 3
      %s37 = scalar_select %p36, 0, %s35
      %s38 = sadd.s32 1, %s27
      %s39 = scalar_select %p36, %s38, %s27
      %p40 = scmp.ge.s32.totalorder %s39, 4
      %s41 = scalar_select %p40, 0, %s39
      %s42 = sadd.s32 1, %s26
      %s43 = scalar_select %p40, %s42, %s26
      %p44 = scmp.ge.s32.totalorder %s43, 2
      %s45 = scalar_select %p44, 0, %s43
      %s46 = ssub.s32 %s28, 1
      %s47 = sadd.s32 %s27, %s46
      %p48 = scmp.lt.s32.totalorder %s47, 3
      %s49 = scalar_select %p48, %s47, 3
      %p50 = scmp.gt.s32.totalorder %s49, 0
      %s51 = scalar_select %p50, %s49, 0
      %s52 = ssub.s32 %s37, 1
      %s53 = sadd.s32 %s41, %s52
      %p54 = scmp.lt.s32.totalorder %s53, 3
      %s55 = scalar_select %p54, %s53, 3
      %p56 = scmp.gt.s32.totalorder %s55, 0
      %s57 = scalar_select %p56, %s55, 0
      %s58 = ssub.s32 %s26, %s45
      %s59 = ssub.s32 %s51, %s57
      %s60 = sor.u32 %s58, %s59
      %p61 = scmp.eq.s32.totalorder %s60, 0
      %s63 = sadd.s32 %s62, 1
      %s64 = scalar_select %p61, %s62, %s63
      %p67 = pneg %p61
      %p68 = scmp.eq.s32.totalorder %s19, 23
      %p69 = por %p67, %p68
      %p70 = scmp.ne.s32.totalorder %s62, %s65
      %p71 = scmp.eq.s32.totalorder %s19, 0
      %p72 = por %p70, %p71
      %p73 = scmp.ne.s32.totalorder %s62, %s65
      %p74 = scmp.eq.s32.totalorder %s24, 23
      %p75 = por %p73, %p74
      %p76 = scmp.ne.s32.totalorder %s65, %s66
      %p77 = scmp.eq.s32.totalorder %s24, 0
      %p78 = por %p76, %p77
      %p79 = scmp.ne.s32.totalorder %s65, %s66
      %p80 = scmp.eq.s32.totalorder %s25, 23
      %p81 = por %p79, %p80
      %p83 = scmp.ne.s32.totalorder %s66, %s82
      %p84 = scmp.eq.s32.totalorder %s25, 0
      %p85 = por %p83, %p84
      %s87 = sadd.s32 %s86, 1
      %p90 = scmp.eq.s32.totalorder %s19, 23
      %p91 = scmp.ne.s32.totalorder %s86, %s88
      %p92 = scmp.eq.s32.totalorder %s19, 0
      %p93 = por %p91, %p92
      %p94 = scmp.ne.s32.totalorder %s86, %s88
      %p95 = scmp.eq.s32.totalorder %s24, 23
      %p96 = por %p94, %p95
      %p97 = scmp.ne.s32.totalorder %s88, %s89
      %p98 = scmp.eq.s32.totalorder %s24, 0
      %p99 = por %p97, %p98
      %p100 = scmp.ne.s32.totalorder %s88, %s89
      %p101 = scmp.eq.s32.totalorder %s25, 23
      %p102 = por %p100, %p101
      %p104 = scmp.ne.s32.totalorder %s89, %s103
      %p105 = scmp.eq.s32.totalorder %s25, 0
      %p106 = por %p104, %p105
      %s108 = sadd.s32 %s107, 1
      %p111 = scmp.eq.s32.totalorder %s19, 23
      %p112 = scmp.ne.s32.totalorder %s107, %s109
      %p113 = scmp.eq.s32.totalorder %s19, 0
      %p114 = por %p112, %p113
      %p115 = scmp.ne.s32.totalorder %s107, %s109
      %p116 = scmp.eq.s32.totalorder %s24, 23
      %p117 = por %p115, %p116
      %p118 = scmp.ne.s32.totalorder %s109, %s110
      %p119 = scmp.eq.s32.totalorder %s24, 0
      %p120 = por %p118, %p119
      %p121 = scmp.ne.s32.totalorder %s109, %s110
      %p122 = scmp.eq.s32.totalorder %s25, 23
      %p123 = por %p121, %p122
      %p125 = scmp.ne.s32.totalorder %s110, %s124
      %p126 = scmp.eq.s32.totalorder %s25, 0
      %p127 = por %p125, %p126
      %s129 = sadd.s32 %s128, 1
      %p132 = scmp.eq.s32.totalorder %s19, 23
      %p133 = scmp.ne.s32.totalorder %s128, %s130
      %p134 = scmp.eq.s32.totalorder %s19, 0
      %p135 = por %p133, %p134
      %p136 = scmp.ne.s32.totalorder %s128, %s130
      %p137 = scmp.eq.s32.totalorder %s24, 23
      %p138 = por %p136, %p137
      %p139 = scmp.ne.s32.totalorder %s130, %s131
      %p140 = scmp.eq.s32.totalorder %s24, 0
      %p141 = por %p139, %p140
      %p142 = scmp.ne.s32.totalorder %s130, %s131
      %p143 = scmp.eq.s32.totalorder %s25, 23
      %p144 = por %p142, %p143
      %p146 = scmp.ne.s32.totalorder %s131, %s145
      %p147 = scmp.eq.s32.totalorder %s25, 0
      %p148 = por %p146, %p147
      %s149 = ssub.s32 %s28, %s37
      %p150 = scmp.eq.s32.totalorder %s149, 0
      %s152 = sadd.s32 %s151, 1
      %s153 = scalar_select %p150, %s151, %s152
      %p156 = pneg %p150
      %p157 = scmp.eq.s32.totalorder %s19, 23
      %p158 = por %p156, %p157
      %p159 = scmp.ne.s32.totalorder %s151, %s154
      %p160 = scmp.eq.s32.totalorder %s19, 0
      %p161 = por %p159, %p160
      %p162 = scmp.ne.s32.totalorder %s151, %s154
      %p163 = scmp.eq.s32.totalorder %s24, 23
      %p164 = por %p162, %p163
      %p165 = scmp.ne.s32.totalorder %s154, %s155
      %p166 = scmp.eq.s32.totalorder %s24, 0
      %p167 = por %p165, %p166
      %p168 = scmp.ne.s32.totalorder %s154, %s155
      %p169 = scmp.eq.s32.totalorder %s25, 23
      %p170 = por %p168, %p169
      %p172 = scmp.ne.s32.totalorder %s155, %s171
      %p173 = scmp.eq.s32.totalorder %s25, 0
      %p174 = por %p172, %p173
      %s176 = sadd.s32 %s175, 1
      %p179 = scmp.eq.s32.totalorder %s19, 23
      %p180 = scmp.ne.s32.totalorder %s175, %s177
      %p181 = scmp.eq.s32.totalorder %s19, 0
      %p182 = por %p180, %p181
      %p183 = scmp.ne.s32.totalorder %s175, %s177
      %p184 = scmp.eq.s32.totalorder %s24, 23
      %p185 = por %p183, %p184
      %p186 = scmp.ne.s32.totalorder %s177, %s178
      %p187 = scmp.eq.s32.totalorder %s24, 0
      %p188 = por %p186, %p187
      %p189 = scmp.ne.s32.totalorder %s177, %s178
      %p190 = scmp.eq.s32.totalorder %s25, 23
      %p191 = por %p189, %p190
      %p193 = scmp.ne.s32.totalorder %s178, %s192
      %p194 = scmp.eq.s32.totalorder %s25, 0
      %p195 = por %p193, %p194
      %s197 = sadd.s32 %s196, 1
      %p200 = scmp.eq.s32.totalorder %s19, 23
      %p201 = scmp.ne.s32.totalorder %s196, %s198
      %p202 = scmp.eq.s32.totalorder %s19, 0
      %p203 = por %p201, %p202
      %p204 = scmp.ne.s32.totalorder %s196, %s198
      %p205 = scmp.eq.s32.totalorder %s24, 23
      %p206 = por %p204, %p205
      %p207 = scmp.ne.s32.totalorder %s198, %s199
      %p208 = scmp.eq.s32.totalorder %s24, 0
      %p209 = por %p207, %p208
      %p210 = scmp.ne.s32.totalorder %s198, %s199
      %p211 = scmp.eq.s32.totalorder %s25, 23
      %p212 = por %p210, %p211
      %p214 = scmp.ne.s32.totalorder %s199, %s213
      %p215 = scmp.eq.s32.totalorder %s25, 0
      %p216 = por %p214, %p215
      %s217 = ssub.s32 %s26, %s45
      %s218 = ssub.s32 %s27, %s41
      %s219 = sor.u32 %s217, %s218
      %p220 = scmp.eq.s32.totalorder %s219, 0
      %s222 = sadd.s32 %s221, 1
      %s223 = scalar_select %p220, %s221, %s222
      %p226 = pneg %p220
      %p227 = scmp.eq.s32.totalorder %s19, 23
      %p228 = por %p226, %p227
      %p229 = scmp.ne.s32.totalorder %s221, %s224
      %p230 = scmp.eq.s32.totalorder %s19, 0
      %p231 = por %p229, %p230
      %p232 = scmp.ne.s32.totalorder %s221, %s224
      %p233 = scmp.eq.s32.totalorder %s24, 23
      %p234 = por %p232, %p233
      %p235 = scmp.ne.s32.totalorder %s224, %s225
      %p236 = scmp.eq.s32.totalorder %s24, 0
      %p237 = por %p235, %p236
      %p238 = scmp.ne.s32.totalorder %s224, %s225
      %p239 = scmp.eq.s32.totalorder %s25, 23
      %p240 = por %p238, %p239
      %p242 = scmp.ne.s32.totalorder %s225, %s241
      %p243 = scmp.eq.s32.totalorder %s25, 0
      %p244 = por %p242, %p243
      %p245 = scmp.le.s32.totalorder 1, %s19
      %p246 = scmp.lt.s32.totalorder %s19, 25
      %p247 = pnand %p245, %p246
      %p248 = pneg %p247
      // Predicated region
      $region9: #{tpu_custom_call.1} parent=5 // pred_check
        _
      $region10: #{tpu_custom_call.1} parent=5 // pred_check_branch
        %250 = sbr.rel (%p247) target = $region12
      $region11: #{tpu_custom_call.1} parent=5 // pred_region
        %s251 = ssub.s32 %s19, 1
        // Predicated region
        $region13: #{tpu_custom_call.1} parent=11 // pred_check
          %p252 = pneg %p99
        $region14: #{tpu_custom_call.1} parent=11 // pred_check_branch
          %254 = sbr.rel (%p252) target = $region16
        $region15: #{tpu_custom_call.1} parent=11 // pred_region
          _
        $region16: #{tpu_custom_call.1} parent=11 // pred_fallthru
          _
        // Predicated region
        $region17: #{tpu_custom_call.1} parent=11 // pred_check
          %p255 = pneg %p120
        $region18: #{tpu_custom_call.1} parent=11 // pred_check_branch
          %257 = sbr.rel (%p255) target = $region20
        $region19: #{tpu_custom_call.1} parent=11 // pred_region
          _
        $region20: #{tpu_custom_call.1} parent=11 // pred_fallthru
          _
        // Predicated region
        $region21: #{tpu_custom_call.1} parent=11 // pred_check
          %p258 = pneg %p141
        $region22: #{tpu_custom_call.1} parent=11 // pred_check_branch
          %260 = sbr.rel (%p258) target = $region24
        $region23: #{tpu_custom_call.1} parent=11 // pred_region
          _
        $region24: #{tpu_custom_call.1} parent=11 // pred_fallthru
          _
        // Predicated region
        $region25: #{tpu_custom_call.1} parent=11 // pred_check
          %p261 = pneg %p188
        $region26: #{tpu_custom_call.1} parent=11 // pred_check_branch
          %263 = sbr.rel (%p261) target = $region28
        $region27: #{tpu_custom_call.1} parent=11 // pred_region
          _
        $region28: #{tpu_custom_call.1} parent=11 // pred_fallthru
          _
        // Predicated region
        $region29: #{tpu_custom_call.1} parent=11 // pred_check
          %p264 = pneg %p209
        $region30: #{tpu_custom_call.1} parent=11 // pred_check_branch
          %266 = sbr.rel (%p264) target = $region32
        $region31: #{tpu_custom_call.1} parent=11 // pred_region
          _
        $region32: #{tpu_custom_call.1} parent=11 // pred_fallthru
          _
      $region12: #{tpu_custom_call.1} parent=5 // pred_fallthru
        _
      %p267 = scmp.lt.s32.totalorder %s19, 24
      // Predicated region
      $region33: #{tpu_custom_call.1} parent=5 // pred_check
        %p268 = pneg %p267
      $region34: #{tpu_custom_call.1} parent=5 // pred_check_branch
        %270 = sbr.rel (%p268) target = $region36
      $region35: #{tpu_custom_call.1} parent=5 // pred_region
        // Predicated region
        $region37: #{tpu_custom_call.1} parent=35 // pred_check
          %p271 = pneg %p72
        $region38: #{tpu_custom_call.1} parent=35 // pred_check_branch
          %273 = sbr.rel (%p271) target = $region40
        $region39: #{tpu_custom_call.1} parent=35 // pred_region
          %s274 = sand.u32 %s62, 1
          %s275 = scalar_lea.sflag [#allocation5], %s274
          %s276 = sand.u32 %s62, 1
          %s277 = smul.addr %s276, 64
          %s278 = scalar_lea.vmem [#allocation4], %s277
          %s279 = ssub.s32 %s28, 1
          %s280 = sadd.s32 %s27, %s279
          %p281 = scmp.lt.s32.totalorder %s280, 3
          %s282 = scalar_select %p281, %s280, 3
          %p283 = scmp.gt.s32.totalorder %s282, 0
          %s284 = scalar_select %p283, %s282, 0
          %286 = vsyncadd %s275, 0
          %s287 = smul.addr %s284, 8
          %s288 = smul.addr %s26, 32
          %s289 = sadd.s32 %s287, %s288
          %s290 = smul.addr %s289, 8
          %s291 = scalar_lea.hbm %s0, %s290
          %s292 = sshll.u32 %s291, 4
          %s293 = int_to_ptr.hbm [resolvable:$true] %s292
          %s294 = sshll.u32 %s278, 4
          %s295 = int_to_ptr.vmem [resolvable:$true] %s294
          %300 = dma.hbm_to_vmem [thread:$0]  %s293, 1024, %s295, %s275, 128, 128, 8
        $region40: #{tpu_custom_call.1} parent=35 // pred_fallthru
          _
        // Predicated region
        $region41: #{tpu_custom_call.1} parent=35 // pred_check
          %p301 = pneg %p161
        $region42: #{tpu_custom_call.1} parent=35 // pred_check_branch
          %303 = sbr.rel (%p301) target = $region44
        $region43: #{tpu_custom_call.1} parent=35 // pred_region
          %s304 = sand.u32 %s151, 1
          %s305 = scalar_lea.sflag [#allocation7], %s304
          %s306 = sand.u32 %s151, 1
          %s307 = smul.addr %s306, 36
          %s308 = scalar_lea.vmem [#allocation6], %s307
          %310 = vsyncadd %s305, 0
          %s311 = smul.addr %s28, 9
          %s312 = smul.addr %s311, 4
          %s313 = scalar_lea.hbm %s4, %s312
          %s314 = sshll.u32 %s313, 4
          %s315 = int_to_ptr.hbm [resolvable:$true] %s314
          %s316 = sshll.u32 %s308, 4
          %s317 = int_to_ptr.vmem [resolvable:$true] %s316
          %322 = dma.hbm_to_vmem [thread:$0]  %s315, 576, %s317, %s305, 64, 64, 4
        $region44: #{tpu_custom_call.1} parent=35 // pred_fallthru
          _
      $region36: #{tpu_custom_call.1} parent=5 // pred_fallthru
        _
      %p323 = scmp.le.s32.totalorder 1, %s19
      %p324 = scmp.lt.s32.totalorder %s19, 25
      %p325 = pnand %p323, %p324
      %p326 = pneg %p325
      // Predicated region
      $region45: #{tpu_custom_call.1} parent=5 // pred_check
        _
      $region46: #{tpu_custom_call.1} parent=5 // pred_check_branch
        %328 = sbr.rel (%p325) target = $region48
      $region47: #{tpu_custom_call.1} parent=5 // pred_region
        %s329 = ssub.s32 %s19, 1
        %s330 = sand.u32 %s65, 1
        %s331 = scalar_lea.sflag [#allocation5], %s330
        %s332 = sand.u32 %s65, 1
        %s333 = smul.addr %s332, 64
        %s334 = scalar_lea.vmem [#allocation4], %s333
        // Predicated region
        $region49: #{tpu_custom_call.1} parent=47 // pred_check
          %p335 = pneg %p78
        $region50: #{tpu_custom_call.1} parent=47 // pred_check_branch
          %337 = sbr.rel (%p335) target = $region52
        $region51: #{tpu_custom_call.1} parent=47 // pred_region
          %339 = dma.done %s331, 1024
        $region52: #{tpu_custom_call.1} parent=47 // pred_fallthru
          _
        %s340 = sand.u32 %s154, 1
        %s341 = scalar_lea.sflag [#allocation7], %s340
        %s342 = sand.u32 %s154, 1
        %s343 = smul.addr %s342, 36
        %s344 = scalar_lea.vmem [#allocation6], %s343
        // Predicated region
        $region53: #{tpu_custom_call.1} parent=47 // pred_check
          %p345 = pneg %p167
        $region54: #{tpu_custom_call.1} parent=47 // pred_check_branch
          %347 = sbr.rel (%p345) target = $region56
        $region55: #{tpu_custom_call.1} parent=47 // pred_region
          %349 = dma.done %s341, 576
        $region56: #{tpu_custom_call.1} parent=47 // pred_fallthru
          _
        %s350 = sand.u32 %s65, 1
        %s351 = scalar_lea.sflag [#allocation5], %s350
        %s352 = sand.u32 %s65, 1
        %s353 = smul.addr %s352, 64
        %s354 = scalar_lea.vmem [#allocation4], %s353
        %p355 = pneg %p78
        %p356 = pneg %p75
        %p357 = pneg %p99
        %p358 = pneg %p96
        %p359 = pneg %p120
        %p360 = pneg %p117
        %p361 = pneg %p141
        %p362 = pneg %p138
        %s363 = sand.u32 %s154, 1
        %s364 = scalar_lea.sflag [#allocation7], %s363
        %s365 = sand.u32 %s154, 1
        %s366 = smul.addr %s365, 36
        %s367 = scalar_lea.vmem [#allocation6], %s366
        %p368 = pneg %p167
        %p369 = pneg %p164
        %p370 = pneg %p188
        %p371 = pneg %p185
        %p372 = pneg %p209
        %p373 = pneg %p206
        %p374 = pneg %p237
        %p375 = pneg %p234
        %p376 = scmp.lt.s32.totalorder %s29, 1
        %s377 = scalar_select %p376, %s29, 1
        %p378 = scmp.lt.s32.totalorder %s30, 3
        %s379 = scalar_select %p378, %s30, 3
        %s380 = smul.addr %s379, 8
        %s381 = smul.addr %s377, 32
        %s382 = sadd.s32 %s380, %s381
        %s383 = smul.addr %s382, 8
        %s384 = scalar_lea.vmem %s7, %s383
        %s385 = ssub.s32 %s31, 1
        %s386 = sadd.s32 %s30, %s385
        %p387 = scmp.lt.s32.totalorder %s386, 3
        %s388 = scalar_select %p387, %s386, 3
        %p389 = scmp.gt.s32.totalorder %s388, 0
        %s390 = scalar_select %p389, %s388, 0
        %p391 = scmp.lt.s32.totalorder %s29, 1
        %s392 = scalar_select %p391, %s29, 1
        %p393 = scmp.lt.s32.totalorder %s30, 3
        %s394 = scalar_select %p393, %s30, 3
        %s395 = smul.addr %s394, 8
        %s396 = smul.addr %s392, 32
        %s397 = sadd.s32 %s395, %s396
        %s398 = smul.addr %s397, 8
        %s399 = scalar_lea.vmem %s7, %s398
        %s400 = ssub.s32 %s31, 1
        %s401 = sadd.s32 %s30, %s400
        %p402 = scmp.ge.s32.totalorder %s401, 0
        %p403 = scmp.lt.s32.totalorder %s401, 4
        %p404 = pnand %p402, %p403
        %p405 = pneg %p404
        %p406 = scmp.eq.s32.totalorder %s31, 0
        // Predicated region
        $region57: #{tpu_custom_call.1} parent=47 // pred_check
          %p407 = pneg %p406
        $region58: #{tpu_custom_call.1} parent=47 // pred_check_branch
          %409 = sbr.rel (%p407) target = $region60
        $region59: #{tpu_custom_call.1} parent=47 // pred_region
          %vm410 = vcmask 31744
          %411 = vst.msk [vmem:[#allocation2] sm:$0xff] %vm410, 0.0
          %412 = vst.msk [vmem:[#allocation2 + $0x8] sm:$0xff] %vm410, 0.0
          %413 = vst.msk [vmem:[#allocation2 + $0x10] sm:$0xff] %vm410, 0.0
          %414 = vst.msk [vmem:[#allocation2 + $0x18] sm:$0xff] %vm410, 0.0
          %415 = vst.msk [vmem:[#allocation2 + $0x20] sm:$0xff] %vm410, 0.0
          %416 = vst.msk [vmem:[#allocation2 + $0x28] sm:$0xff] %vm410, 0.0
          %417 = vst.msk [vmem:[#allocation2 + $0x30] sm:$0xff] %vm410, 0.0
          %418 = vst.msk [vmem:[#allocation2 + $0x38] sm:$0xff] %vm410, 0.0
          %419 = vst.msk [vmem:[#allocation3] sm:$0xff] %vm410, 0.0
          %vm420 = vcmask 25600
          %421 = vst.msk [vmem:[#allocation3 + $0x8] sm:$0x3] %vm420, 0.0
          %422 = vst.msk [vmem:[#allocation3 + $0x10] sm:$0xff] %vm410, 0.0
          %423 = vst.msk [vmem:[#allocation3 + $0x18] sm:$0x3] %vm420, 0.0
          %424 = vst.msk [vmem:[#allocation3 + $0x20] sm:$0xff] %vm410, 0.0
          %425 = vst.msk [vmem:[#allocation3 + $0x28] sm:$0x3] %vm420, 0.0
          %426 = vst.msk [vmem:[#allocation3 + $0x30] sm:$0xff] %vm410, 0.0
          %427 = vst.msk [vmem:[#allocation3 + $0x38] sm:$0x3] %vm420, 0.0
          %428 = vst.msk [vmem:[#allocation3 + $0x40] sm:$0xff] %vm410, 0.0
          %429 = vst.msk [vmem:[#allocation3 + $0x48] sm:$0x3] %vm420, 0.0
          %430 = vst.msk [vmem:[#allocation3 + $0x50] sm:$0xff] %vm410, 0.0
          %431 = vst.msk [vmem:[#allocation3 + $0x58] sm:$0x3] %vm420, 0.0
          %432 = vst.msk [vmem:[#allocation3 + $0x60] sm:$0xff] %vm410, 0.0
          %433 = vst.msk [vmem:[#allocation3 + $0x68] sm:$0x3] %vm420, 0.0
          %434 = vst.msk [vmem:[#allocation3 + $0x70] sm:$0xff] %vm410, 0.0
          %435 = vst.msk [vmem:[#allocation3 + $0x78] sm:$0x3] %vm420, 0.0
          %436 = vst.msk [vmem:[#allocation3 + $0x80] sm:$0xff] %vm410, 0.0
          %437 = vst.msk [vmem:[#allocation3 + $0x88] sm:$0x3] %vm420, 0.0
          %438 = vst.msk [vmem:[#allocation3 + $0x90] sm:$0xff] %vm410, 0.0
          %439 = vst.msk [vmem:[#allocation3 + $0x98] sm:$0x3] %vm420, 0.0
        $region60: #{tpu_custom_call.1} parent=47 // pred_fallthru
          _
        // Predicated region
        $region61: #{tpu_custom_call.1} parent=47 // pred_check
          _
        $region62: #{tpu_custom_call.1} parent=47 // pred_check_branch
          %441 = sbr.rel (%p404) target = $region64
        $region63: #{tpu_custom_call.1} parent=47 // pred_region
          %v442 = vld [vmem:[%s334] sm:$0xff]
          %v443 = vld [vmem:[%s334 + $0x8] sm:$0xff]
          %v444 = vld [vmem:[%s334 + $0x10] sm:$0xff]
          %v445 = vld [vmem:[%s334 + $0x18] sm:$0xff]
          %v446 = vld [vmem:[%s334 + $0x20] sm:$0xff]
          %v447 = vld [vmem:[%s334 + $0x28] sm:$0xff]
          %v448 = vld [vmem:[%s334 + $0x30] sm:$0xff]
          %v449 = vld [vmem:[%s334 + $0x38] sm:$0xff]
          %v450 = vld [vmem:[%s1] sm:$0xff]
          %vm451 = vcmask 64512
          %v453 = vsel %vm451, %v442, 0
          %v456 = vsel %vm451, %v443, 0
          %v459 = vsel %vm451, %v444, 0
          %v462 = vsel %vm451, %v445, 0
          %v465 = vsel %vm451, %v446, 0
          %v468 = vsel %vm451, %v447, 0
          %v471 = vsel %vm451, %v448, 0
          %v474 = vsel %vm451, %v449, 0
          %476 = vmatpush.msra.mxu0 0.0
          %477 = vmatpush.msra.mxu0 0.0
          %478 = vmatpush.msra.mxu0 0.0
          %479 = vmatpush.msra.mxu0 0.0
          %480 = vmatpush.msra.mxu0 0.0
          %481 = vmatpush.msra.mxu0 0.0
          %482 = vmatpush.msra.mxu0 0.0
          %483 = vmatpush.msra.mxu0 0.0
          %484 = vmatpush.msra.mxu0 0.0
          %485 = vmatpush.msra.mxu0 0.0
          %486 = vmatpush.msra.mxu0 0.0
          %487 = vmatpush.msra.mxu0 0.0
          %488 = vmatpush.msra.mxu0 0.0
          %489 = vmatpush.msra.mxu0 0.0
          %490 = vmatpush.msra.mxu0 0.0
          %v491 = vand.u32 %v450, 4294901760
          %492 = vmatpush.msra.mxu0 %v491
          %v493 = vand.u32 %v453, 4294901760
          %v494 = vsub.f32 %v453, %v493
          %v495 = vand.u32 %v494, 4294901760
          %v496 = vsub.f32 %v494, %v495
          %v497 = vand.u32 %v496, 4294901760
          %498 = vmatmul.f32.gmra.mxu0 %v497
          %v499 = vpop.f32.mrf.mxu0
          %v500 = vadd.f32 0.0, %v499
          %v501 = vand.u32 %v456, 4294901760
          %v502 = vsub.f32 %v456, %v501
          %v503 = vand.u32 %v502, 4294901760
          %v504 = vsub.f32 %v502, %v503
          %v505 = vand.u32 %v504, 4294901760
          %506 = vmatmul.f32.gmra.mxu0 %v505
          %v507 = vpop.f32.mrf.mxu0
          %v508 = vadd.f32 0.0, %v507
          %v509 = vand.u32 %v459, 4294901760
          %v510 = vsub.f32 %v459, %v509
          %v511 = vand.u32 %v510, 4294901760
          %v512 = vsub.f32 %v510, %v511
          %v513 = vand.u32 %v512, 4294901760
          %514 = vmatmul.f32.gmra.mxu0 %v513
          %v515 = vpop.f32.mrf.mxu0
          %v516 = vadd.f32 0.0, %v515
          %v517 = vand.u32 %v462, 4294901760
          %v518 = vsub.f32 %v462, %v517
          %v519 = vand.u32 %v518, 4294901760
          %v520 = vsub.f32 %v518, %v519
          %v521 = vand.u32 %v520, 4294901760
          %522 = vmatmul.f32.gmra.mxu0 %v521
          %v523 = vpop.f32.mrf.mxu0
          %v524 = vadd.f32 0.0, %v523
          %v525 = vand.u32 %v465, 4294901760
          %v526 = vsub.f32 %v465, %v525
          %v527 = vand.u32 %v526, 4294901760
          %v528 = vsub.f32 %v526, %v527
          %v529 = vand.u32 %v528, 4294901760
          %530 = vmatmul.f32.gmra.mxu0 %v529
          %v531 = vpop.f32.mrf.mxu0
          %v532 = vadd.f32 0.0, %v531
          %v533 = vand.u32 %v468, 4294901760
          %v534 = vsub.f32 %v468, %v533
          %v535 = vand.u32 %v534, 4294901760
          %v536 = vsub.f32 %v534, %v535
          %v537 = vand.u32 %v536, 4294901760
          %538 = vmatmul.f32.gmra.mxu0 %v537
          %v539 = vpop.f32.mrf.mxu0
          %v540 = vadd.f32 0.0, %v539
          %v541 = vand.u32 %v471, 4294901760
          %v542 = vsub.f32 %v471, %v541
          %v543 = vand.u32 %v542, 4294901760
          %v544 = vsub.f32 %v542, %v543
          %v545 = vand.u32 %v544, 4294901760
          %546 = vmatmul.f32.gmra.mxu0 %v545
          %v547 = vpop.f32.mrf.mxu0
          %v548 = vadd.f32 0.0, %v547
          %v549 = vand.u32 %v474, 4294901760
          %v550 = vsub.f32 %v474, %v549
          %v551 = vand.u32 %v550, 4294901760
          %v552 = vsub.f32 %v550, %v551
          %v553 = vand.u32 %v552, 4294901760
          %554 = vmatmul.f32.gmra.mxu0 %v553
          %v555 = vpop.f32.mrf.mxu0
          %v556 = vadd.f32 0.0, %v555
          %557 = vdwg.mxu0
          %558 = vmatpush.msra.mxu0 0.0
          %559 = vmatpush.msra.mxu0 0.0
          %560 = vmatpush.msra.mxu0 0.0
          %561 = vmatpush.msra.mxu0 0.0
          %562 = vmatpush.msra.mxu0 0.0
          %563 = vmatpush.msra.mxu0 0.0
          %564 = vmatpush.msra.mxu0 0.0
          %565 = vmatpush.msra.mxu0 0.0
          %566 = vmatpush.msra.mxu0 0.0
          %567 = vmatpush.msra.mxu0 0.0
          %568 = vmatpush.msra.mxu0 0.0
          %569 = vmatpush.msra.mxu0 0.0
          %570 = vmatpush.msra.mxu0 0.0
          %571 = vmatpush.msra.mxu0 0.0
          %572 = vmatpush.msra.mxu0 0.0
          %v573 = vand.u32 %v450, 4294901760
          %v574 = vsub.f32 %v450, %v573
          %v575 = vand.u32 %v574, 4294901760
          %v576 = vsub.f32 %v574, %v575
          %v577 = vand.u32 %v576, 4294901760
          %578 = vmatpush.msra.mxu0 %v577
          %v579 = vand.u32 %v453, 4294901760
          %580 = vmatmul.f32.gmra.mxu0 %v579
          %v581 = vpop.f32.mrf.mxu0
          %v582 = vadd.f32 %v500, %v581
          %v583 = vand.u32 %v456, 4294901760
          %584 = vmatmul.f32.gmra.mxu0 %v583
          %v585 = vpop.f32.mrf.mxu0
          %v586 = vadd.f32 %v508, %v585
          %v587 = vand.u32 %v459, 4294901760
          %588 = vmatmul.f32.gmra.mxu0 %v587
          %v589 = vpop.f32.mrf.mxu0
          %v590 = vadd.f32 %v516, %v589
          %v591 = vand.u32 %v462, 4294901760
          %592 = vmatmul.f32.gmra.mxu0 %v591
          %v593 = vpop.f32.mrf.mxu0
          %v594 = vadd.f32 %v524, %v593
          %v595 = vand.u32 %v465, 4294901760
          %596 = vmatmul.f32.gmra.mxu0 %v595
          %v597 = vpop.f32.mrf.mxu0
          %v598 = vadd.f32 %v532, %v597
          %v599 = vand.u32 %v468, 4294901760
          %600 = vmatmul.f32.gmra.mxu0 %v599
          %v601 = vpop.f32.mrf.mxu0
          %v602 = vadd.f32 %v540, %v601
          %v603 = vand.u32 %v471, 4294901760
          %604 = vmatmul.f32.gmra.mxu0 %v603
          %v605 = vpop.f32.mrf.mxu0
          %v606 = vadd.f32 %v548, %v605
          %v607 = vand.u32 %v474, 4294901760
          %608 = vmatmul.f32.gmra.mxu0 %v607
          %v609 = vpop.f32.mrf.mxu0
          %v610 = vadd.f32 %v556, %v609
          %611 = vdwg.mxu0
          %612 = vmatpush.msra.mxu0 0.0
          %613 = vmatpush.msra.mxu0 0.0
          %614 = vmatpush.msra.mxu0 0.0
          %615 = vmatpush.msra.mxu0 0.0
          %616 = vmatpush.msra.mxu0 0.0
          %617 = vmatpush.msra.mxu0 0.0
          %618 = vmatpush.msra.mxu0 0.0
          %619 = vmatpush.msra.mxu0 0.0
          %620 = vmatpush.msra.mxu0 0.0
          %621 = vmatpush.msra.mxu0 0.0
          %622 = vmatpush.msra.mxu0 0.0
          %623 = vmatpush.msra.mxu0 0.0
          %624 = vmatpush.msra.mxu0 0.0
          %625 = vmatpush.msra.mxu0 0.0
          %626 = vmatpush.msra.mxu0 0.0
          %v627 = vand.u32 %v450, 4294901760
          %v628 = vsub.f32 %v450, %v627
          %629 = vmatpush.msra.mxu0 %v628
          %v630 = vand.u32 %v453, 4294901760
          %v631 = vsub.f32 %v453, %v630
          %632 = vmatmul.f32.gmra.mxu0 %v631
          %v633 = vpop.f32.mrf.mxu0
          %v634 = vadd.f32 %v582, %v633
          %v635 = vand.u32 %v456, 4294901760
          %v636 = vsub.f32 %v456, %v635
          %637 = vmatmul.f32.gmra.mxu0 %v636
          %v638 = vpop.f32.mrf.mxu0
          %v639 = vadd.f32 %v586, %v638
          %v640 = vand.u32 %v459, 4294901760
          %v641 = vsub.f32 %v459, %v640
          %642 = vmatmul.f32.gmra.mxu0 %v641
          %v643 = vpop.f32.mrf.mxu0
          %v644 = vadd.f32 %v590, %v643
          %v645 = vand.u32 %v462, 4294901760
          %v646 = vsub.f32 %v462, %v645
          %647 = vmatmul.f32.gmra.mxu0 %v646
          %v648 = vpop.f32.mrf.mxu0
          %v649 = vadd.f32 %v594, %v648
          %v650 = vand.u32 %v465, 4294901760
          %v651 = vsub.f32 %v465, %v650
          %652 = vmatmul.f32.gmra.mxu0 %v651
          %v653 = vpop.f32.mrf.mxu0
          %v654 = vadd.f32 %v598, %v653
          %v655 = vand.u32 %v468, 4294901760
          %v656 = vsub.f32 %v468, %v655
          %657 = vmatmul.f32.gmra.mxu0 %v656
          %v658 = vpop.f32.mrf.mxu0
          %v659 = vadd.f32 %v602, %v658
          %v660 = vand.u32 %v471, 4294901760
          %v661 = vsub.f32 %v471, %v660
          %662 = vmatmul.f32.gmra.mxu0 %v661
          %v663 = vpop.f32.mrf.mxu0
          %v664 = vadd.f32 %v606, %v663
          %v665 = vand.u32 %v474, 4294901760
          %v666 = vsub.f32 %v474, %v665
          %667 = vmatmul.f32.gmra.mxu0 %v666
          %v668 = vpop.f32.mrf.mxu0
          %v669 = vadd.f32 %v610, %v668
          %670 = vdwg.mxu0
          %671 = vmatpush.msra.mxu0 0.0
          %672 = vmatpush.msra.mxu0 0.0
          %673 = vmatpush.msra.mxu0 0.0
          %674 = vmatpush.msra.mxu0 0.0
          %675 = vmatpush.msra.mxu0 0.0
          %676 = vmatpush.msra.mxu0 0.0
          %677 = vmatpush.msra.mxu0 0.0
          %678 = vmatpush.msra.mxu0 0.0
          %679 = vmatpush.msra.mxu0 0.0
          %680 = vmatpush.msra.mxu0 0.0
          %681 = vmatpush.msra.mxu0 0.0
          %682 = vmatpush.msra.mxu0 0.0
          %683 = vmatpush.msra.mxu0 0.0
          %684 = vmatpush.msra.mxu0 0.0
          %685 = vmatpush.msra.mxu0 0.0
          %v686 = vand.u32 %v450, 4294901760
          %687 = vmatpush.msra.mxu0 %v686
          %v688 = vand.u32 %v453, 4294901760
          %v689 = vsub.f32 %v453, %v688
          %v690 = vand.u32 %v689, 4294901760
          %691 = vmatmul.f32.gmra.mxu0 %v690
          %v692 = vpop.f32.mrf.mxu0
          %v693 = vadd.f32 %v634, %v692
          %v694 = vand.u32 %v456, 4294901760
          %v695 = vsub.f32 %v456, %v694
          %v696 = vand.u32 %v695, 4294901760
          %697 = vmatmul.f32.gmra.mxu0 %v696
          %v698 = vpop.f32.mrf.mxu0
          %v699 = vadd.f32 %v639, %v698
          %v700 = vand.u32 %v459, 4294901760
          %v701 = vsub.f32 %v459, %v700
          %v702 = vand.u32 %v701, 4294901760
          %703 = vmatmul.f32.gmra.mxu0 %v702
          %v704 = vpop.f32.mrf.mxu0
          %v705 = vadd.f32 %v644, %v704
          %v706 = vand.u32 %v462, 4294901760
          %v707 = vsub.f32 %v462, %v706
          %v708 = vand.u32 %v707, 4294901760
          %709 = vmatmul.f32.gmra.mxu0 %v708
          %v710 = vpop.f32.mrf.mxu0
          %v711 = vadd.f32 %v649, %v710
          %v712 = vand.u32 %v465, 4294901760
          %v713 = vsub.f32 %v465, %v712
          %v714 = vand.u32 %v713, 4294901760
          %715 = vmatmul.f32.gmra.mxu0 %v714
          %v716 = vpop.f32.mrf.mxu0
          %v717 = vadd.f32 %v654, %v716
          %v718 = vand.u32 %v468, 4294901760
          %v719 = vsub.f32 %v468, %v718
          %v720 = vand.u32 %v719, 4294901760
          %721 = vmatmul.f32.gmra.mxu0 %v720
          %v722 = vpop.f32.mrf.mxu0
          %v723 = vadd.f32 %v659, %v722
          %v724 = vand.u32 %v471, 4294901760
          %v725 = vsub.f32 %v471, %v724
          %v726 = vand.u32 %v725, 4294901760
          %727 = vmatmul.f32.gmra.mxu0 %v726
          %v728 = vpop.f32.mrf.mxu0
          %v729 = vadd.f32 %v664, %v728
          %v730 = vand.u32 %v474, 4294901760
          %v731 = vsub.f32 %v474, %v730
          %v732 = vand.u32 %v731, 4294901760
          %733 = vmatmul.f32.gmra.mxu0 %v732
          %v734 = vpop.f32.mrf.mxu0
          %v735 = vadd.f32 %v669, %v734
          %736 = vdwg.mxu0
          %737 = vmatpush.msra.mxu0 0.0
          %738 = vmatpush.msra.mxu0 0.0
          %739 = vmatpush.msra.mxu0 0.0
          %740 = vmatpush.msra.mxu0 0.0
          %741 = vmatpush.msra.mxu0 0.0
          %742 = vmatpush.msra.mxu0 0.0
          %743 = vmatpush.msra.mxu0 0.0
          %744 = vmatpush.msra.mxu0 0.0
          %745 = vmatpush.msra.mxu0 0.0
          %746 = vmatpush.msra.mxu0 0.0
          %747 = vmatpush.msra.mxu0 0.0
          %748 = vmatpush.msra.mxu0 0.0
          %749 = vmatpush.msra.mxu0 0.0
          %750 = vmatpush.msra.mxu0 0.0
          %751 = vmatpush.msra.mxu0 0.0
          %v752 = vand.u32 %v450, 4294901760
          %v753 = vsub.f32 %v450, %v752
          %v754 = vand.u32 %v753, 4294901760
          %755 = vmatpush.msra.mxu0 %v754
          %v756 = vand.u32 %v453, 4294901760
          %757 = vmatmul.f32.gmra.mxu0 %v756
          %v758 = vpop.f32.mrf.mxu0
          %v759 = vadd.f32 %v693, %v758
          %v760 = vand.u32 %v456, 4294901760
          %761 = vmatmul.f32.gmra.mxu0 %v760
          %v762 = vpop.f32.mrf.mxu0
          %v763 = vadd.f32 %v699, %v762
          %v764 = vand.u32 %v459, 4294901760
          %765 = vmatmul.f32.gmra.mxu0 %v764
          %v766 = vpop.f32.mrf.mxu0
          %v767 = vadd.f32 %v705, %v766
          %v768 = vand.u32 %v462, 4294901760
          %769 = vmatmul.f32.gmra.mxu0 %v768
          %v770 = vpop.f32.mrf.mxu0
          %v771 = vadd.f32 %v711, %v770
          %v772 = vand.u32 %v465, 4294901760
          %773 = vmatmul.f32.gmra.mxu0 %v772
          %v774 = vpop.f32.mrf.mxu0
          %v775 = vadd.f32 %v717, %v774
          %v776 = vand.u32 %v468, 4294901760
          %777 = vmatmul.f32.gmra.mxu0 %v776
          %v778 = vpop.f32.mrf.mxu0
          %v779 = vadd.f32 %v723, %v778
          %v780 = vand.u32 %v471, 4294901760
          %781 = vmatmul.f32.gmra.mxu0 %v780
          %v782 = vpop.f32.mrf.mxu0
          %v783 = vadd.f32 %v729, %v782
          %v784 = vand.u32 %v474, 4294901760
          %785 = vmatmul.f32.gmra.mxu0 %v784
          %v786 = vpop.f32.mrf.mxu0
          %v787 = vadd.f32 %v735, %v786
          %788 = vdwg.mxu0
          %789 = vmatpush.msra.mxu0 0.0
          %790 = vmatpush.msra.mxu0 0.0
          %791 = vmatpush.msra.mxu0 0.0
          %792 = vmatpush.msra.mxu0 0.0
          %793 = vmatpush.msra.mxu0 0.0
          %794 = vmatpush.msra.mxu0 0.0
          %795 = vmatpush.msra.mxu0 0.0
          %796 = vmatpush.msra.mxu0 0.0
          %797 = vmatpush.msra.mxu0 0.0
          %798 = vmatpush.msra.mxu0 0.0
          %799 = vmatpush.msra.mxu0 0.0
          %800 = vmatpush.msra.mxu0 0.0
          %801 = vmatpush.msra.mxu0 0.0
          %802 = vmatpush.msra.mxu0 0.0
          %803 = vmatpush.msra.mxu0 0.0
          %v804 = vand.u32 %v450, 4294901760
          %805 = vmatpush.msra.mxu0 %v804
          %v806 = vand.u32 %v453, 4294901760
          %807 = vmatmul.f32.gmra.mxu0 %v806
          %v808 = vpop.f32.mrf.mxu0
          %v809 = vadd.f32 %v759, %v808
          %v810 = vand.u32 %v456, 4294901760
          %811 = vmatmul.f32.gmra.mxu0 %v810
          %v812 = vpop.f32.mrf.mxu0
          %v813 = vadd.f32 %v763, %v812
          %v814 = vand.u32 %v459, 4294901760
          %815 = vmatmul.f32.gmra.mxu0 %v814
          %v816 = vpop.f32.mrf.mxu0
          %v817 = vadd.f32 %v767, %v816
          %v818 = vand.u32 %v462, 4294901760
          %819 = vmatmul.f32.gmra.mxu0 %v818
          %v820 = vpop.f32.mrf.mxu0
          %v821 = vadd.f32 %v771, %v820
          %v822 = vand.u32 %v465, 4294901760
          %823 = vmatmul.f32.gmra.mxu0 %v822
          %v824 = vpop.f32.mrf.mxu0
          %v825 = vadd.f32 %v775, %v824
          %v826 = vand.u32 %v468, 4294901760
          %827 = vmatmul.f32.gmra.mxu0 %v826
          %v828 = vpop.f32.mrf.mxu0
          %v829 = vadd.f32 %v779, %v828
          %v830 = vand.u32 %v471, 4294901760
          %831 = vmatmul.f32.gmra.mxu0 %v830
          %v832 = vpop.f32.mrf.mxu0
          %v833 = vadd.f32 %v783, %v832
          %v834 = vand.u32 %v474, 4294901760
          %835 = vmatmul.f32.gmra.mxu0 %v834
          %v836 = vpop.f32.mrf.mxu0
          %v837 = vadd.f32 %v787, %v836
          %838 = vdwg.mxu0
          %v839 = vld [vmem:[%s2] sm:$0x1]
          %v841 = vperm.slane %v839, 0
          %v843 = vmul.f32 %v809, %v841
          %v844 = vmul.f32 %v813, %v841
          %v845 = vmul.f32 %v817, %v841
          %v846 = vmul.f32 %v821, %v841
          %v847 = vmul.f32 %v825, %v841
          %v848 = vmul.f32 %v829, %v841
          %v849 = vmul.f32 %v833, %v841
          %v850 = vmul.f32 %v837, %v841
          %v851 = vld [vmem:[%s3] sm:$0x1]
          %v853 = vperm.slane %v851, 0
          %v855 = vadd.f32 %v843, %v853
          %v856 = vadd.f32 %v844, %v853
          %v857 = vadd.f32 %v845, %v853
          %v858 = vadd.f32 %v846, %v853
          %v859 = vadd.f32 %v847, %v853
          %v860 = vadd.f32 %v848, %v853
          %v861 = vadd.f32 %v849, %v853
          %v862 = vadd.f32 %v850, %v853
          %v863 = vmax.f32 %v855, 0.0
          %v864 = vmax.f32 %v856, 0.0
          %v865 = vmax.f32 %v857, 0.0
          %v866 = vmax.f32 %v858, 0.0
          %v867 = vmax.f32 %v859, 0.0
          %v868 = vmax.f32 %v860, 0.0
          %v869 = vmax.f32 %v861, 0.0
          %v870 = vmax.f32 %v862, 0.0
          %s871 = scalar_lea.vmem [#allocation3], 16
          %vm872 = vcmask 31744
          %873 = vst.msk [vmem:[%s871 + $0x1] sm:$0xff] %vm872, %v863
          %874 = vst.msk [vmem:[%s871 + $0x11] sm:$0xff] %vm872, %v864
          %875 = vst.msk [vmem:[%s871 + $0x21] sm:$0xff] %vm872, %v865
          %876 = vst.msk [vmem:[%s871 + $0x31] sm:$0xff] %vm872, %v866
          %877 = vst.msk [vmem:[%s871 + $0x41] sm:$0xff] %vm872, %v867
          %878 = vst.msk [vmem:[%s871 + $0x51] sm:$0xff] %vm872, %v868
          %879 = vst.msk [vmem:[%s871 + $0x61] sm:$0xff] %vm872, %v869
          %880 = vst.msk [vmem:[%s871 + $0x71] sm:$0xff] %vm872, %v870
          %v881 = vld [vmem:[%s344] sm:$0xf]
          %v882 = vld [vmem:[%s344 + $0x4] sm:$0xf]
          %v883 = vld [vmem:[%s344 + $0x8] sm:$0xf]
          %v884 = vld [vmem:[%s344 + $0xc] sm:$0xf]
          %v885 = vld [vmem:[%s344 + $0x10] sm:$0xf]
          %v886 = vld [vmem:[%s344 + $0x14] sm:$0xf]
          %v887 = vld [vmem:[%s344 + $0x18] sm:$0xf]
          %v888 = vld [vmem:[%s344 + $0x1c] sm:$0xf]
          %v889 = vld [vmem:[%s344 + $0x20] sm:$0xf]
          %v890 = vld [vmem:[#allocation2] sm:$0xff]
          %v891 = vld [vmem:[#allocation2 + $0x8] sm:$0xff]
          %v892 = vld [vmem:[#allocation2 + $0x10] sm:$0xff]
          %v893 = vld [vmem:[#allocation2 + $0x18] sm:$0xff]
          %v894 = vld [vmem:[#allocation2 + $0x20] sm:$0xff]
          %v895 = vld [vmem:[#allocation2 + $0x28] sm:$0xff]
          %v896 = vld [vmem:[#allocation2 + $0x30] sm:$0xff]
          %v897 = vld [vmem:[#allocation2 + $0x38] sm:$0xff]
          %v898 = vld [vmem:[#allocation3] sm:$0xff]
          %v899 = vld [vmem:[#allocation3 + $0x10] sm:$0xff]
          %v900 = vld [vmem:[#allocation3 + $0x20] sm:$0xff]
          %v901 = vld [vmem:[#allocation3 + $0x30] sm:$0xff]
          %v902 = vld [vmem:[#allocation3 + $0x40] sm:$0xff]
          %v903 = vld [vmem:[#allocation3 + $0x50] sm:$0xff]
          %v904 = vld [vmem:[#allocation3 + $0x60] sm:$0xff]
          %v905 = vld [vmem:[#allocation3 + $0x70] sm:$0xff]
          %v907 = vsel %vm872, %v898, 0
          %v910 = vsel %vm872, %v899, 0
          %v913 = vsel %vm872, %v900, 0
          %v916 = vsel %vm872, %v901, 0
          %v919 = vsel %vm872, %v902, 0
          %v922 = vsel %vm872, %v903, 0
          %v925 = vsel %vm872, %v904, 0
          %v928 = vsel %vm872, %v905, 0
          %vm930 = vcmask 1043456
          %v932 = vsel %vm930, %v881, 0
          %934 = vmatpush.msra.mxu0 0.0
          %935 = vmatpush.msra.mxu0 0.0
          %936 = vmatpush.msra.mxu0 0.0
          %937 = vmatpush.msra.mxu0 0.0
          %938 = vmatpush.msra.mxu0 0.0
          %939 = vmatpush.msra.mxu0 0.0
          %940 = vmatpush.msra.mxu0 0.0
          %941 = vmatpush.msra.mxu0 0.0
          %942 = vmatpush.msra.mxu0 0.0
          %943 = vmatpush.msra.mxu0 0.0
          %944 = vmatpush.msra.mxu0 0.0
          %945 = vmatpush.msra.mxu0 0.0
          %946 = vmatpush.msra.mxu0 0.0
          %947 = vmatpush.msra.mxu0 0.0
          %948 = vmatpush.msra.mxu0 0.0
          %v949 = vand.u32 %v932, 4294901760
          %950 = vmatpush.msra.mxu0 %v949
          %v951 = vand.u32 %v907, 4294901760
          %v952 = vsub.f32 %v907, %v951
          %v953 = vand.u32 %v952, 4294901760
          %v954 = vsub.f32 %v952, %v953
          %v955 = vand.u32 %v954, 4294901760
          %956 = vmatmul.f32.gmra.mxu0 %v955
          %v957 = vpop.f32.mrf.mxu0
          %v958 = vadd.f32 0.0, %v957
          %v959 = vand.u32 %v910, 4294901760
          %v960 = vsub.f32 %v910, %v959
          %v961 = vand.u32 %v960, 4294901760
          %v962 = vsub.f32 %v960, %v961
          %v963 = vand.u32 %v962, 4294901760
          %964 = vmatmul.f32.gmra.mxu0 %v963
          %v965 = vpop.f32.mrf.mxu0
          %v966 = vadd.f32 0.0, %v965
          %v967 = vand.u32 %v913, 4294901760
          %v968 = vsub.f32 %v913, %v967
          %v969 = vand.u32 %v968, 4294901760
          %v970 = vsub.f32 %v968, %v969
          %v971 = vand.u32 %v970, 4294901760
          %972 = vmatmul.f32.gmra.mxu0 %v971
          %v973 = vpop.f32.mrf.mxu0
          %v974 = vadd.f32 0.0, %v973
          %v975 = vand.u32 %v916, 4294901760
          %v976 = vsub.f32 %v916, %v975
          %v977 = vand.u32 %v976, 4294901760
          %v978 = vsub.f32 %v976, %v977
          %v979 = vand.u32 %v978, 4294901760
          %980 = vmatmul.f32.gmra.mxu0 %v979
          %v981 = vpop.f32.mrf.mxu0
          %v982 = vadd.f32 0.0, %v981
          %v983 = vand.u32 %v919, 4294901760
          %v984 = vsub.f32 %v919, %v983
          %v985 = vand.u32 %v984, 4294901760
          %v986 = vsub.f32 %v984, %v985
          %v987 = vand.u32 %v986, 4294901760
          %988 = vmatmul.f32.gmra.mxu0 %v987
          %v989 = vpop.f32.mrf.mxu0
          %v990 = vadd.f32 0.0, %v989
          %v991 = vand.u32 %v922, 4294901760
          %v992 = vsub.f32 %v922, %v991
          %v993 = vand.u32 %v992, 4294901760
          %v994 = vsub.f32 %v992, %v993
          %v995 = vand.u32 %v994, 4294901760
          %996 = vmatmul.f32.gmra.mxu0 %v995
          %v997 = vpop.f32.mrf.mxu0
          %v998 = vadd.f32 0.0, %v997
          %v999 = vand.u32 %v925, 4294901760
          %v1000 = vsub.f32 %v925, %v999
          %v1001 = vand.u32 %v1000, 4294901760
          %v1002 = vsub.f32 %v1000, %v1001
          %v1003 = vand.u32 %v1002, 4294901760
          %1004 = vmatmul.f32.gmra.mxu0 %v1003
          %v1005 = vpop.f32.mrf.mxu0
          %v1006 = vadd.f32 0.0, %v1005
          %v1007 = vand.u32 %v928, 4294901760
          %v1008 = vsub.f32 %v928, %v1007
          %v1009 = vand.u32 %v1008, 4294901760
          %v1010 = vsub.f32 %v1008, %v1009
          %v1011 = vand.u32 %v1010, 4294901760
          %1012 = vmatmul.f32.gmra.mxu0 %v1011
          %v1013 = vpop.f32.mrf.mxu0
          %v1014 = vadd.f32 0.0, %v1013
          %1015 = vdwg.mxu0
          %1016 = vmatpush.msra.mxu0 0.0
          %1017 = vmatpush.msra.mxu0 0.0
          %1018 = vmatpush.msra.mxu0 0.0
          %1019 = vmatpush.msra.mxu0 0.0
          %1020 = vmatpush.msra.mxu0 0.0
          %1021 = vmatpush.msra.mxu0 0.0
          %1022 = vmatpush.msra.mxu0 0.0
          %1023 = vmatpush.msra.mxu0 0.0
          %1024 = vmatpush.msra.mxu0 0.0
          %1025 = vmatpush.msra.mxu0 0.0
          %1026 = vmatpush.msra.mxu0 0.0
          %1027 = vmatpush.msra.mxu0 0.0
          %1028 = vmatpush.msra.mxu0 0.0
          %1029 = vmatpush.msra.mxu0 0.0
          %1030 = vmatpush.msra.mxu0 0.0
          %v1031 = vand.u32 %v932, 4294901760
          %v1032 = vsub.f32 %v932, %v1031
          %v1033 = vand.u32 %v1032, 4294901760
          %v1034 = vsub.f32 %v1032, %v1033
          %v1035 = vand.u32 %v1034, 4294901760
          %1036 = vmatpush.msra.mxu0 %v1035
          %v1037 = vand.u32 %v907, 4294901760
          %1038 = vmatmul.f32.gmra.mxu0 %v1037
          %v1039 = vpop.f32.mrf.mxu0
          %v1040 = vadd.f32 %v958, %v1039
          %v1041 = vand.u32 %v910, 4294901760
          %1042 = vmatmul.f32.gmra.mxu0 %v1041
          %v1043 = vpop.f32.mrf.mxu0
          %v1044 = vadd.f32 %v966, %v1043
          %v1045 = vand.u32 %v913, 4294901760
          %1046 = vmatmul.f32.gmra.mxu0 %v1045
          %v1047 = vpop.f32.mrf.mxu0
          %v1048 = vadd.f32 %v974, %v1047
          %v1049 = vand.u32 %v916, 4294901760
          %1050 = vmatmul.f32.gmra.mxu0 %v1049
          %v1051 = vpop.f32.mrf.mxu0
          %v1052 = vadd.f32 %v982, %v1051
          %v1053 = vand.u32 %v919, 4294901760
          %1054 = vmatmul.f32.gmra.mxu0 %v1053
          %v1055 = vpop.f32.mrf.mxu0
          %v1056 = vadd.f32 %v990, %v1055
          %v1057 = vand.u32 %v922, 4294901760
          %1058 = vmatmul.f32.gmra.mxu0 %v1057
          %v1059 = vpop.f32.mrf.mxu0
          %v1060 = vadd.f32 %v998, %v1059
          %v1061 = vand.u32 %v925, 4294901760
          %1062 = vmatmul.f32.gmra.mxu0 %v1061
          %v1063 = vpop.f32.mrf.mxu0
          %v1064 = vadd.f32 %v1006, %v1063
          %v1065 = vand.u32 %v928, 4294901760
          %1066 = vmatmul.f32.gmra.mxu0 %v1065
          %v1067 = vpop.f32.mrf.mxu0
          %v1068 = vadd.f32 %v1014, %v1067
          %1069 = vdwg.mxu0
          %1070 = vmatpush.msra.mxu0 0.0
          %1071 = vmatpush.msra.mxu0 0.0
          %1072 = vmatpush.msra.mxu0 0.0
          %1073 = vmatpush.msra.mxu0 0.0
          %1074 = vmatpush.msra.mxu0 0.0
          %1075 = vmatpush.msra.mxu0 0.0
          %1076 = vmatpush.msra.mxu0 0.0
          %1077 = vmatpush.msra.mxu0 0.0
          %1078 = vmatpush.msra.mxu0 0.0
          %1079 = vmatpush.msra.mxu0 0.0
          %1080 = vmatpush.msra.mxu0 0.0
          %1081 = vmatpush.msra.mxu0 0.0
          %1082 = vmatpush.msra.mxu0 0.0
          %1083 = vmatpush.msra.mxu0 0.0
          %1084 = vmatpush.msra.mxu0 0.0
          %v1085 = vand.u32 %v932, 4294901760
          %v1086 = vsub.f32 %v932, %v1085
          %1087 = vmatpush.msra.mxu0 %v1086
          %v1088 = vand.u32 %v907, 4294901760
          %v1089 = vsub.f32 %v907, %v1088
          %1090 = vmatmul.f32.gmra.mxu0 %v1089
          %v1091 = vpop.f32.mrf.mxu0
          %v1092 = vadd.f32 %v1040, %v1091
          %v1093 = vand.u32 %v910, 4294901760
          %v1094 = vsub.f32 %v910, %v1093
          %1095 = vmatmul.f32.gmra.mxu0 %v1094
          %v1096 = vpop.f32.mrf.mxu0
          %v1097 = vadd.f32 %v1044, %v1096
          %v1098 = vand.u32 %v913, 4294901760
          %v1099 = vsub.f32 %v913, %v1098
          %1100 = vmatmul.f32.gmra.mxu0 %v1099
          %v1101 = vpop.f32.mrf.mxu0
          %v1102 = vadd.f32 %v1048, %v1101
          %v1103 = vand.u32 %v916, 4294901760
          %v1104 = vsub.f32 %v916, %v1103
          %1105 = vmatmul.f32.gmra.mxu0 %v1104
          %v1106 = vpop.f32.mrf.mxu0
          %v1107 = vadd.f32 %v1052, %v1106
          %v1108 = vand.u32 %v919, 4294901760
          %v1109 = vsub.f32 %v919, %v1108
          %1110 = vmatmul.f32.gmra.mxu0 %v1109
          %v1111 = vpop.f32.mrf.mxu0
          %v1112 = vadd.f32 %v1056, %v1111
          %v1113 = vand.u32 %v922, 4294901760
          %v1114 = vsub.f32 %v922, %v1113
          %1115 = vmatmul.f32.gmra.mxu0 %v1114
          %v1116 = vpop.f32.mrf.mxu0
          %v1117 = vadd.f32 %v1060, %v1116
          %v1118 = vand.u32 %v925, 4294901760
          %v1119 = vsub.f32 %v925, %v1118
          %1120 = vmatmul.f32.gmra.mxu0 %v1119
          %v1121 = vpop.f32.mrf.mxu0
          %v1122 = vadd.f32 %v1064, %v1121
          %v1123 = vand.u32 %v928, 4294901760
          %v1124 = vsub.f32 %v928, %v1123
          %1125 = vmatmul.f32.gmra.mxu0 %v1124
          %v1126 = vpop.f32.mrf.mxu0
          %v1127 = vadd.f32 %v1068, %v1126
          %1128 = vdwg.mxu0
          %1129 = vmatpush.msra.mxu0 0.0
          %1130 = vmatpush.msra.mxu0 0.0
          %1131 = vmatpush.msra.mxu0 0.0
          %1132 = vmatpush.msra.mxu0 0.0
          %1133 = vmatpush.msra.mxu0 0.0
          %1134 = vmatpush.msra.mxu0 0.0
          %1135 = vmatpush.msra.mxu0 0.0
          %1136 = vmatpush.msra.mxu0 0.0
          %1137 = vmatpush.msra.mxu0 0.0
          %1138 = vmatpush.msra.mxu0 0.0
          %1139 = vmatpush.msra.mxu0 0.0
          %1140 = vmatpush.msra.mxu0 0.0
          %1141 = vmatpush.msra.mxu0 0.0
          %1142 = vmatpush.msra.mxu0 0.0
          %1143 = vmatpush.msra.mxu0 0.0
          %v1144 = vand.u32 %v932, 4294901760
          %1145 = vmatpush.msra.mxu0 %v1144
          %v1146 = vand.u32 %v907, 4294901760
          %v1147 = vsub.f32 %v907, %v1146
          %v1148 = vand.u32 %v1147, 4294901760
          %1149 = vmatmul.f32.gmra.mxu0 %v1148
          %v1150 = vpop.f32.mrf.mxu0
          %v1151 = vadd.f32 %v1092, %v1150
          %v1152 = vand.u32 %v910, 4294901760
          %v1153 = vsub.f32 %v910, %v1152
          %v1154 = vand.u32 %v1153, 4294901760
          %1155 = vmatmul.f32.gmra.mxu0 %v1154
          %v1156 = vpop.f32.mrf.mxu0
          %v1157 = vadd.f32 %v1097, %v1156
          %v1158 = vand.u32 %v913, 4294901760
          %v1159 = vsub.f32 %v913, %v1158
          %v1160 = vand.u32 %v1159, 4294901760
          %1161 = vmatmul.f32.gmra.mxu0 %v1160
          %v1162 = vpop.f32.mrf.mxu0
          %v1163 = vadd.f32 %v1102, %v1162
          %v1164 = vand.u32 %v916, 4294901760
          %v1165 = vsub.f32 %v916, %v1164
          %v1166 = vand.u32 %v1165, 4294901760
          %1167 = vmatmul.f32.gmra.mxu0 %v1166
          %v1168 = vpop.f32.mrf.mxu0
          %v1169 = vadd.f32 %v1107, %v1168
          %v1170 = vand.u32 %v919, 4294901760
          %v1171 = vsub.f32 %v919, %v1170
          %v1172 = vand.u32 %v1171, 4294901760
          %1173 = vmatmul.f32.gmra.mxu0 %v1172
          %v1174 = vpop.f32.mrf.mxu0
          %v1175 = vadd.f32 %v1112, %v1174
          %v1176 = vand.u32 %v922, 4294901760
          %v1177 = vsub.f32 %v922, %v1176
          %v1178 = vand.u32 %v1177, 4294901760
          %1179 = vmatmul.f32.gmra.mxu0 %v1178
          %v1180 = vpop.f32.mrf.mxu0
          %v1181 = vadd.f32 %v1117, %v1180
          %v1182 = vand.u32 %v925, 4294901760
          %v1183 = vsub.f32 %v925, %v1182
          %v1184 = vand.u32 %v1183, 4294901760
          %1185 = vmatmul.f32.gmra.mxu0 %v1184
          %v1186 = vpop.f32.mrf.mxu0
          %v1187 = vadd.f32 %v1122, %v1186
          %v1188 = vand.u32 %v928, 4294901760
          %v1189 = vsub.f32 %v928, %v1188
          %v1190 = vand.u32 %v1189, 4294901760
          %1191 = vmatmul.f32.gmra.mxu0 %v1190
          %v1192 = vpop.f32.mrf.mxu0
          %v1193 = vadd.f32 %v1127, %v1192
          %1194 = vdwg.mxu0
          %1195 = vmatpush.msra.mxu0 0.0
          %1196 = vmatpush.msra.mxu0 0.0
          %1197 = vmatpush.msra.mxu0 0.0
          %1198 = vmatpush.msra.mxu0 0.0
          %1199 = vmatpush.msra.mxu0 0.0
          %1200 = vmatpush.msra.mxu0 0.0
          %1201 = vmatpush.msra.mxu0 0.0
          %1202 = vmatpush.msra.mxu0 0.0
          %1203 = vmatpush.msra.mxu0 0.0
          %1204 = vmatpush.msra.mxu0 0.0
          %1205 = vmatpush.msra.mxu0 0.0
          %1206 = vmatpush.msra.mxu0 0.0
          %1207 = vmatpush.msra.mxu0 0.0
          %1208 = vmatpush.msra.mxu0 0.0
          %1209 = vmatpush.msra.mxu0 0.0
          %v1210 = vand.u32 %v932, 4294901760
          %v1211 = vsub.f32 %v932, %v1210
          %v1212 = vand.u32 %v1211, 4294901760
          %1213 = vmatpush.msra.mxu0 %v1212
          %v1214 = vand.u32 %v907, 4294901760
          %1215 = vmatmul.f32.gmra.mxu0 %v1214
          %v1216 = vpop.f32.mrf.mxu0
          %v1217 = vadd.f32 %v1151, %v1216
          %v1218 = vand.u32 %v910, 4294901760
          %1219 = vmatmul.f32.gmra.mxu0 %v1218
          %v1220 = vpop.f32.mrf.mxu0
          %v1221 = vadd.f32 %v1157, %v1220
          %v1222 = vand.u32 %v913, 4294901760
          %1223 = vmatmul.f32.gmra.mxu0 %v1222
          %v1224 = vpop.f32.mrf.mxu0
          %v1225 = vadd.f32 %v1163, %v1224
          %v1226 = vand.u32 %v916, 4294901760
          %1227 = vmatmul.f32.gmra.mxu0 %v1226
          %v1228 = vpop.f32.mrf.mxu0
          %v1229 = vadd.f32 %v1169, %v1228
          %v1230 = vand.u32 %v919, 4294901760
          %1231 = vmatmul.f32.gmra.mxu0 %v1230
          %v1232 = vpop.f32.mrf.mxu0
          %v1233 = vadd.f32 %v1175, %v1232
          %v1234 = vand.u32 %v922, 4294901760
          %1235 = vmatmul.f32.gmra.mxu0 %v1234
          %v1236 = vpop.f32.mrf.mxu0
          %v1237 = vadd.f32 %v1181, %v1236
          %v1238 = vand.u32 %v925, 4294901760
          %1239 = vmatmul.f32.gmra.mxu0 %v1238
          %v1240 = vpop.f32.mrf.mxu0
          %v1241 = vadd.f32 %v1187, %v1240
          %v1242 = vand.u32 %v928, 4294901760
          %1243 = vmatmul.f32.gmra.mxu0 %v1242
          %v1244 = vpop.f32.mrf.mxu0
          %v1245 = vadd.f32 %v1193, %v1244
          %1246 = vdwg.mxu0
          %1247 = vmatpush.msra.mxu0 0.0
          %1248 = vmatpush.msra.mxu0 0.0
          %1249 = vmatpush.msra.mxu0 0.0
          %1250 = vmatpush.msra.mxu0 0.0
          %1251 = vmatpush.msra.mxu0 0.0
          %1252 = vmatpush.msra.mxu0 0.0
          %1253 = vmatpush.msra.mxu0 0.0
          %1254 = vmatpush.msra.mxu0 0.0
          %1255 = vmatpush.msra.mxu0 0.0
          %1256 = vmatpush.msra.mxu0 0.0
          %1257 = vmatpush.msra.mxu0 0.0
          %1258 = vmatpush.msra.mxu0 0.0
          %1259 = vmatpush.msra.mxu0 0.0
          %1260 = vmatpush.msra.mxu0 0.0
          %1261 = vmatpush.msra.mxu0 0.0
          %v1262 = vand.u32 %v932, 4294901760
          %1263 = vmatpush.msra.mxu0 %v1262
          %v1264 = vand.u32 %v907, 4294901760
          %1265 = vmatmul.f32.gmra.mxu0 %v1264
          %v1266 = vpop.f32.mrf.mxu0
          %v1267 = vadd.f32 %v1217, %v1266
          %v1268 = vand.u32 %v910, 4294901760
          %1269 = vmatmul.f32.gmra.mxu0 %v1268
          %v1270 = vpop.f32.mrf.mxu0
          %v1271 = vadd.f32 %v1221, %v1270
          %v1272 = vand.u32 %v913, 4294901760
          %1273 = vmatmul.f32.gmra.mxu0 %v1272
          %v1274 = vpop.f32.mrf.mxu0
          %v1275 = vadd.f32 %v1225, %v1274
          %v1276 = vand.u32 %v916, 4294901760
          %1277 = vmatmul.f32.gmra.mxu0 %v1276
          %v1278 = vpop.f32.mrf.mxu0
          %v1279 = vadd.f32 %v1229, %v1278
          %v1280 = vand.u32 %v919, 4294901760
          %1281 = vmatmul.f32.gmra.mxu0 %v1280
          %v1282 = vpop.f32.mrf.mxu0
          %v1283 = vadd.f32 %v1233, %v1282
          %v1284 = vand.u32 %v922, 4294901760
          %1285 = vmatmul.f32.gmra.mxu0 %v1284
          %v1286 = vpop.f32.mrf.mxu0
          %v1287 = vadd.f32 %v1237, %v1286
          %v1288 = vand.u32 %v925, 4294901760
          %1289 = vmatmul.f32.gmra.mxu0 %v1288
          %v1290 = vpop.f32.mrf.mxu0
          %v1291 = vadd.f32 %v1241, %v1290
          %v1292 = vand.u32 %v928, 4294901760
          %1293 = vmatmul.f32.gmra.mxu0 %v1292
          %v1294 = vpop.f32.mrf.mxu0
          %v1295 = vadd.f32 %v1245, %v1294
          %1296 = vdwg.mxu0
          %v1297 = vadd.f32 %v890, %v1267
          %v1298 = vadd.f32 %v891, %v1271
          %v1299 = vadd.f32 %v892, %v1275
          %v1300 = vadd.f32 %v893, %v1279
          %v1301 = vadd.f32 %v894, %v1283
          %v1302 = vadd.f32 %v895, %v1287
          %v1303 = vadd.f32 %v896, %v1291
          %v1304 = vadd.f32 %v897, %v1295
          %v1305 = vld [vmem:[#allocation3 + $0x1] sm:$0xff]
          %v1306 = vld [vmem:[#allocation3 + $0x11] sm:$0xff]
          %v1307 = vld [vmem:[#allocation3 + $0x21] sm:$0xff]
          %v1308 = vld [vmem:[#allocation3 + $0x31] sm:$0xff]
          %v1309 = vld [vmem:[#allocation3 + $0x41] sm:$0xff]
          %v1310 = vld [vmem:[#allocation3 + $0x51] sm:$0xff]
          %v1311 = vld [vmem:[#allocation3 + $0x61] sm:$0xff]
          %v1312 = vld [vmem:[#allocation3 + $0x71] sm:$0xff]
          %v1314 = vsel %vm872, %v1305, 0
          %v1317 = vsel %vm872, %v1306, 0
          %v1320 = vsel %vm872, %v1307, 0
          %v1323 = vsel %vm872, %v1308, 0
          %v1326 = vsel %vm872, %v1309, 0
          %v1329 = vsel %vm872, %v1310, 0
          %v1332 = vsel %vm872, %v1311, 0
          %v1335 = vsel %vm872, %v1312, 0
          %v1338 = vsel %vm930, %v882, 0
          %1340 = vmatpush.msra.mxu0 0.0
          %1341 = vmatpush.msra.mxu0 0.0
          %1342 = vmatpush.msra.mxu0 0.0
          %1343 = vmatpush.msra.mxu0 0.0
          %1344 = vmatpush.msra.mxu0 0.0
          %1345 = vmatpush.msra.mxu0 0.0
          %1346 = vmatpush.msra.mxu0 0.0
          %1347 = vmatpush.msra.mxu0 0.0
          %1348 = vmatpush.msra.mxu0 0.0
          %1349 = vmatpush.msra.mxu0 0.0
          %1350 = vmatpush.msra.mxu0 0.0
          %1351 = vmatpush.msra.mxu0 0.0
          %1352 = vmatpush.msra.mxu0 0.0
          %1353 = vmatpush.msra.mxu0 0.0
          %1354 = vmatpush.msra.mxu0 0.0
          %v1355 = vand.u32 %v1338, 4294901760
          %1356 = vmatpush.msra.mxu0 %v1355
          %v1357 = vand.u32 %v1314, 4294901760
          %v1358 = vsub.f32 %v1314, %v1357
          %v1359 = vand.u32 %v1358, 4294901760
          %v1360 = vsub.f32 %v1358, %v1359
          %v1361 = vand.u32 %v1360, 4294901760
          %1362 = vmatmul.f32.gmra.mxu0 %v1361
          %v1363 = vpop.f32.mrf.mxu0
          %v1364 = vadd.f32 0.0, %v1363
          %v1365 = vand.u32 %v1317, 4294901760
          %v1366 = vsub.f32 %v1317, %v1365
          %v1367 = vand.u32 %v1366, 4294901760
          %v1368 = vsub.f32 %v1366, %v1367
          %v1369 = vand.u32 %v1368, 4294901760
          %1370 = vmatmul.f32.gmra.mxu0 %v1369
          %v1371 = vpop.f32.mrf.mxu0
          %v1372 = vadd.f32 0.0, %v1371
          %v1373 = vand.u32 %v1320, 4294901760
          %v1374 = vsub.f32 %v1320, %v1373
          %v1375 = vand.u32 %v1374, 4294901760
          %v1376 = vsub.f32 %v1374, %v1375
          %v1377 = vand.u32 %v1376, 4294901760
          %1378 = vmatmul.f32.gmra.mxu0 %v1377
          %v1379 = vpop.f32.mrf.mxu0
          %v1380 = vadd.f32 0.0, %v1379
          %v1381 = vand.u32 %v1323, 4294901760
          %v1382 = vsub.f32 %v1323, %v1381
          %v1383 = vand.u32 %v1382, 4294901760
          %v1384 = vsub.f32 %v1382, %v1383
          %v1385 = vand.u32 %v1384, 4294901760
          %1386 = vmatmul.f32.gmra.mxu0 %v1385
          %v1387 = vpop.f32.mrf.mxu0
          %v1388 = vadd.f32 0.0, %v1387
          %v1389 = vand.u32 %v1326, 4294901760
          %v1390 = vsub.f32 %v1326, %v1389
          %v1391 = vand.u32 %v1390, 4294901760
          %v1392 = vsub.f32 %v1390, %v1391
          %v1393 = vand.u32 %v1392, 4294901760
          %1394 = vmatmul.f32.gmra.mxu0 %v1393
          %v1395 = vpop.f32.mrf.mxu0
          %v1396 = vadd.f32 0.0, %v1395
          %v1397 = vand.u32 %v1329, 4294901760
          %v1398 = vsub.f32 %v1329, %v1397
          %v1399 = vand.u32 %v1398, 4294901760
          %v1400 = vsub.f32 %v1398, %v1399
          %v1401 = vand.u32 %v1400, 4294901760
          %1402 = vmatmul.f32.gmra.mxu0 %v1401
          %v1403 = vpop.f32.mrf.mxu0
          %v1404 = vadd.f32 0.0, %v1403
          %v1405 = vand.u32 %v1332, 4294901760
          %v1406 = vsub.f32 %v1332, %v1405
          %v1407 = vand.u32 %v1406, 4294901760
          %v1408 = vsub.f32 %v1406, %v1407
          %v1409 = vand.u32 %v1408, 4294901760
          %1410 = vmatmul.f32.gmra.mxu0 %v1409
          %v1411 = vpop.f32.mrf.mxu0
          %v1412 = vadd.f32 0.0, %v1411
          %v1413 = vand.u32 %v1335, 4294901760
          %v1414 = vsub.f32 %v1335, %v1413
          %v1415 = vand.u32 %v1414, 4294901760
          %v1416 = vsub.f32 %v1414, %v1415
          %v1417 = vand.u32 %v1416, 4294901760
          %1418 = vmatmul.f32.gmra.mxu0 %v1417
          %v1419 = vpop.f32.mrf.mxu0
          %v1420 = vadd.f32 0.0, %v1419
          %1421 = vdwg.mxu0
          %1422 = vmatpush.msra.mxu0 0.0
          %1423 = vmatpush.msra.mxu0 0.0
          %1424 = vmatpush.msra.mxu0 0.0
          %1425 = vmatpush.msra.mxu0 0.0
          %1426 = vmatpush.msra.mxu0 0.0
          %1427 = vmatpush.msra.mxu0 0.0
          %1428 = vmatpush.msra.mxu0 0.0
          %1429 = vmatpush.msra.mxu0 0.0
          %1430 = vmatpush.msra.mxu0 0.0
          %1431 = vmatpush.msra.mxu0 0.0
          %1432 = vmatpush.msra.mxu0 0.0
          %1433 = vmatpush.msra.mxu0 0.0
          %1434 = vmatpush.msra.mxu0 0.0
          %1435 = vmatpush.msra.mxu0 0.0
          %1436 = vmatpush.msra.mxu0 0.0
          %v1437 = vand.u32 %v1338, 4294901760
          %v1438 = vsub.f32 %v1338, %v1437
          %v1439 = vand.u32 %v1438, 4294901760
          %v1440 = vsub.f32 %v1438, %v1439
          %v1441 = vand.u32 %v1440, 4294901760
          %1442 = vmatpush.msra.mxu0 %v1441
          %v1443 = vand.u32 %v1314, 4294901760
          %1444 = vmatmul.f32.gmra.mxu0 %v1443
          %v1445 = vpop.f32.mrf.mxu0
          %v1446 = vadd.f32 %v1364, %v1445
          %v1447 = vand.u32 %v1317, 4294901760
          %1448 = vmatmul.f32.gmra.mxu0 %v1447
          %v1449 = vpop.f32.mrf.mxu0
          %v1450 = vadd.f32 %v1372, %v1449
          %v1451 = vand.u32 %v1320, 4294901760
          %1452 = vmatmul.f32.gmra.mxu0 %v1451
          %v1453 = vpop.f32.mrf.mxu0
          %v1454 = vadd.f32 %v1380, %v1453
          %v1455 = vand.u32 %v1323, 4294901760
          %1456 = vmatmul.f32.gmra.mxu0 %v1455
          %v1457 = vpop.f32.mrf.mxu0
          %v1458 = vadd.f32 %v1388, %v1457
          %v1459 = vand.u32 %v1326, 4294901760
          %1460 = vmatmul.f32.gmra.mxu0 %v1459
          %v1461 = vpop.f32.mrf.mxu0
          %v1462 = vadd.f32 %v1396, %v1461
          %v1463 = vand.u32 %v1329, 4294901760
          %1464 = vmatmul.f32.gmra.mxu0 %v1463
          %v1465 = vpop.f32.mrf.mxu0
          %v1466 = vadd.f32 %v1404, %v1465
          %v1467 = vand.u32 %v1332, 4294901760
          %1468 = vmatmul.f32.gmra.mxu0 %v1467
          %v1469 = vpop.f32.mrf.mxu0
          %v1470 = vadd.f32 %v1412, %v1469
          %v1471 = vand.u32 %v1335, 4294901760
          %1472 = vmatmul.f32.gmra.mxu0 %v1471
          %v1473 = vpop.f32.mrf.mxu0
          %v1474 = vadd.f32 %v1420, %v1473
          %1475 = vdwg.mxu0
          %1476 = vmatpush.msra.mxu0 0.0
          %1477 = vmatpush.msra.mxu0 0.0
          %1478 = vmatpush.msra.mxu0 0.0
          %1479 = vmatpush.msra.mxu0 0.0
          %1480 = vmatpush.msra.mxu0 0.0
          %1481 = vmatpush.msra.mxu0 0.0
          %1482 = vmatpush.msra.mxu0 0.0
          %1483 = vmatpush.msra.mxu0 0.0
          %1484 = vmatpush.msra.mxu0 0.0
          %1485 = vmatpush.msra.mxu0 0.0
          %1486 = vmatpush.msra.mxu0 0.0
          %1487 = vmatpush.msra.mxu0 0.0
          %1488 = vmatpush.msra.mxu0 0.0
          %1489 = vmatpush.msra.mxu0 0.0
          %1490 = vmatpush.msra.mxu0 0.0
          %v1491 = vand.u32 %v1338, 4294901760
          %v1492 = vsub.f32 %v1338, %v1491
          %1493 = vmatpush.msra.mxu0 %v1492
          %v1494 = vand.u32 %v1314, 4294901760
          %v1495 = vsub.f32 %v1314, %v1494
          %1496 = vmatmul.f32.gmra.mxu0 %v1495
          %v1497 = vpop.f32.mrf.mxu0
          %v1498 = vadd.f32 %v1446, %v1497
          %v1499 = vand.u32 %v1317, 4294901760
          %v1500 = vsub.f32 %v1317, %v1499
          %1501 = vmatmul.f32.gmra.mxu0 %v1500
          %v1502 = vpop.f32.mrf.mxu0
          %v1503 = vadd.f32 %v1450, %v1502
          %v1504 = vand.u32 %v1320, 4294901760
          %v1505 = vsub.f32 %v1320, %v1504
          %1506 = vmatmul.f32.gmra.mxu0 %v1505
          %v1507 = vpop.f32.mrf.mxu0
          %v1508 = vadd.f32 %v1454, %v1507
          %v1509 = vand.u32 %v1323, 4294901760
          %v1510 = vsub.f32 %v1323, %v1509
          %1511 = vmatmul.f32.gmra.mxu0 %v1510
          %v1512 = vpop.f32.mrf.mxu0
          %v1513 = vadd.f32 %v1458, %v1512
          %v1514 = vand.u32 %v1326, 4294901760
          %v1515 = vsub.f32 %v1326, %v1514
          %1516 = vmatmul.f32.gmra.mxu0 %v1515
          %v1517 = vpop.f32.mrf.mxu0
          %v1518 = vadd.f32 %v1462, %v1517
          %v1519 = vand.u32 %v1329, 4294901760
          %v1520 = vsub.f32 %v1329, %v1519
          %1521 = vmatmul.f32.gmra.mxu0 %v1520
          %v1522 = vpop.f32.mrf.mxu0
          %v1523 = vadd.f32 %v1466, %v1522
          %v1524 = vand.u32 %v1332, 4294901760
          %v1525 = vsub.f32 %v1332, %v1524
          %1526 = vmatmul.f32.gmra.mxu0 %v1525
          %v1527 = vpop.f32.mrf.mxu0
          %v1528 = vadd.f32 %v1470, %v1527
          %v1529 = vand.u32 %v1335, 4294901760
          %v1530 = vsub.f32 %v1335, %v1529
          %1531 = vmatmul.f32.gmra.mxu0 %v1530
          %v1532 = vpop.f32.mrf.mxu0
          %v1533 = vadd.f32 %v1474, %v1532
          %1534 = vdwg.mxu0
          %1535 = vmatpush.msra.mxu0 0.0
          %1536 = vmatpush.msra.mxu0 0.0
          %1537 = vmatpush.msra.mxu0 0.0
          %1538 = vmatpush.msra.mxu0 0.0
          %1539 = vmatpush.msra.mxu0 0.0
          %1540 = vmatpush.msra.mxu0 0.0
          %1541 = vmatpush.msra.mxu0 0.0
          %1542 = vmatpush.msra.mxu0 0.0
          %1543 = vmatpush.msra.mxu0 0.0
          %1544 = vmatpush.msra.mxu0 0.0
          %1545 = vmatpush.msra.mxu0 0.0
          %1546 = vmatpush.msra.mxu0 0.0
          %1547 = vmatpush.msra.mxu0 0.0
          %1548 = vmatpush.msra.mxu0 0.0
          %1549 = vmatpush.msra.mxu0 0.0
          %v1550 = vand.u32 %v1338, 4294901760
          %1551 = vmatpush.msra.mxu0 %v1550
          %v1552 = vand.u32 %v1314, 4294901760
          %v1553 = vsub.f32 %v1314, %v1552
          %v1554 = vand.u32 %v1553, 4294901760
          %1555 = vmatmul.f32.gmra.mxu0 %v1554
          %v1556 = vpop.f32.mrf.mxu0
          %v1557 = vadd.f32 %v1498, %v1556
          %v1558 = vand.u32 %v1317, 4294901760
          %v1559 = vsub.f32 %v1317, %v1558
          %v1560 = vand.u32 %v1559, 4294901760
          %1561 = vmatmul.f32.gmra.mxu0 %v1560
          %v1562 = vpop.f32.mrf.mxu0
          %v1563 = vadd.f32 %v1503, %v1562
          %v1564 = vand.u32 %v1320, 4294901760
          %v1565 = vsub.f32 %v1320, %v1564
          %v1566 = vand.u32 %v1565, 4294901760
          %1567 = vmatmul.f32.gmra.mxu0 %v1566
          %v1568 = vpop.f32.mrf.mxu0
          %v1569 = vadd.f32 %v1508, %v1568
          %v1570 = vand.u32 %v1323, 4294901760
          %v1571 = vsub.f32 %v1323, %v1570
          %v1572 = vand.u32 %v1571, 4294901760
          %1573 = vmatmul.f32.gmra.mxu0 %v1572
          %v1574 = vpop.f32.mrf.mxu0
          %v1575 = vadd.f32 %v1513, %v1574
          %v1576 = vand.u32 %v1326, 4294901760
          %v1577 = vsub.f32 %v1326, %v1576
          %v1578 = vand.u32 %v1577, 4294901760
          %1579 = vmatmul.f32.gmra.mxu0 %v1578
          %v1580 = vpop.f32.mrf.mxu0
          %v1581 = vadd.f32 %v1518, %v1580
          %v1582 = vand.u32 %v1329, 4294901760
          %v1583 = vsub.f32 %v1329, %v1582
          %v1584 = vand.u32 %v1583, 4294901760
          %1585 = vmatmul.f32.gmra.mxu0 %v1584
          %v1586 = vpop.f32.mrf.mxu0
          %v1587 = vadd.f32 %v1523, %v1586
          %v1588 = vand.u32 %v1332, 4294901760
          %v1589 = vsub.f32 %v1332, %v1588
          %v1590 = vand.u32 %v1589, 4294901760
          %1591 = vmatmul.f32.gmra.mxu0 %v1590
          %v1592 = vpop.f32.mrf.mxu0
          %v1593 = vadd.f32 %v1528, %v1592
          %v1594 = vand.u32 %v1335, 4294901760
          %v1595 = vsub.f32 %v1335, %v1594
          %v1596 = vand.u32 %v1595, 4294901760
          %1597 = vmatmul.f32.gmra.mxu0 %v1596
          %v1598 = vpop.f32.mrf.mxu0
          %v1599 = vadd.f32 %v1533, %v1598
          %1600 = vdwg.mxu0
          %1601 = vmatpush.msra.mxu0 0.0
          %1602 = vmatpush.msra.mxu0 0.0
          %1603 = vmatpush.msra.mxu0 0.0
          %1604 = vmatpush.msra.mxu0 0.0
          %1605 = vmatpush.msra.mxu0 0.0
          %1606 = vmatpush.msra.mxu0 0.0
          %1607 = vmatpush.msra.mxu0 0.0
          %1608 = vmatpush.msra.mxu0 0.0
          %1609 = vmatpush.msra.mxu0 0.0
          %1610 = vmatpush.msra.mxu0 0.0
          %1611 = vmatpush.msra.mxu0 0.0
          %1612 = vmatpush.msra.mxu0 0.0
          %1613 = vmatpush.msra.mxu0 0.0
          %1614 = vmatpush.msra.mxu0 0.0
          %1615 = vmatpush.msra.mxu0 0.0
          %v1616 = vand.u32 %v1338, 4294901760
          %v1617 = vsub.f32 %v1338, %v1616
          %v1618 = vand.u32 %v1617, 4294901760
          %1619 = vmatpush.msra.mxu0 %v1618
          %v1620 = vand.u32 %v1314, 4294901760
          %1621 = vmatmul.f32.gmra.mxu0 %v1620
          %v1622 = vpop.f32.mrf.mxu0
          %v1623 = vadd.f32 %v1557, %v1622
          %v1624 = vand.u32 %v1317, 4294901760
          %1625 = vmatmul.f32.gmra.mxu0 %v1624
          %v1626 = vpop.f32.mrf.mxu0
          %v1627 = vadd.f32 %v1563, %v1626
          %v1628 = vand.u32 %v1320, 4294901760
          %1629 = vmatmul.f32.gmra.mxu0 %v1628
          %v1630 = vpop.f32.mrf.mxu0
          %v1631 = vadd.f32 %v1569, %v1630
          %v1632 = vand.u32 %v1323, 4294901760
          %1633 = vmatmul.f32.gmra.mxu0 %v1632
          %v1634 = vpop.f32.mrf.mxu0
          %v1635 = vadd.f32 %v1575, %v1634
          %v1636 = vand.u32 %v1326, 4294901760
          %1637 = vmatmul.f32.gmra.mxu0 %v1636
          %v1638 = vpop.f32.mrf.mxu0
          %v1639 = vadd.f32 %v1581, %v1638
          %v1640 = vand.u32 %v1329, 4294901760
          %1641 = vmatmul.f32.gmra.mxu0 %v1640
          %v1642 = vpop.f32.mrf.mxu0
          %v1643 = vadd.f32 %v1587, %v1642
          %v1644 = vand.u32 %v1332, 4294901760
          %1645 = vmatmul.f32.gmra.mxu0 %v1644
          %v1646 = vpop.f32.mrf.mxu0
          %v1647 = vadd.f32 %v1593, %v1646
          %v1648 = vand.u32 %v1335, 4294901760
          %1649 = vmatmul.f32.gmra.mxu0 %v1648
          %v1650 = vpop.f32.mrf.mxu0
          %v1651 = vadd.f32 %v1599, %v1650
          %1652 = vdwg.mxu0
          %1653 = vmatpush.msra.mxu0 0.0
          %1654 = vmatpush.msra.mxu0 0.0
          %1655 = vmatpush.msra.mxu0 0.0
          %1656 = vmatpush.msra.mxu0 0.0
          %1657 = vmatpush.msra.mxu0 0.0
          %1658 = vmatpush.msra.mxu0 0.0
          %1659 = vmatpush.msra.mxu0 0.0
          %1660 = vmatpush.msra.mxu0 0.0
          %1661 = vmatpush.msra.mxu0 0.0
          %1662 = vmatpush.msra.mxu0 0.0
          %1663 = vmatpush.msra.mxu0 0.0
          %1664 = vmatpush.msra.mxu0 0.0
          %1665 = vmatpush.msra.mxu0 0.0
          %1666 = vmatpush.msra.mxu0 0.0
          %1667 = vmatpush.msra.mxu0 0.0
          %v1668 = vand.u32 %v1338, 4294901760
          %1669 = vmatpush.msra.mxu0 %v1668
          %v1670 = vand.u32 %v1314, 4294901760
          %1671 = vmatmul.f32.gmra.mxu0 %v1670
          %v1672 = vpop.f32.mrf.mxu0
          %v1673 = vadd.f32 %v1623, %v1672
          %v1674 = vand.u32 %v1317, 4294901760
          %1675 = vmatmul.f32.gmra.mxu0 %v1674
          %v1676 = vpop.f32.mrf.mxu0
          %v1677 = vadd.f32 %v1627, %v1676
          %v1678 = vand.u32 %v1320, 4294901760
          %1679 = vmatmul.f32.gmra.mxu0 %v1678
          %v1680 = vpop.f32.mrf.mxu0
          %v1681 = vadd.f32 %v1631, %v1680
          %v1682 = vand.u32 %v1323, 4294901760
          %1683 = vmatmul.f32.gmra.mxu0 %v1682
          %v1684 = vpop.f32.mrf.mxu0
          %v1685 = vadd.f32 %v1635, %v1684
          %v1686 = vand.u32 %v1326, 4294901760
          %1687 = vmatmul.f32.gmra.mxu0 %v1686
          %v1688 = vpop.f32.mrf.mxu0
          %v1689 = vadd.f32 %v1639, %v1688
          %v1690 = vand.u32 %v1329, 4294901760
          %1691 = vmatmul.f32.gmra.mxu0 %v1690
          %v1692 = vpop.f32.mrf.mxu0
          %v1693 = vadd.f32 %v1643, %v1692
          %v1694 = vand.u32 %v1332, 4294901760
          %1695 = vmatmul.f32.gmra.mxu0 %v1694
          %v1696 = vpop.f32.mrf.mxu0
          %v1697 = vadd.f32 %v1647, %v1696
          %v1698 = vand.u32 %v1335, 4294901760
          %1699 = vmatmul.f32.gmra.mxu0 %v1698
          %v1700 = vpop.f32.mrf.mxu0
          %v1701 = vadd.f32 %v1651, %v1700
          %1702 = vdwg.mxu0
          %v1703 = vadd.f32 %v1297, %v1673
          %v1704 = vadd.f32 %v1298, %v1677
          %v1705 = vadd.f32 %v1299, %v1681
          %v1706 = vadd.f32 %v1300, %v1685
          %v1707 = vadd.f32 %v1301, %v1689
          %v1708 = vadd.f32 %v1302, %v1693
          %v1709 = vadd.f32 %v1303, %v1697
          %v1710 = vadd.f32 %v1304, %v1701
          %v1711 = vld [vmem:[#allocation3 + $0x2] sm:$0xff]
          %v1712 = vld [vmem:[#allocation3 + $0x12] sm:$0xff]
          %v1713 = vld [vmem:[#allocation3 + $0x22] sm:$0xff]
          %v1714 = vld [vmem:[#allocation3 + $0x32] sm:$0xff]
          %v1715 = vld [vmem:[#allocation3 + $0x42] sm:$0xff]
          %v1716 = vld [vmem:[#allocation3 + $0x52] sm:$0xff]
          %v1717 = vld [vmem:[#allocation3 + $0x62] sm:$0xff]
          %v1718 = vld [vmem:[#allocation3 + $0x72] sm:$0xff]
          %v1720 = vsel %vm872, %v1711, 0
          %v1723 = vsel %vm872, %v1712, 0
          %v1726 = vsel %vm872, %v1713, 0
          %v1729 = vsel %vm872, %v1714, 0
          %v1732 = vsel %vm872, %v1715, 0
          %v1735 = vsel %vm872, %v1716, 0
          %v1738 = vsel %vm872, %v1717, 0
          %v1741 = vsel %vm872, %v1718, 0
          %v1744 = vsel %vm930, %v883, 0
          %1746 = vmatpush.msra.mxu0 0.0
          %1747 = vmatpush.msra.mxu0 0.0
          %1748 = vmatpush.msra.mxu0 0.0
          %1749 = vmatpush.msra.mxu0 0.0
          %1750 = vmatpush.msra.mxu0 0.0
          %1751 = vmatpush.msra.mxu0 0.0
          %1752 = vmatpush.msra.mxu0 0.0
          %1753 = vmatpush.msra.mxu0 0.0
          %1754 = vmatpush.msra.mxu0 0.0
          %1755 = vmatpush.msra.mxu0 0.0
          %1756 = vmatpush.msra.mxu0 0.0
          %1757 = vmatpush.msra.mxu0 0.0
          %1758 = vmatpush.msra.mxu0 0.0
          %1759 = vmatpush.msra.mxu0 0.0
          %1760 = vmatpush.msra.mxu0 0.0
          %v1761 = vand.u32 %v1744, 4294901760
          %1762 = vmatpush.msra.mxu0 %v1761
          %v1763 = vand.u32 %v1720, 4294901760
          %v1764 = vsub.f32 %v1720, %v1763
          %v1765 = vand.u32 %v1764, 4294901760
          %v1766 = vsub.f32 %v1764, %v1765
          %v1767 = vand.u32 %v1766, 4294901760
          %1768 = vmatmul.f32.gmra.mxu0 %v1767
          %v1769 = vpop.f32.mrf.mxu0
          %v1770 = vadd.f32 0.0, %v1769
          %v1771 = vand.u32 %v1723, 4294901760
          %v1772 = vsub.f32 %v1723, %v1771
          %v1773 = vand.u32 %v1772, 4294901760
          %v1774 = vsub.f32 %v1772, %v1773
          %v1775 = vand.u32 %v1774, 4294901760
          %1776 = vmatmul.f32.gmra.mxu0 %v1775
          %v1777 = vpop.f32.mrf.mxu0
          %v1778 = vadd.f32 0.0, %v1777
          %v1779 = vand.u32 %v1726, 4294901760
          %v1780 = vsub.f32 %v1726, %v1779
          %v1781 = vand.u32 %v1780, 4294901760
          %v1782 = vsub.f32 %v1780, %v1781
          %v1783 = vand.u32 %v1782, 4294901760
          %1784 = vmatmul.f32.gmra.mxu0 %v1783
          %v1785 = vpop.f32.mrf.mxu0
          %v1786 = vadd.f32 0.0, %v1785
          %v1787 = vand.u32 %v1729, 4294901760
          %v1788 = vsub.f32 %v1729, %v1787
          %v1789 = vand.u32 %v1788, 4294901760
          %v1790 = vsub.f32 %v1788, %v1789
          %v1791 = vand.u32 %v1790, 4294901760
          %1792 = vmatmul.f32.gmra.mxu0 %v1791
          %v1793 = vpop.f32.mrf.mxu0
          %v1794 = vadd.f32 0.0, %v1793
          %v1795 = vand.u32 %v1732, 4294901760
          %v1796 = vsub.f32 %v1732, %v1795
          %v1797 = vand.u32 %v1796, 4294901760
          %v1798 = vsub.f32 %v1796, %v1797
          %v1799 = vand.u32 %v1798, 4294901760
          %1800 = vmatmul.f32.gmra.mxu0 %v1799
          %v1801 = vpop.f32.mrf.mxu0
          %v1802 = vadd.f32 0.0, %v1801
          %v1803 = vand.u32 %v1735, 4294901760
          %v1804 = vsub.f32 %v1735, %v1803
          %v1805 = vand.u32 %v1804, 4294901760
          %v1806 = vsub.f32 %v1804, %v1805
          %v1807 = vand.u32 %v1806, 4294901760
          %1808 = vmatmul.f32.gmra.mxu0 %v1807
          %v1809 = vpop.f32.mrf.mxu0
          %v1810 = vadd.f32 0.0, %v1809
          %v1811 = vand.u32 %v1738, 4294901760
          %v1812 = vsub.f32 %v1738, %v1811
          %v1813 = vand.u32 %v1812, 4294901760
          %v1814 = vsub.f32 %v1812, %v1813
          %v1815 = vand.u32 %v1814, 4294901760
          %1816 = vmatmul.f32.gmra.mxu0 %v1815
          %v1817 = vpop.f32.mrf.mxu0
          %v1818 = vadd.f32 0.0, %v1817
          %v1819 = vand.u32 %v1741, 4294901760
          %v1820 = vsub.f32 %v1741, %v1819
          %v1821 = vand.u32 %v1820, 4294901760
          %v1822 = vsub.f32 %v1820, %v1821
          %v1823 = vand.u32 %v1822, 4294901760
          %1824 = vmatmul.f32.gmra.mxu0 %v1823
          %v1825 = vpop.f32.mrf.mxu0
          %v1826 = vadd.f32 0.0, %v1825
          %1827 = vdwg.mxu0
          %1828 = vmatpush.msra.mxu0 0.0
          %1829 = vmatpush.msra.mxu0 0.0
          %1830 = vmatpush.msra.mxu0 0.0
          %1831 = vmatpush.msra.mxu0 0.0
          %1832 = vmatpush.msra.mxu0 0.0
          %1833 = vmatpush.msra.mxu0 0.0
          %1834 = vmatpush.msra.mxu0 0.0
          %1835 = vmatpush.msra.mxu0 0.0
          %1836 = vmatpush.msra.mxu0 0.0
          %1837 = vmatpush.msra.mxu0 0.0
          %1838 = vmatpush.msra.mxu0 0.0
          %1839 = vmatpush.msra.mxu0 0.0
          %1840 = vmatpush.msra.mxu0 0.0
          %1841 = vmatpush.msra.mxu0 0.0
          %1842 = vmatpush.msra.mxu0 0.0
          %v1843 = vand.u32 %v1744, 4294901760
          %v1844 = vsub.f32 %v1744, %v1843
          %v1845 = vand.u32 %v1844, 4294901760
          %v1846 = vsub.f32 %v1844, %v1845
          %v1847 = vand.u32 %v1846, 4294901760
          %1848 = vmatpush.msra.mxu0 %v1847
          %v1849 = vand.u32 %v1720, 4294901760
          %1850 = vmatmul.f32.gmra.mxu0 %v1849
          %v1851 = vpop.f32.mrf.mxu0
          %v1852 = vadd.f32 %v1770, %v1851
          %v1853 = vand.u32 %v1723, 4294901760
          %1854 = vmatmul.f32.gmra.mxu0 %v1853
          %v1855 = vpop.f32.mrf.mxu0
          %v1856 = vadd.f32 %v1778, %v1855
          %v1857 = vand.u32 %v1726, 4294901760
          %1858 = vmatmul.f32.gmra.mxu0 %v1857
          %v1859 = vpop.f32.mrf.mxu0
          %v1860 = vadd.f32 %v1786, %v1859
          %v1861 = vand.u32 %v1729, 4294901760
          %1862 = vmatmul.f32.gmra.mxu0 %v1861
          %v1863 = vpop.f32.mrf.mxu0
          %v1864 = vadd.f32 %v1794, %v1863
          %v1865 = vand.u32 %v1732, 4294901760
          %1866 = vmatmul.f32.gmra.mxu0 %v1865
          %v1867 = vpop.f32.mrf.mxu0
          %v1868 = vadd.f32 %v1802, %v1867
          %v1869 = vand.u32 %v1735, 4294901760
          %1870 = vmatmul.f32.gmra.mxu0 %v1869
          %v1871 = vpop.f32.mrf.mxu0
          %v1872 = vadd.f32 %v1810, %v1871
          %v1873 = vand.u32 %v1738, 4294901760
          %1874 = vmatmul.f32.gmra.mxu0 %v1873
          %v1875 = vpop.f32.mrf.mxu0
          %v1876 = vadd.f32 %v1818, %v1875
          %v1877 = vand.u32 %v1741, 4294901760
          %1878 = vmatmul.f32.gmra.mxu0 %v1877
          %v1879 = vpop.f32.mrf.mxu0
          %v1880 = vadd.f32 %v1826, %v1879
          %1881 = vdwg.mxu0
          %1882 = vmatpush.msra.mxu0 0.0
          %1883 = vmatpush.msra.mxu0 0.0
          %1884 = vmatpush.msra.mxu0 0.0
          %1885 = vmatpush.msra.mxu0 0.0
          %1886 = vmatpush.msra.mxu0 0.0
          %1887 = vmatpush.msra.mxu0 0.0
          %1888 = vmatpush.msra.mxu0 0.0
          %1889 = vmatpush.msra.mxu0 0.0
          %1890 = vmatpush.msra.mxu0 0.0
          %1891 = vmatpush.msra.mxu0 0.0
          %1892 = vmatpush.msra.mxu0 0.0
          %1893 = vmatpush.msra.mxu0 0.0
          %1894 = vmatpush.msra.mxu0 0.0
          %1895 = vmatpush.msra.mxu0 0.0
          %1896 = vmatpush.msra.mxu0 0.0
          %v1897 = vand.u32 %v1744, 4294901760
          %v1898 = vsub.f32 %v1744, %v1897
          %1899 = vmatpush.msra.mxu0 %v1898
          %v1900 = vand.u32 %v1720, 4294901760
          %v1901 = vsub.f32 %v1720, %v1900
          %1902 = vmatmul.f32.gmra.mxu0 %v1901
          %v1903 = vpop.f32.mrf.mxu0
          %v1904 = vadd.f32 %v1852, %v1903
          %v1905 = vand.u32 %v1723, 4294901760
          %v1906 = vsub.f32 %v1723, %v1905
          %1907 = vmatmul.f32.gmra.mxu0 %v1906
          %v1908 = vpop.f32.mrf.mxu0
          %v1909 = vadd.f32 %v1856, %v1908
          %v1910 = vand.u32 %v1726, 4294901760
          %v1911 = vsub.f32 %v1726, %v1910
          %1912 = vmatmul.f32.gmra.mxu0 %v1911
          %v1913 = vpop.f32.mrf.mxu0
          %v1914 = vadd.f32 %v1860, %v1913
          %v1915 = vand.u32 %v1729, 4294901760
          %v1916 = vsub.f32 %v1729, %v1915
          %1917 = vmatmul.f32.gmra.mxu0 %v1916
          %v1918 = vpop.f32.mrf.mxu0
          %v1919 = vadd.f32 %v1864, %v1918
          %v1920 = vand.u32 %v1732, 4294901760
          %v1921 = vsub.f32 %v1732, %v1920
          %1922 = vmatmul.f32.gmra.mxu0 %v1921
          %v1923 = vpop.f32.mrf.mxu0
          %v1924 = vadd.f32 %v1868, %v1923
          %v1925 = vand.u32 %v1735, 4294901760
          %v1926 = vsub.f32 %v1735, %v1925
          %1927 = vmatmul.f32.gmra.mxu0 %v1926
          %v1928 = vpop.f32.mrf.mxu0
          %v1929 = vadd.f32 %v1872, %v1928
          %v1930 = vand.u32 %v1738, 4294901760
          %v1931 = vsub.f32 %v1738, %v1930
          %1932 = vmatmul.f32.gmra.mxu0 %v1931
          %v1933 = vpop.f32.mrf.mxu0
          %v1934 = vadd.f32 %v1876, %v1933
          %v1935 = vand.u32 %v1741, 4294901760
          %v1936 = vsub.f32 %v1741, %v1935
          %1937 = vmatmul.f32.gmra.mxu0 %v1936
          %v1938 = vpop.f32.mrf.mxu0
          %v1939 = vadd.f32 %v1880, %v1938
          %1940 = vdwg.mxu0
          %1941 = vmatpush.msra.mxu0 0.0
          %1942 = vmatpush.msra.mxu0 0.0
          %1943 = vmatpush.msra.mxu0 0.0
          %1944 = vmatpush.msra.mxu0 0.0
          %1945 = vmatpush.msra.mxu0 0.0
          %1946 = vmatpush.msra.mxu0 0.0
          %1947 = vmatpush.msra.mxu0 0.0
          %1948 = vmatpush.msra.mxu0 0.0
          %1949 = vmatpush.msra.mxu0 0.0
          %1950 = vmatpush.msra.mxu0 0.0
          %1951 = vmatpush.msra.mxu0 0.0
          %1952 = vmatpush.msra.mxu0 0.0
          %1953 = vmatpush.msra.mxu0 0.0
          %1954 = vmatpush.msra.mxu0 0.0
          %1955 = vmatpush.msra.mxu0 0.0
          %v1956 = vand.u32 %v1744, 4294901760
          %1957 = vmatpush.msra.mxu0 %v1956
          %v1958 = vand.u32 %v1720, 4294901760
          %v1959 = vsub.f32 %v1720, %v1958
          %v1960 = vand.u32 %v1959, 4294901760
          %1961 = vmatmul.f32.gmra.mxu0 %v1960
          %v1962 = vpop.f32.mrf.mxu0
          %v1963 = vadd.f32 %v1904, %v1962
          %v1964 = vand.u32 %v1723, 4294901760
          %v1965 = vsub.f32 %v1723, %v1964
          %v1966 = vand.u32 %v1965, 4294901760
          %1967 = vmatmul.f32.gmra.mxu0 %v1966
          %v1968 = vpop.f32.mrf.mxu0
          %v1969 = vadd.f32 %v1909, %v1968
          %v1970 = vand.u32 %v1726, 4294901760
          %v1971 = vsub.f32 %v1726, %v1970
          %v1972 = vand.u32 %v1971, 4294901760
          %1973 = vmatmul.f32.gmra.mxu0 %v1972
          %v1974 = vpop.f32.mrf.mxu0
          %v1975 = vadd.f32 %v1914, %v1974
          %v1976 = vand.u32 %v1729, 4294901760
          %v1977 = vsub.f32 %v1729, %v1976
          %v1978 = vand.u32 %v1977, 4294901760
          %1979 = vmatmul.f32.gmra.mxu0 %v1978
          %v1980 = vpop.f32.mrf.mxu0
          %v1981 = vadd.f32 %v1919, %v1980
          %v1982 = vand.u32 %v1732, 4294901760
          %v1983 = vsub.f32 %v1732, %v1982
          %v1984 = vand.u32 %v1983, 4294901760
          %1985 = vmatmul.f32.gmra.mxu0 %v1984
          %v1986 = vpop.f32.mrf.mxu0
          %v1987 = vadd.f32 %v1924, %v1986
          %v1988 = vand.u32 %v1735, 4294901760
          %v1989 = vsub.f32 %v1735, %v1988
          %v1990 = vand.u32 %v1989, 4294901760
          %1991 = vmatmul.f32.gmra.mxu0 %v1990
          %v1992 = vpop.f32.mrf.mxu0
          %v1993 = vadd.f32 %v1929, %v1992
          %v1994 = vand.u32 %v1738, 4294901760
          %v1995 = vsub.f32 %v1738, %v1994
          %v1996 = vand.u32 %v1995, 4294901760
          %1997 = vmatmul.f32.gmra.mxu0 %v1996
          %v1998 = vpop.f32.mrf.mxu0
          %v1999 = vadd.f32 %v1934, %v1998
          %v2000 = vand.u32 %v1741, 4294901760
          %v2001 = vsub.f32 %v1741, %v2000
          %v2002 = vand.u32 %v2001, 4294901760
          %2003 = vmatmul.f32.gmra.mxu0 %v2002
          %v2004 = vpop.f32.mrf.mxu0
          %v2005 = vadd.f32 %v1939, %v2004
          %2006 = vdwg.mxu0
          %2007 = vmatpush.msra.mxu0 0.0
          %2008 = vmatpush.msra.mxu0 0.0
          %2009 = vmatpush.msra.mxu0 0.0
          %2010 = vmatpush.msra.mxu0 0.0
          %2011 = vmatpush.msra.mxu0 0.0
          %2012 = vmatpush.msra.mxu0 0.0
          %2013 = vmatpush.msra.mxu0 0.0
          %2014 = vmatpush.msra.mxu0 0.0
          %2015 = vmatpush.msra.mxu0 0.0
          %2016 = vmatpush.msra.mxu0 0.0
          %2017 = vmatpush.msra.mxu0 0.0
          %2018 = vmatpush.msra.mxu0 0.0
          %2019 = vmatpush.msra.mxu0 0.0
          %2020 = vmatpush.msra.mxu0 0.0
          %2021 = vmatpush.msra.mxu0 0.0
          %v2022 = vand.u32 %v1744, 4294901760
          %v2023 = vsub.f32 %v1744, %v2022
          %v2024 = vand.u32 %v2023, 4294901760
          %2025 = vmatpush.msra.mxu0 %v2024
          %v2026 = vand.u32 %v1720, 4294901760
          %2027 = vmatmul.f32.gmra.mxu0 %v2026
          %v2028 = vpop.f32.mrf.mxu0
          %v2029 = vadd.f32 %v1963, %v2028
          %v2030 = vand.u32 %v1723, 4294901760
          %2031 = vmatmul.f32.gmra.mxu0 %v2030
          %v2032 = vpop.f32.mrf.mxu0
          %v2033 = vadd.f32 %v1969, %v2032
          %v2034 = vand.u32 %v1726, 4294901760
          %2035 = vmatmul.f32.gmra.mxu0 %v2034
          %v2036 = vpop.f32.mrf.mxu0
          %v2037 = vadd.f32 %v1975, %v2036
          %v2038 = vand.u32 %v1729, 4294901760
          %2039 = vmatmul.f32.gmra.mxu0 %v2038
          %v2040 = vpop.f32.mrf.mxu0
          %v2041 = vadd.f32 %v1981, %v2040
          %v2042 = vand.u32 %v1732, 4294901760
          %2043 = vmatmul.f32.gmra.mxu0 %v2042
          %v2044 = vpop.f32.mrf.mxu0
          %v2045 = vadd.f32 %v1987, %v2044
          %v2046 = vand.u32 %v1735, 4294901760
          %2047 = vmatmul.f32.gmra.mxu0 %v2046
          %v2048 = vpop.f32.mrf.mxu0
          %v2049 = vadd.f32 %v1993, %v2048
          %v2050 = vand.u32 %v1738, 4294901760
          %2051 = vmatmul.f32.gmra.mxu0 %v2050
          %v2052 = vpop.f32.mrf.mxu0
          %v2053 = vadd.f32 %v1999, %v2052
          %v2054 = vand.u32 %v1741, 4294901760
          %2055 = vmatmul.f32.gmra.mxu0 %v2054
          %v2056 = vpop.f32.mrf.mxu0
          %v2057 = vadd.f32 %v2005, %v2056
          %2058 = vdwg.mxu0
          %2059 = vmatpush.msra.mxu0 0.0
          %2060 = vmatpush.msra.mxu0 0.0
          %2061 = vmatpush.msra.mxu0 0.0
          %2062 = vmatpush.msra.mxu0 0.0
          %2063 = vmatpush.msra.mxu0 0.0
          %2064 = vmatpush.msra.mxu0 0.0
          %2065 = vmatpush.msra.mxu0 0.0
          %2066 = vmatpush.msra.mxu0 0.0
          %2067 = vmatpush.msra.mxu0 0.0
          %2068 = vmatpush.msra.mxu0 0.0
          %2069 = vmatpush.msra.mxu0 0.0
          %2070 = vmatpush.msra.mxu0 0.0
          %2071 = vmatpush.msra.mxu0 0.0
          %2072 = vmatpush.msra.mxu0 0.0
          %2073 = vmatpush.msra.mxu0 0.0
          %v2074 = vand.u32 %v1744, 4294901760
          %2075 = vmatpush.msra.mxu0 %v2074
          %v2076 = vand.u32 %v1720, 4294901760
          %2077 = vmatmul.f32.gmra.mxu0 %v2076
          %v2078 = vpop.f32.mrf.mxu0
          %v2079 = vadd.f32 %v2029, %v2078
          %v2080 = vand.u32 %v1723, 4294901760
          %2081 = vmatmul.f32.gmra.mxu0 %v2080
          %v2082 = vpop.f32.mrf.mxu0
          %v2083 = vadd.f32 %v2033, %v2082
          %v2084 = vand.u32 %v1726, 4294901760
          %2085 = vmatmul.f32.gmra.mxu0 %v2084
          %v2086 = vpop.f32.mrf.mxu0
          %v2087 = vadd.f32 %v2037, %v2086
          %v2088 = vand.u32 %v1729, 4294901760
          %2089 = vmatmul.f32.gmra.mxu0 %v2088
          %v2090 = vpop.f32.mrf.mxu0
          %v2091 = vadd.f32 %v2041, %v2090
          %v2092 = vand.u32 %v1732, 4294901760
          %2093 = vmatmul.f32.gmra.mxu0 %v2092
          %v2094 = vpop.f32.mrf.mxu0
          %v2095 = vadd.f32 %v2045, %v2094
          %v2096 = vand.u32 %v1735, 4294901760
          %2097 = vmatmul.f32.gmra.mxu0 %v2096
          %v2098 = vpop.f32.mrf.mxu0
          %v2099 = vadd.f32 %v2049, %v2098
          %v2100 = vand.u32 %v1738, 4294901760
          %2101 = vmatmul.f32.gmra.mxu0 %v2100
          %v2102 = vpop.f32.mrf.mxu0
          %v2103 = vadd.f32 %v2053, %v2102
          %v2104 = vand.u32 %v1741, 4294901760
          %2105 = vmatmul.f32.gmra.mxu0 %v2104
          %v2106 = vpop.f32.mrf.mxu0
          %v2107 = vadd.f32 %v2057, %v2106
          %2108 = vdwg.mxu0
          %v2109 = vadd.f32 %v1703, %v2079
          %v2110 = vadd.f32 %v1704, %v2083
          %v2111 = vadd.f32 %v1705, %v2087
          %v2112 = vadd.f32 %v1706, %v2091
          %v2113 = vadd.f32 %v1707, %v2095
          %v2114 = vadd.f32 %v1708, %v2099
          %v2115 = vadd.f32 %v1709, %v2103
          %v2116 = vadd.f32 %v1710, %v2107
          %v2117 = vld [vmem:[%s871] sm:$0xff]
          %v2118 = vld [vmem:[%s871 + $0x10] sm:$0xff]
          %v2119 = vld [vmem:[%s871 + $0x20] sm:$0xff]
          %v2120 = vld [vmem:[%s871 + $0x30] sm:$0xff]
          %v2121 = vld [vmem:[%s871 + $0x40] sm:$0xff]
          %v2122 = vld [vmem:[%s871 + $0x50] sm:$0xff]
          %v2123 = vld [vmem:[%s871 + $0x60] sm:$0xff]
          %v2124 = vld [vmem:[%s871 + $0x70] sm:$0xff]
          %v2126 = vsel %vm872, %v2117, 0
          %v2129 = vsel %vm872, %v2118, 0
          %v2132 = vsel %vm872, %v2119, 0
          %v2135 = vsel %vm872, %v2120, 0
          %v2138 = vsel %vm872, %v2121, 0
          %v2141 = vsel %vm872, %v2122, 0
          %v2144 = vsel %vm872, %v2123, 0
          %v2147 = vsel %vm872, %v2124, 0
          %v2150 = vsel %vm930, %v884, 0
          %2152 = vmatpush.msra.mxu0 0.0
          %2153 = vmatpush.msra.mxu0 0.0
          %2154 = vmatpush.msra.mxu0 0.0
          %2155 = vmatpush.msra.mxu0 0.0
          %2156 = vmatpush.msra.mxu0 0.0
          %2157 = vmatpush.msra.mxu0 0.0
          %2158 = vmatpush.msra.mxu0 0.0
          %2159 = vmatpush.msra.mxu0 0.0
          %2160 = vmatpush.msra.mxu0 0.0
          %2161 = vmatpush.msra.mxu0 0.0
          %2162 = vmatpush.msra.mxu0 0.0
          %2163 = vmatpush.msra.mxu0 0.0
          %2164 = vmatpush.msra.mxu0 0.0
          %2165 = vmatpush.msra.mxu0 0.0
          %2166 = vmatpush.msra.mxu0 0.0
          %v2167 = vand.u32 %v2150, 4294901760
          %2168 = vmatpush.msra.mxu0 %v2167
          %v2169 = vand.u32 %v2126, 4294901760
          %v2170 = vsub.f32 %v2126, %v2169
          %v2171 = vand.u32 %v2170, 4294901760
          %v2172 = vsub.f32 %v2170, %v2171
          %v2173 = vand.u32 %v2172, 4294901760
          %2174 = vmatmul.f32.gmra.mxu0 %v2173
          %v2175 = vpop.f32.mrf.mxu0
          %v2176 = vadd.f32 0.0, %v2175
          %v2177 = vand.u32 %v2129, 4294901760
          %v2178 = vsub.f32 %v2129, %v2177
          %v2179 = vand.u32 %v2178, 4294901760
          %v2180 = vsub.f32 %v2178, %v2179
          %v2181 = vand.u32 %v2180, 4294901760
          %2182 = vmatmul.f32.gmra.mxu0 %v2181
          %v2183 = vpop.f32.mrf.mxu0
          %v2184 = vadd.f32 0.0, %v2183
          %v2185 = vand.u32 %v2132, 4294901760
          %v2186 = vsub.f32 %v2132, %v2185
          %v2187 = vand.u32 %v2186, 4294901760
          %v2188 = vsub.f32 %v2186, %v2187
          %v2189 = vand.u32 %v2188, 4294901760
          %2190 = vmatmul.f32.gmra.mxu0 %v2189
          %v2191 = vpop.f32.mrf.mxu0
          %v2192 = vadd.f32 0.0, %v2191
          %v2193 = vand.u32 %v2135, 4294901760
          %v2194 = vsub.f32 %v2135, %v2193
          %v2195 = vand.u32 %v2194, 4294901760
          %v2196 = vsub.f32 %v2194, %v2195
          %v2197 = vand.u32 %v2196, 4294901760
          %2198 = vmatmul.f32.gmra.mxu0 %v2197
          %v2199 = vpop.f32.mrf.mxu0
          %v2200 = vadd.f32 0.0, %v2199
          %v2201 = vand.u32 %v2138, 4294901760
          %v2202 = vsub.f32 %v2138, %v2201
          %v2203 = vand.u32 %v2202, 4294901760
          %v2204 = vsub.f32 %v2202, %v2203
          %v2205 = vand.u32 %v2204, 4294901760
          %2206 = vmatmul.f32.gmra.mxu0 %v2205
          %v2207 = vpop.f32.mrf.mxu0
          %v2208 = vadd.f32 0.0, %v2207
          %v2209 = vand.u32 %v2141, 4294901760
          %v2210 = vsub.f32 %v2141, %v2209
          %v2211 = vand.u32 %v2210, 4294901760
          %v2212 = vsub.f32 %v2210, %v2211
          %v2213 = vand.u32 %v2212, 4294901760
          %2214 = vmatmul.f32.gmra.mxu0 %v2213
          %v2215 = vpop.f32.mrf.mxu0
          %v2216 = vadd.f32 0.0, %v2215
          %v2217 = vand.u32 %v2144, 4294901760
          %v2218 = vsub.f32 %v2144, %v2217
          %v2219 = vand.u32 %v2218, 4294901760
          %v2220 = vsub.f32 %v2218, %v2219
          %v2221 = vand.u32 %v2220, 4294901760
          %2222 = vmatmul.f32.gmra.mxu0 %v2221
          %v2223 = vpop.f32.mrf.mxu0
          %v2224 = vadd.f32 0.0, %v2223
          %v2225 = vand.u32 %v2147, 4294901760
          %v2226 = vsub.f32 %v2147, %v2225
          %v2227 = vand.u32 %v2226, 4294901760
          %v2228 = vsub.f32 %v2226, %v2227
          %v2229 = vand.u32 %v2228, 4294901760
          %2230 = vmatmul.f32.gmra.mxu0 %v2229
          %v2231 = vpop.f32.mrf.mxu0
          %v2232 = vadd.f32 0.0, %v2231
          %2233 = vdwg.mxu0
          %2234 = vmatpush.msra.mxu0 0.0
          %2235 = vmatpush.msra.mxu0 0.0
          %2236 = vmatpush.msra.mxu0 0.0
          %2237 = vmatpush.msra.mxu0 0.0
          %2238 = vmatpush.msra.mxu0 0.0
          %2239 = vmatpush.msra.mxu0 0.0
          %2240 = vmatpush.msra.mxu0 0.0
          %2241 = vmatpush.msra.mxu0 0.0
          %2242 = vmatpush.msra.mxu0 0.0
          %2243 = vmatpush.msra.mxu0 0.0
          %2244 = vmatpush.msra.mxu0 0.0
          %2245 = vmatpush.msra.mxu0 0.0
          %2246 = vmatpush.msra.mxu0 0.0
          %2247 = vmatpush.msra.mxu0 0.0
          %2248 = vmatpush.msra.mxu0 0.0
          %v2249 = vand.u32 %v2150, 4294901760
          %v2250 = vsub.f32 %v2150, %v2249
          %v2251 = vand.u32 %v2250, 4294901760
          %v2252 = vsub.f32 %v2250, %v2251
          %v2253 = vand.u32 %v2252, 4294901760
          %2254 = vmatpush.msra.mxu0 %v2253
          %v2255 = vand.u32 %v2126, 4294901760
          %2256 = vmatmul.f32.gmra.mxu0 %v2255
          %v2257 = vpop.f32.mrf.mxu0
          %v2258 = vadd.f32 %v2176, %v2257
          %v2259 = vand.u32 %v2129, 4294901760
          %2260 = vmatmul.f32.gmra.mxu0 %v2259
          %v2261 = vpop.f32.mrf.mxu0
          %v2262 = vadd.f32 %v2184, %v2261
          %v2263 = vand.u32 %v2132, 4294901760
          %2264 = vmatmul.f32.gmra.mxu0 %v2263
          %v2265 = vpop.f32.mrf.mxu0
          %v2266 = vadd.f32 %v2192, %v2265
          %v2267 = vand.u32 %v2135, 4294901760
          %2268 = vmatmul.f32.gmra.mxu0 %v2267
          %v2269 = vpop.f32.mrf.mxu0
          %v2270 = vadd.f32 %v2200, %v2269
          %v2271 = vand.u32 %v2138, 4294901760
          %2272 = vmatmul.f32.gmra.mxu0 %v2271
          %v2273 = vpop.f32.mrf.mxu0
          %v2274 = vadd.f32 %v2208, %v2273
          %v2275 = vand.u32 %v2141, 4294901760
          %2276 = vmatmul.f32.gmra.mxu0 %v2275
          %v2277 = vpop.f32.mrf.mxu0
          %v2278 = vadd.f32 %v2216, %v2277
          %v2279 = vand.u32 %v2144, 4294901760
          %2280 = vmatmul.f32.gmra.mxu0 %v2279
          %v2281 = vpop.f32.mrf.mxu0
          %v2282 = vadd.f32 %v2224, %v2281
          %v2283 = vand.u32 %v2147, 4294901760
          %2284 = vmatmul.f32.gmra.mxu0 %v2283
          %v2285 = vpop.f32.mrf.mxu0
          %v2286 = vadd.f32 %v2232, %v2285
          %2287 = vdwg.mxu0
          %2288 = vmatpush.msra.mxu0 0.0
          %2289 = vmatpush.msra.mxu0 0.0
          %2290 = vmatpush.msra.mxu0 0.0
          %2291 = vmatpush.msra.mxu0 0.0
          %2292 = vmatpush.msra.mxu0 0.0
          %2293 = vmatpush.msra.mxu0 0.0
          %2294 = vmatpush.msra.mxu0 0.0
          %2295 = vmatpush.msra.mxu0 0.0
          %2296 = vmatpush.msra.mxu0 0.0
          %2297 = vmatpush.msra.mxu0 0.0
          %2298 = vmatpush.msra.mxu0 0.0
          %2299 = vmatpush.msra.mxu0 0.0
          %2300 = vmatpush.msra.mxu0 0.0
          %2301 = vmatpush.msra.mxu0 0.0
          %2302 = vmatpush.msra.mxu0 0.0
          %v2303 = vand.u32 %v2150, 4294901760
          %v2304 = vsub.f32 %v2150, %v2303
          %2305 = vmatpush.msra.mxu0 %v2304
          %v2306 = vand.u32 %v2126, 4294901760
          %v2307 = vsub.f32 %v2126, %v2306
          %2308 = vmatmul.f32.gmra.mxu0 %v2307
          %v2309 = vpop.f32.mrf.mxu0
          %v2310 = vadd.f32 %v2258, %v2309
          %v2311 = vand.u32 %v2129, 4294901760
          %v2312 = vsub.f32 %v2129, %v2311
          %2313 = vmatmul.f32.gmra.mxu0 %v2312
          %v2314 = vpop.f32.mrf.mxu0
          %v2315 = vadd.f32 %v2262, %v2314
          %v2316 = vand.u32 %v2132, 4294901760
          %v2317 = vsub.f32 %v2132, %v2316
          %2318 = vmatmul.f32.gmra.mxu0 %v2317
          %v2319 = vpop.f32.mrf.mxu0
          %v2320 = vadd.f32 %v2266, %v2319
          %v2321 = vand.u32 %v2135, 4294901760
          %v2322 = vsub.f32 %v2135, %v2321
          %2323 = vmatmul.f32.gmra.mxu0 %v2322
          %v2324 = vpop.f32.mrf.mxu0
          %v2325 = vadd.f32 %v2270, %v2324
          %v2326 = vand.u32 %v2138, 4294901760
          %v2327 = vsub.f32 %v2138, %v2326
          %2328 = vmatmul.f32.gmra.mxu0 %v2327
          %v2329 = vpop.f32.mrf.mxu0
          %v2330 = vadd.f32 %v2274, %v2329
          %v2331 = vand.u32 %v2141, 4294901760
          %v2332 = vsub.f32 %v2141, %v2331
          %2333 = vmatmul.f32.gmra.mxu0 %v2332
          %v2334 = vpop.f32.mrf.mxu0
          %v2335 = vadd.f32 %v2278, %v2334
          %v2336 = vand.u32 %v2144, 4294901760
          %v2337 = vsub.f32 %v2144, %v2336
          %2338 = vmatmul.f32.gmra.mxu0 %v2337
          %v2339 = vpop.f32.mrf.mxu0
          %v2340 = vadd.f32 %v2282, %v2339
          %v2341 = vand.u32 %v2147, 4294901760
          %v2342 = vsub.f32 %v2147, %v2341
          %2343 = vmatmul.f32.gmra.mxu0 %v2342
          %v2344 = vpop.f32.mrf.mxu0
          %v2345 = vadd.f32 %v2286, %v2344
          %2346 = vdwg.mxu0
          %2347 = vmatpush.msra.mxu0 0.0
          %2348 = vmatpush.msra.mxu0 0.0
          %2349 = vmatpush.msra.mxu0 0.0
          %2350 = vmatpush.msra.mxu0 0.0
          %2351 = vmatpush.msra.mxu0 0.0
          %2352 = vmatpush.msra.mxu0 0.0
          %2353 = vmatpush.msra.mxu0 0.0
          %2354 = vmatpush.msra.mxu0 0.0
          %2355 = vmatpush.msra.mxu0 0.0
          %2356 = vmatpush.msra.mxu0 0.0
          %2357 = vmatpush.msra.mxu0 0.0
          %2358 = vmatpush.msra.mxu0 0.0
          %2359 = vmatpush.msra.mxu0 0.0
          %2360 = vmatpush.msra.mxu0 0.0
          %2361 = vmatpush.msra.mxu0 0.0
          %v2362 = vand.u32 %v2150, 4294901760
          %2363 = vmatpush.msra.mxu0 %v2362
          %v2364 = vand.u32 %v2126, 4294901760
          %v2365 = vsub.f32 %v2126, %v2364
          %v2366 = vand.u32 %v2365, 4294901760
          %2367 = vmatmul.f32.gmra.mxu0 %v2366
          %v2368 = vpop.f32.mrf.mxu0
          %v2369 = vadd.f32 %v2310, %v2368
          %v2370 = vand.u32 %v2129, 4294901760
          %v2371 = vsub.f32 %v2129, %v2370
          %v2372 = vand.u32 %v2371, 4294901760
          %2373 = vmatmul.f32.gmra.mxu0 %v2372
          %v2374 = vpop.f32.mrf.mxu0
          %v2375 = vadd.f32 %v2315, %v2374
          %v2376 = vand.u32 %v2132, 4294901760
          %v2377 = vsub.f32 %v2132, %v2376
          %v2378 = vand.u32 %v2377, 4294901760
          %2379 = vmatmul.f32.gmra.mxu0 %v2378
          %v2380 = vpop.f32.mrf.mxu0
          %v2381 = vadd.f32 %v2320, %v2380
          %v2382 = vand.u32 %v2135, 4294901760
          %v2383 = vsub.f32 %v2135, %v2382
          %v2384 = vand.u32 %v2383, 4294901760
          %2385 = vmatmul.f32.gmra.mxu0 %v2384
          %v2386 = vpop.f32.mrf.mxu0
          %v2387 = vadd.f32 %v2325, %v2386
          %v2388 = vand.u32 %v2138, 4294901760
          %v2389 = vsub.f32 %v2138, %v2388
          %v2390 = vand.u32 %v2389, 4294901760
          %2391 = vmatmul.f32.gmra.mxu0 %v2390
          %v2392 = vpop.f32.mrf.mxu0
          %v2393 = vadd.f32 %v2330, %v2392
          %v2394 = vand.u32 %v2141, 4294901760
          %v2395 = vsub.f32 %v2141, %v2394
          %v2396 = vand.u32 %v2395, 4294901760
          %2397 = vmatmul.f32.gmra.mxu0 %v2396
          %v2398 = vpop.f32.mrf.mxu0
          %v2399 = vadd.f32 %v2335, %v2398
          %v2400 = vand.u32 %v2144, 4294901760
          %v2401 = vsub.f32 %v2144, %v2400
          %v2402 = vand.u32 %v2401, 4294901760
          %2403 = vmatmul.f32.gmra.mxu0 %v2402
          %v2404 = vpop.f32.mrf.mxu0
          %v2405 = vadd.f32 %v2340, %v2404
          %v2406 = vand.u32 %v2147, 4294901760
          %v2407 = vsub.f32 %v2147, %v2406
          %v2408 = vand.u32 %v2407, 4294901760
          %2409 = vmatmul.f32.gmra.mxu0 %v2408
          %v2410 = vpop.f32.mrf.mxu0
          %v2411 = vadd.f32 %v2345, %v2410
          %2412 = vdwg.mxu0
          %2413 = vmatpush.msra.mxu0 0.0
          %2414 = vmatpush.msra.mxu0 0.0
          %2415 = vmatpush.msra.mxu0 0.0
          %2416 = vmatpush.msra.mxu0 0.0
          %2417 = vmatpush.msra.mxu0 0.0
          %2418 = vmatpush.msra.mxu0 0.0
          %2419 = vmatpush.msra.mxu0 0.0
          %2420 = vmatpush.msra.mxu0 0.0
          %2421 = vmatpush.msra.mxu0 0.0
          %2422 = vmatpush.msra.mxu0 0.0
          %2423 = vmatpush.msra.mxu0 0.0
          %2424 = vmatpush.msra.mxu0 0.0
          %2425 = vmatpush.msra.mxu0 0.0
          %2426 = vmatpush.msra.mxu0 0.0
          %2427 = vmatpush.msra.mxu0 0.0
          %v2428 = vand.u32 %v2150, 4294901760
          %v2429 = vsub.f32 %v2150, %v2428
          %v2430 = vand.u32 %v2429, 4294901760
          %2431 = vmatpush.msra.mxu0 %v2430
          %v2432 = vand.u32 %v2126, 4294901760
          %2433 = vmatmul.f32.gmra.mxu0 %v2432
          %v2434 = vpop.f32.mrf.mxu0
          %v2435 = vadd.f32 %v2369, %v2434
          %v2436 = vand.u32 %v2129, 4294901760
          %2437 = vmatmul.f32.gmra.mxu0 %v2436
          %v2438 = vpop.f32.mrf.mxu0
          %v2439 = vadd.f32 %v2375, %v2438
          %v2440 = vand.u32 %v2132, 4294901760
          %2441 = vmatmul.f32.gmra.mxu0 %v2440
          %v2442 = vpop.f32.mrf.mxu0
          %v2443 = vadd.f32 %v2381, %v2442
          %v2444 = vand.u32 %v2135, 4294901760
          %2445 = vmatmul.f32.gmra.mxu0 %v2444
          %v2446 = vpop.f32.mrf.mxu0
          %v2447 = vadd.f32 %v2387, %v2446
          %v2448 = vand.u32 %v2138, 4294901760
          %2449 = vmatmul.f32.gmra.mxu0 %v2448
          %v2450 = vpop.f32.mrf.mxu0
          %v2451 = vadd.f32 %v2393, %v2450
          %v2452 = vand.u32 %v2141, 4294901760
          %2453 = vmatmul.f32.gmra.mxu0 %v2452
          %v2454 = vpop.f32.mrf.mxu0
          %v2455 = vadd.f32 %v2399, %v2454
          %v2456 = vand.u32 %v2144, 4294901760
          %2457 = vmatmul.f32.gmra.mxu0 %v2456
          %v2458 = vpop.f32.mrf.mxu0
          %v2459 = vadd.f32 %v2405, %v2458
          %v2460 = vand.u32 %v2147, 4294901760
          %2461 = vmatmul.f32.gmra.mxu0 %v2460
          %v2462 = vpop.f32.mrf.mxu0
          %v2463 = vadd.f32 %v2411, %v2462
          %2464 = vdwg.mxu0
          %2465 = vmatpush.msra.mxu0 0.0
          %2466 = vmatpush.msra.mxu0 0.0
          %2467 = vmatpush.msra.mxu0 0.0
          %2468 = vmatpush.msra.mxu0 0.0
          %2469 = vmatpush.msra.mxu0 0.0
          %2470 = vmatpush.msra.mxu0 0.0
          %2471 = vmatpush.msra.mxu0 0.0
          %2472 = vmatpush.msra.mxu0 0.0
          %2473 = vmatpush.msra.mxu0 0.0
          %2474 = vmatpush.msra.mxu0 0.0
          %2475 = vmatpush.msra.mxu0 0.0
          %2476 = vmatpush.msra.mxu0 0.0
          %2477 = vmatpush.msra.mxu0 0.0
          %2478 = vmatpush.msra.mxu0 0.0
          %2479 = vmatpush.msra.mxu0 0.0
          %v2480 = vand.u32 %v2150, 4294901760
          %2481 = vmatpush.msra.mxu0 %v2480
          %v2482 = vand.u32 %v2126, 4294901760
          %2483 = vmatmul.f32.gmra.mxu0 %v2482
          %v2484 = vpop.f32.mrf.mxu0
          %v2485 = vadd.f32 %v2435, %v2484
          %v2486 = vand.u32 %v2129, 4294901760
          %2487 = vmatmul.f32.gmra.mxu0 %v2486
          %v2488 = vpop.f32.mrf.mxu0
          %v2489 = vadd.f32 %v2439, %v2488
          %v2490 = vand.u32 %v2132, 4294901760
          %2491 = vmatmul.f32.gmra.mxu0 %v2490
          %v2492 = vpop.f32.mrf.mxu0
          %v2493 = vadd.f32 %v2443, %v2492
          %v2494 = vand.u32 %v2135, 4294901760
          %2495 = vmatmul.f32.gmra.mxu0 %v2494
          %v2496 = vpop.f32.mrf.mxu0
          %v2497 = vadd.f32 %v2447, %v2496
          %v2498 = vand.u32 %v2138, 4294901760
          %2499 = vmatmul.f32.gmra.mxu0 %v2498
          %v2500 = vpop.f32.mrf.mxu0
          %v2501 = vadd.f32 %v2451, %v2500
          %v2502 = vand.u32 %v2141, 4294901760
          %2503 = vmatmul.f32.gmra.mxu0 %v2502
          %v2504 = vpop.f32.mrf.mxu0
          %v2505 = vadd.f32 %v2455, %v2504
          %v2506 = vand.u32 %v2144, 4294901760
          %2507 = vmatmul.f32.gmra.mxu0 %v2506
          %v2508 = vpop.f32.mrf.mxu0
          %v2509 = vadd.f32 %v2459, %v2508
          %v2510 = vand.u32 %v2147, 4294901760
          %2511 = vmatmul.f32.gmra.mxu0 %v2510
          %v2512 = vpop.f32.mrf.mxu0
          %v2513 = vadd.f32 %v2463, %v2512
          %2514 = vdwg.mxu0
          %v2515 = vadd.f32 %v2109, %v2485
          %v2516 = vadd.f32 %v2110, %v2489
          %v2517 = vadd.f32 %v2111, %v2493
          %v2518 = vadd.f32 %v2112, %v2497
          %v2519 = vadd.f32 %v2113, %v2501
          %v2520 = vadd.f32 %v2114, %v2505
          %v2521 = vadd.f32 %v2115, %v2509
          %v2522 = vadd.f32 %v2116, %v2513
          %v2523 = vld [vmem:[%s871 + $0x1] sm:$0xff]
          %v2524 = vld [vmem:[%s871 + $0x11] sm:$0xff]
          %v2525 = vld [vmem:[%s871 + $0x21] sm:$0xff]
          %v2526 = vld [vmem:[%s871 + $0x31] sm:$0xff]
          %v2527 = vld [vmem:[%s871 + $0x41] sm:$0xff]
          %v2528 = vld [vmem:[%s871 + $0x51] sm:$0xff]
          %v2529 = vld [vmem:[%s871 + $0x61] sm:$0xff]
          %v2530 = vld [vmem:[%s871 + $0x71] sm:$0xff]
          %v2532 = vsel %vm872, %v2523, 0
          %v2535 = vsel %vm872, %v2524, 0
          %v2538 = vsel %vm872, %v2525, 0
          %v2541 = vsel %vm872, %v2526, 0
          %v2544 = vsel %vm872, %v2527, 0
          %v2547 = vsel %vm872, %v2528, 0
          %v2550 = vsel %vm872, %v2529, 0
          %v2553 = vsel %vm872, %v2530, 0
          %v2556 = vsel %vm930, %v885, 0
          %2558 = vmatpush.msra.mxu0 0.0
          %2559 = vmatpush.msra.mxu0 0.0
          %2560 = vmatpush.msra.mxu0 0.0
          %2561 = vmatpush.msra.mxu0 0.0
          %2562 = vmatpush.msra.mxu0 0.0
          %2563 = vmatpush.msra.mxu0 0.0
          %2564 = vmatpush.msra.mxu0 0.0
          %2565 = vmatpush.msra.mxu0 0.0
          %2566 = vmatpush.msra.mxu0 0.0
          %2567 = vmatpush.msra.mxu0 0.0
          %2568 = vmatpush.msra.mxu0 0.0
          %2569 = vmatpush.msra.mxu0 0.0
          %2570 = vmatpush.msra.mxu0 0.0
          %2571 = vmatpush.msra.mxu0 0.0
          %2572 = vmatpush.msra.mxu0 0.0
          %v2573 = vand.u32 %v2556, 4294901760
          %2574 = vmatpush.msra.mxu0 %v2573
          %v2575 = vand.u32 %v2532, 4294901760
          %v2576 = vsub.f32 %v2532, %v2575
          %v2577 = vand.u32 %v2576, 4294901760
          %v2578 = vsub.f32 %v2576, %v2577
          %v2579 = vand.u32 %v2578, 4294901760
          %2580 = vmatmul.f32.gmra.mxu0 %v2579
          %v2581 = vpop.f32.mrf.mxu0
          %v2582 = vadd.f32 0.0, %v2581
          %v2583 = vand.u32 %v2535, 4294901760
          %v2584 = vsub.f32 %v2535, %v2583
          %v2585 = vand.u32 %v2584, 4294901760
          %v2586 = vsub.f32 %v2584, %v2585
          %v2587 = vand.u32 %v2586, 4294901760
          %2588 = vmatmul.f32.gmra.mxu0 %v2587
          %v2589 = vpop.f32.mrf.mxu0
          %v2590 = vadd.f32 0.0, %v2589
          %v2591 = vand.u32 %v2538, 4294901760
          %v2592 = vsub.f32 %v2538, %v2591
          %v2593 = vand.u32 %v2592, 4294901760
          %v2594 = vsub.f32 %v2592, %v2593
          %v2595 = vand.u32 %v2594, 4294901760
          %2596 = vmatmul.f32.gmra.mxu0 %v2595
          %v2597 = vpop.f32.mrf.mxu0
          %v2598 = vadd.f32 0.0, %v2597
          %v2599 = vand.u32 %v2541, 4294901760
          %v2600 = vsub.f32 %v2541, %v2599
          %v2601 = vand.u32 %v2600, 4294901760
          %v2602 = vsub.f32 %v2600, %v2601
          %v2603 = vand.u32 %v2602, 4294901760
          %2604 = vmatmul.f32.gmra.mxu0 %v2603
          %v2605 = vpop.f32.mrf.mxu0
          %v2606 = vadd.f32 0.0, %v2605
          %v2607 = vand.u32 %v2544, 4294901760
          %v2608 = vsub.f32 %v2544, %v2607
          %v2609 = vand.u32 %v2608, 4294901760
          %v2610 = vsub.f32 %v2608, %v2609
          %v2611 = vand.u32 %v2610, 4294901760
          %2612 = vmatmul.f32.gmra.mxu0 %v2611
          %v2613 = vpop.f32.mrf.mxu0
          %v2614 = vadd.f32 0.0, %v2613
          %v2615 = vand.u32 %v2547, 4294901760
          %v2616 = vsub.f32 %v2547, %v2615
          %v2617 = vand.u32 %v2616, 4294901760
          %v2618 = vsub.f32 %v2616, %v2617
          %v2619 = vand.u32 %v2618, 4294901760
          %2620 = vmatmul.f32.gmra.mxu0 %v2619
          %v2621 = vpop.f32.mrf.mxu0
          %v2622 = vadd.f32 0.0, %v2621
          %v2623 = vand.u32 %v2550, 4294901760
          %v2624 = vsub.f32 %v2550, %v2623
          %v2625 = vand.u32 %v2624, 4294901760
          %v2626 = vsub.f32 %v2624, %v2625
          %v2627 = vand.u32 %v2626, 4294901760
          %2628 = vmatmul.f32.gmra.mxu0 %v2627
          %v2629 = vpop.f32.mrf.mxu0
          %v2630 = vadd.f32 0.0, %v2629
          %v2631 = vand.u32 %v2553, 4294901760
          %v2632 = vsub.f32 %v2553, %v2631
          %v2633 = vand.u32 %v2632, 4294901760
          %v2634 = vsub.f32 %v2632, %v2633
          %v2635 = vand.u32 %v2634, 4294901760
          %2636 = vmatmul.f32.gmra.mxu0 %v2635
          %v2637 = vpop.f32.mrf.mxu0
          %v2638 = vadd.f32 0.0, %v2637
          %2639 = vdwg.mxu0
          %2640 = vmatpush.msra.mxu0 0.0
          %2641 = vmatpush.msra.mxu0 0.0
          %2642 = vmatpush.msra.mxu0 0.0
          %2643 = vmatpush.msra.mxu0 0.0
          %2644 = vmatpush.msra.mxu0 0.0
          %2645 = vmatpush.msra.mxu0 0.0
          %2646 = vmatpush.msra.mxu0 0.0
          %2647 = vmatpush.msra.mxu0 0.0
          %2648 = vmatpush.msra.mxu0 0.0
          %2649 = vmatpush.msra.mxu0 0.0
          %2650 = vmatpush.msra.mxu0 0.0
          %2651 = vmatpush.msra.mxu0 0.0
          %2652 = vmatpush.msra.mxu0 0.0
          %2653 = vmatpush.msra.mxu0 0.0
          %2654 = vmatpush.msra.mxu0 0.0
          %v2655 = vand.u32 %v2556, 4294901760
          %v2656 = vsub.f32 %v2556, %v2655
          %v2657 = vand.u32 %v2656, 4294901760
          %v2658 = vsub.f32 %v2656, %v2657
          %v2659 = vand.u32 %v2658, 4294901760
          %2660 = vmatpush.msra.mxu0 %v2659
          %v2661 = vand.u32 %v2532, 4294901760
          %2662 = vmatmul.f32.gmra.mxu0 %v2661
          %v2663 = vpop.f32.mrf.mxu0
          %v2664 = vadd.f32 %v2582, %v2663
          %v2665 = vand.u32 %v2535, 4294901760
          %2666 = vmatmul.f32.gmra.mxu0 %v2665
          %v2667 = vpop.f32.mrf.mxu0
          %v2668 = vadd.f32 %v2590, %v2667
          %v2669 = vand.u32 %v2538, 4294901760
          %2670 = vmatmul.f32.gmra.mxu0 %v2669
          %v2671 = vpop.f32.mrf.mxu0
          %v2672 = vadd.f32 %v2598, %v2671
          %v2673 = vand.u32 %v2541, 4294901760
          %2674 = vmatmul.f32.gmra.mxu0 %v2673
          %v2675 = vpop.f32.mrf.mxu0
          %v2676 = vadd.f32 %v2606, %v2675
          %v2677 = vand.u32 %v2544, 4294901760
          %2678 = vmatmul.f32.gmra.mxu0 %v2677
          %v2679 = vpop.f32.mrf.mxu0
          %v2680 = vadd.f32 %v2614, %v2679
          %v2681 = vand.u32 %v2547, 4294901760
          %2682 = vmatmul.f32.gmra.mxu0 %v2681
          %v2683 = vpop.f32.mrf.mxu0
          %v2684 = vadd.f32 %v2622, %v2683
          %v2685 = vand.u32 %v2550, 4294901760
          %2686 = vmatmul.f32.gmra.mxu0 %v2685
          %v2687 = vpop.f32.mrf.mxu0
          %v2688 = vadd.f32 %v2630, %v2687
          %v2689 = vand.u32 %v2553, 4294901760
          %2690 = vmatmul.f32.gmra.mxu0 %v2689
          %v2691 = vpop.f32.mrf.mxu0
          %v2692 = vadd.f32 %v2638, %v2691
          %2693 = vdwg.mxu0
          %2694 = vmatpush.msra.mxu0 0.0
          %2695 = vmatpush.msra.mxu0 0.0
          %2696 = vmatpush.msra.mxu0 0.0
          %2697 = vmatpush.msra.mxu0 0.0
          %2698 = vmatpush.msra.mxu0 0.0
          %2699 = vmatpush.msra.mxu0 0.0
          %2700 = vmatpush.msra.mxu0 0.0
          %2701 = vmatpush.msra.mxu0 0.0
          %2702 = vmatpush.msra.mxu0 0.0
          %2703 = vmatpush.msra.mxu0 0.0
          %2704 = vmatpush.msra.mxu0 0.0
          %2705 = vmatpush.msra.mxu0 0.0
          %2706 = vmatpush.msra.mxu0 0.0
          %2707 = vmatpush.msra.mxu0 0.0
          %2708 = vmatpush.msra.mxu0 0.0
          %v2709 = vand.u32 %v2556, 4294901760
          %v2710 = vsub.f32 %v2556, %v2709
          %2711 = vmatpush.msra.mxu0 %v2710
          %v2712 = vand.u32 %v2532, 4294901760
          %v2713 = vsub.f32 %v2532, %v2712
          %2714 = vmatmul.f32.gmra.mxu0 %v2713
          %v2715 = vpop.f32.mrf.mxu0
          %v2716 = vadd.f32 %v2664, %v2715
          %v2717 = vand.u32 %v2535, 4294901760
          %v2718 = vsub.f32 %v2535, %v2717
          %2719 = vmatmul.f32.gmra.mxu0 %v2718
          %v2720 = vpop.f32.mrf.mxu0
          %v2721 = vadd.f32 %v2668, %v2720
          %v2722 = vand.u32 %v2538, 4294901760
          %v2723 = vsub.f32 %v2538, %v2722
          %2724 = vmatmul.f32.gmra.mxu0 %v2723
          %v2725 = vpop.f32.mrf.mxu0
          %v2726 = vadd.f32 %v2672, %v2725
          %v2727 = vand.u32 %v2541, 4294901760
          %v2728 = vsub.f32 %v2541, %v2727
          %2729 = vmatmul.f32.gmra.mxu0 %v2728
          %v2730 = vpop.f32.mrf.mxu0
          %v2731 = vadd.f32 %v2676, %v2730
          %v2732 = vand.u32 %v2544, 4294901760
          %v2733 = vsub.f32 %v2544, %v2732
          %2734 = vmatmul.f32.gmra.mxu0 %v2733
          %v2735 = vpop.f32.mrf.mxu0
          %v2736 = vadd.f32 %v2680, %v2735
          %v2737 = vand.u32 %v2547, 4294901760
          %v2738 = vsub.f32 %v2547, %v2737
          %2739 = vmatmul.f32.gmra.mxu0 %v2738
          %v2740 = vpop.f32.mrf.mxu0
          %v2741 = vadd.f32 %v2684, %v2740
          %v2742 = vand.u32 %v2550, 4294901760
          %v2743 = vsub.f32 %v2550, %v2742
          %2744 = vmatmul.f32.gmra.mxu0 %v2743
          %v2745 = vpop.f32.mrf.mxu0
          %v2746 = vadd.f32 %v2688, %v2745
          %v2747 = vand.u32 %v2553, 4294901760
          %v2748 = vsub.f32 %v2553, %v2747
          %2749 = vmatmul.f32.gmra.mxu0 %v2748
          %v2750 = vpop.f32.mrf.mxu0
          %v2751 = vadd.f32 %v2692, %v2750
          %2752 = vdwg.mxu0
          %2753 = vmatpush.msra.mxu0 0.0
          %2754 = vmatpush.msra.mxu0 0.0
          %2755 = vmatpush.msra.mxu0 0.0
          %2756 = vmatpush.msra.mxu0 0.0
          %2757 = vmatpush.msra.mxu0 0.0
          %2758 = vmatpush.msra.mxu0 0.0
          %2759 = vmatpush.msra.mxu0 0.0
          %2760 = vmatpush.msra.mxu0 0.0
          %2761 = vmatpush.msra.mxu0 0.0
          %2762 = vmatpush.msra.mxu0 0.0
          %2763 = vmatpush.msra.mxu0 0.0
          %2764 = vmatpush.msra.mxu0 0.0
          %2765 = vmatpush.msra.mxu0 0.0
          %2766 = vmatpush.msra.mxu0 0.0
          %2767 = vmatpush.msra.mxu0 0.0
          %v2768 = vand.u32 %v2556, 4294901760
          %2769 = vmatpush.msra.mxu0 %v2768
          %v2770 = vand.u32 %v2532, 4294901760
          %v2771 = vsub.f32 %v2532, %v2770
          %v2772 = vand.u32 %v2771, 4294901760
          %2773 = vmatmul.f32.gmra.mxu0 %v2772
          %v2774 = vpop.f32.mrf.mxu0
          %v2775 = vadd.f32 %v2716, %v2774
          %v2776 = vand.u32 %v2535, 4294901760
          %v2777 = vsub.f32 %v2535, %v2776
          %v2778 = vand.u32 %v2777, 4294901760
          %2779 = vmatmul.f32.gmra.mxu0 %v2778
          %v2780 = vpop.f32.mrf.mxu0
          %v2781 = vadd.f32 %v2721, %v2780
          %v2782 = vand.u32 %v2538, 4294901760
          %v2783 = vsub.f32 %v2538, %v2782
          %v2784 = vand.u32 %v2783, 4294901760
          %2785 = vmatmul.f32.gmra.mxu0 %v2784
          %v2786 = vpop.f32.mrf.mxu0
          %v2787 = vadd.f32 %v2726, %v2786
          %v2788 = vand.u32 %v2541, 4294901760
          %v2789 = vsub.f32 %v2541, %v2788
          %v2790 = vand.u32 %v2789, 4294901760
          %2791 = vmatmul.f32.gmra.mxu0 %v2790
          %v2792 = vpop.f32.mrf.mxu0
          %v2793 = vadd.f32 %v2731, %v2792
          %v2794 = vand.u32 %v2544, 4294901760
          %v2795 = vsub.f32 %v2544, %v2794
          %v2796 = vand.u32 %v2795, 4294901760
          %2797 = vmatmul.f32.gmra.mxu0 %v2796
          %v2798 = vpop.f32.mrf.mxu0
          %v2799 = vadd.f32 %v2736, %v2798
          %v2800 = vand.u32 %v2547, 4294901760
          %v2801 = vsub.f32 %v2547, %v2800
          %v2802 = vand.u32 %v2801, 4294901760
          %2803 = vmatmul.f32.gmra.mxu0 %v2802
          %v2804 = vpop.f32.mrf.mxu0
          %v2805 = vadd.f32 %v2741, %v2804
          %v2806 = vand.u32 %v2550, 4294901760
          %v2807 = vsub.f32 %v2550, %v2806
          %v2808 = vand.u32 %v2807, 4294901760
          %2809 = vmatmul.f32.gmra.mxu0 %v2808
          %v2810 = vpop.f32.mrf.mxu0
          %v2811 = vadd.f32 %v2746, %v2810
          %v2812 = vand.u32 %v2553, 4294901760
          %v2813 = vsub.f32 %v2553, %v2812
          %v2814 = vand.u32 %v2813, 4294901760
          %2815 = vmatmul.f32.gmra.mxu0 %v2814
          %v2816 = vpop.f32.mrf.mxu0
          %v2817 = vadd.f32 %v2751, %v2816
          %2818 = vdwg.mxu0
          %2819 = vmatpush.msra.mxu0 0.0
          %2820 = vmatpush.msra.mxu0 0.0
          %2821 = vmatpush.msra.mxu0 0.0
          %2822 = vmatpush.msra.mxu0 0.0
          %2823 = vmatpush.msra.mxu0 0.0
          %2824 = vmatpush.msra.mxu0 0.0
          %2825 = vmatpush.msra.mxu0 0.0
          %2826 = vmatpush.msra.mxu0 0.0
          %2827 = vmatpush.msra.mxu0 0.0
          %2828 = vmatpush.msra.mxu0 0.0
          %2829 = vmatpush.msra.mxu0 0.0
          %2830 = vmatpush.msra.mxu0 0.0
          %2831 = vmatpush.msra.mxu0 0.0
          %2832 = vmatpush.msra.mxu0 0.0
          %2833 = vmatpush.msra.mxu0 0.0
          %v2834 = vand.u32 %v2556, 4294901760
          %v2835 = vsub.f32 %v2556, %v2834
          %v2836 = vand.u32 %v2835, 4294901760
          %2837 = vmatpush.msra.mxu0 %v2836
          %v2838 = vand.u32 %v2532, 4294901760
          %2839 = vmatmul.f32.gmra.mxu0 %v2838
          %v2840 = vpop.f32.mrf.mxu0
          %v2841 = vadd.f32 %v2775, %v2840
          %v2842 = vand.u32 %v2535, 4294901760
          %2843 = vmatmul.f32.gmra.mxu0 %v2842
          %v2844 = vpop.f32.mrf.mxu0
          %v2845 = vadd.f32 %v2781, %v2844
          %v2846 = vand.u32 %v2538, 4294901760
          %2847 = vmatmul.f32.gmra.mxu0 %v2846
          %v2848 = vpop.f32.mrf.mxu0
          %v2849 = vadd.f32 %v2787, %v2848
          %v2850 = vand.u32 %v2541, 4294901760
          %2851 = vmatmul.f32.gmra.mxu0 %v2850
          %v2852 = vpop.f32.mrf.mxu0
          %v2853 = vadd.f32 %v2793, %v2852
          %v2854 = vand.u32 %v2544, 4294901760
          %2855 = vmatmul.f32.gmra.mxu0 %v2854
          %v2856 = vpop.f32.mrf.mxu0
          %v2857 = vadd.f32 %v2799, %v2856
          %v2858 = vand.u32 %v2547, 4294901760
          %2859 = vmatmul.f32.gmra.mxu0 %v2858
          %v2860 = vpop.f32.mrf.mxu0
          %v2861 = vadd.f32 %v2805, %v2860
          %v2862 = vand.u32 %v2550, 4294901760
          %2863 = vmatmul.f32.gmra.mxu0 %v2862
          %v2864 = vpop.f32.mrf.mxu0
          %v2865 = vadd.f32 %v2811, %v2864
          %v2866 = vand.u32 %v2553, 4294901760
          %2867 = vmatmul.f32.gmra.mxu0 %v2866
          %v2868 = vpop.f32.mrf.mxu0
          %v2869 = vadd.f32 %v2817, %v2868
          %2870 = vdwg.mxu0
          %2871 = vmatpush.msra.mxu0 0.0
          %2872 = vmatpush.msra.mxu0 0.0
          %2873 = vmatpush.msra.mxu0 0.0
          %2874 = vmatpush.msra.mxu0 0.0
          %2875 = vmatpush.msra.mxu0 0.0
          %2876 = vmatpush.msra.mxu0 0.0
          %2877 = vmatpush.msra.mxu0 0.0
          %2878 = vmatpush.msra.mxu0 0.0
          %2879 = vmatpush.msra.mxu0 0.0
          %2880 = vmatpush.msra.mxu0 0.0
          %2881 = vmatpush.msra.mxu0 0.0
          %2882 = vmatpush.msra.mxu0 0.0
          %2883 = vmatpush.msra.mxu0 0.0
          %2884 = vmatpush.msra.mxu0 0.0
          %2885 = vmatpush.msra.mxu0 0.0
          %v2886 = vand.u32 %v2556, 4294901760
          %2887 = vmatpush.msra.mxu0 %v2886
          %v2888 = vand.u32 %v2532, 4294901760
          %2889 = vmatmul.f32.gmra.mxu0 %v2888
          %v2890 = vpop.f32.mrf.mxu0
          %v2891 = vadd.f32 %v2841, %v2890
          %v2892 = vand.u32 %v2535, 4294901760
          %2893 = vmatmul.f32.gmra.mxu0 %v2892
          %v2894 = vpop.f32.mrf.mxu0
          %v2895 = vadd.f32 %v2845, %v2894
          %v2896 = vand.u32 %v2538, 4294901760
          %2897 = vmatmul.f32.gmra.mxu0 %v2896
          %v2898 = vpop.f32.mrf.mxu0
          %v2899 = vadd.f32 %v2849, %v2898
          %v2900 = vand.u32 %v2541, 4294901760
          %2901 = vmatmul.f32.gmra.mxu0 %v2900
          %v2902 = vpop.f32.mrf.mxu0
          %v2903 = vadd.f32 %v2853, %v2902
          %v2904 = vand.u32 %v2544, 4294901760
          %2905 = vmatmul.f32.gmra.mxu0 %v2904
          %v2906 = vpop.f32.mrf.mxu0
          %v2907 = vadd.f32 %v2857, %v2906
          %v2908 = vand.u32 %v2547, 4294901760
          %2909 = vmatmul.f32.gmra.mxu0 %v2908
          %v2910 = vpop.f32.mrf.mxu0
          %v2911 = vadd.f32 %v2861, %v2910
          %v2912 = vand.u32 %v2550, 4294901760
          %2913 = vmatmul.f32.gmra.mxu0 %v2912
          %v2914 = vpop.f32.mrf.mxu0
          %v2915 = vadd.f32 %v2865, %v2914
          %v2916 = vand.u32 %v2553, 4294901760
          %2917 = vmatmul.f32.gmra.mxu0 %v2916
          %v2918 = vpop.f32.mrf.mxu0
          %v2919 = vadd.f32 %v2869, %v2918
          %2920 = vdwg.mxu0
          %v2921 = vadd.f32 %v2515, %v2891
          %v2922 = vadd.f32 %v2516, %v2895
          %v2923 = vadd.f32 %v2517, %v2899
          %v2924 = vadd.f32 %v2518, %v2903
          %v2925 = vadd.f32 %v2519, %v2907
          %v2926 = vadd.f32 %v2520, %v2911
          %v2927 = vadd.f32 %v2521, %v2915
          %v2928 = vadd.f32 %v2522, %v2919
          %v2929 = vld [vmem:[%s871 + $0x2] sm:$0xff]
          %v2930 = vld [vmem:[%s871 + $0x12] sm:$0xff]
          %v2931 = vld [vmem:[%s871 + $0x22] sm:$0xff]
          %v2932 = vld [vmem:[%s871 + $0x32] sm:$0xff]
          %v2933 = vld [vmem:[%s871 + $0x42] sm:$0xff]
          %v2934 = vld [vmem:[%s871 + $0x52] sm:$0xff]
          %v2935 = vld [vmem:[%s871 + $0x62] sm:$0xff]
          %v2936 = vld [vmem:[%s871 + $0x72] sm:$0xff]
          %v2938 = vsel %vm872, %v2929, 0
          %v2941 = vsel %vm872, %v2930, 0
          %v2944 = vsel %vm872, %v2931, 0
          %v2947 = vsel %vm872, %v2932, 0
          %v2950 = vsel %vm872, %v2933, 0
          %v2953 = vsel %vm872, %v2934, 0
          %v2956 = vsel %vm872, %v2935, 0
          %v2959 = vsel %vm872, %v2936, 0
          %v2962 = vsel %vm930, %v886, 0
          %2964 = vmatpush.msra.mxu0 0.0
          %2965 = vmatpush.msra.mxu0 0.0
          %2966 = vmatpush.msra.mxu0 0.0
          %2967 = vmatpush.msra.mxu0 0.0
          %2968 = vmatpush.msra.mxu0 0.0
          %2969 = vmatpush.msra.mxu0 0.0
          %2970 = vmatpush.msra.mxu0 0.0
          %2971 = vmatpush.msra.mxu0 0.0
          %2972 = vmatpush.msra.mxu0 0.0
          %2973 = vmatpush.msra.mxu0 0.0
          %2974 = vmatpush.msra.mxu0 0.0
          %2975 = vmatpush.msra.mxu0 0.0
          %2976 = vmatpush.msra.mxu0 0.0
          %2977 = vmatpush.msra.mxu0 0.0
          %2978 = vmatpush.msra.mxu0 0.0
          %v2979 = vand.u32 %v2962, 4294901760
          %2980 = vmatpush.msra.mxu0 %v2979
          %v2981 = vand.u32 %v2938, 4294901760
          %v2982 = vsub.f32 %v2938, %v2981
          %v2983 = vand.u32 %v2982, 4294901760
          %v2984 = vsub.f32 %v2982, %v2983
          %v2985 = vand.u32 %v2984, 4294901760
          %2986 = vmatmul.f32.gmra.mxu0 %v2985
          %v2987 = vpop.f32.mrf.mxu0
          %v2988 = vadd.f32 0.0, %v2987
          %v2989 = vand.u32 %v2941, 4294901760
          %v2990 = vsub.f32 %v2941, %v2989
          %v2991 = vand.u32 %v2990, 4294901760
          %v2992 = vsub.f32 %v2990, %v2991
          %v2993 = vand.u32 %v2992, 4294901760
          %2994 = vmatmul.f32.gmra.mxu0 %v2993
          %v2995 = vpop.f32.mrf.mxu0
          %v2996 = vadd.f32 0.0, %v2995
          %v2997 = vand.u32 %v2944, 4294901760
          %v2998 = vsub.f32 %v2944, %v2997
          %v2999 = vand.u32 %v2998, 4294901760
          %v3000 = vsub.f32 %v2998, %v2999
          %v3001 = vand.u32 %v3000, 4294901760
          %3002 = vmatmul.f32.gmra.mxu0 %v3001
          %v3003 = vpop.f32.mrf.mxu0
          %v3004 = vadd.f32 0.0, %v3003
          %v3005 = vand.u32 %v2947, 4294901760
          %v3006 = vsub.f32 %v2947, %v3005
          %v3007 = vand.u32 %v3006, 4294901760
          %v3008 = vsub.f32 %v3006, %v3007
          %v3009 = vand.u32 %v3008, 4294901760
          %3010 = vmatmul.f32.gmra.mxu0 %v3009
          %v3011 = vpop.f32.mrf.mxu0
          %v3012 = vadd.f32 0.0, %v3011
          %v3013 = vand.u32 %v2950, 4294901760
          %v3014 = vsub.f32 %v2950, %v3013
          %v3015 = vand.u32 %v3014, 4294901760
          %v3016 = vsub.f32 %v3014, %v3015
          %v3017 = vand.u32 %v3016, 4294901760
          %3018 = vmatmul.f32.gmra.mxu0 %v3017
          %v3019 = vpop.f32.mrf.mxu0
          %v3020 = vadd.f32 0.0, %v3019
          %v3021 = vand.u32 %v2953, 4294901760
          %v3022 = vsub.f32 %v2953, %v3021
          %v3023 = vand.u32 %v3022, 4294901760
          %v3024 = vsub.f32 %v3022, %v3023
          %v3025 = vand.u32 %v3024, 4294901760
          %3026 = vmatmul.f32.gmra.mxu0 %v3025
          %v3027 = vpop.f32.mrf.mxu0
          %v3028 = vadd.f32 0.0, %v3027
          %v3029 = vand.u32 %v2956, 4294901760
          %v3030 = vsub.f32 %v2956, %v3029
          %v3031 = vand.u32 %v3030, 4294901760
          %v3032 = vsub.f32 %v3030, %v3031
          %v3033 = vand.u32 %v3032, 4294901760
          %3034 = vmatmul.f32.gmra.mxu0 %v3033
          %v3035 = vpop.f32.mrf.mxu0
          %v3036 = vadd.f32 0.0, %v3035
          %v3037 = vand.u32 %v2959, 4294901760
          %v3038 = vsub.f32 %v2959, %v3037
          %v3039 = vand.u32 %v3038, 4294901760
          %v3040 = vsub.f32 %v3038, %v3039
          %v3041 = vand.u32 %v3040, 4294901760
          %3042 = vmatmul.f32.gmra.mxu0 %v3041
          %v3043 = vpop.f32.mrf.mxu0
          %v3044 = vadd.f32 0.0, %v3043
          %3045 = vdwg.mxu0
          %3046 = vmatpush.msra.mxu0 0.0
          %3047 = vmatpush.msra.mxu0 0.0
          %3048 = vmatpush.msra.mxu0 0.0
          %3049 = vmatpush.msra.mxu0 0.0
          %3050 = vmatpush.msra.mxu0 0.0
          %3051 = vmatpush.msra.mxu0 0.0
          %3052 = vmatpush.msra.mxu0 0.0
          %3053 = vmatpush.msra.mxu0 0.0
          %3054 = vmatpush.msra.mxu0 0.0
          %3055 = vmatpush.msra.mxu0 0.0
          %3056 = vmatpush.msra.mxu0 0.0
          %3057 = vmatpush.msra.mxu0 0.0
          %3058 = vmatpush.msra.mxu0 0.0
          %3059 = vmatpush.msra.mxu0 0.0
          %3060 = vmatpush.msra.mxu0 0.0
          %v3061 = vand.u32 %v2962, 4294901760
          %v3062 = vsub.f32 %v2962, %v3061
          %v3063 = vand.u32 %v3062, 4294901760
          %v3064 = vsub.f32 %v3062, %v3063
          %v3065 = vand.u32 %v3064, 4294901760
          %3066 = vmatpush.msra.mxu0 %v3065
          %v3067 = vand.u32 %v2938, 4294901760
          %3068 = vmatmul.f32.gmra.mxu0 %v3067
          %v3069 = vpop.f32.mrf.mxu0
          %v3070 = vadd.f32 %v2988, %v3069
          %v3071 = vand.u32 %v2941, 4294901760
          %3072 = vmatmul.f32.gmra.mxu0 %v3071
          %v3073 = vpop.f32.mrf.mxu0
          %v3074 = vadd.f32 %v2996, %v3073
          %v3075 = vand.u32 %v2944, 4294901760
          %3076 = vmatmul.f32.gmra.mxu0 %v3075
          %v3077 = vpop.f32.mrf.mxu0
          %v3078 = vadd.f32 %v3004, %v3077
          %v3079 = vand.u32 %v2947, 4294901760
          %3080 = vmatmul.f32.gmra.mxu0 %v3079
          %v3081 = vpop.f32.mrf.mxu0
          %v3082 = vadd.f32 %v3012, %v3081
          %v3083 = vand.u32 %v2950, 4294901760
          %3084 = vmatmul.f32.gmra.mxu0 %v3083
          %v3085 = vpop.f32.mrf.mxu0
          %v3086 = vadd.f32 %v3020, %v3085
          %v3087 = vand.u32 %v2953, 4294901760
          %3088 = vmatmul.f32.gmra.mxu0 %v3087
          %v3089 = vpop.f32.mrf.mxu0
          %v3090 = vadd.f32 %v3028, %v3089
          %v3091 = vand.u32 %v2956, 4294901760
          %3092 = vmatmul.f32.gmra.mxu0 %v3091
          %v3093 = vpop.f32.mrf.mxu0
          %v3094 = vadd.f32 %v3036, %v3093
          %v3095 = vand.u32 %v2959, 4294901760
          %3096 = vmatmul.f32.gmra.mxu0 %v3095
          %v3097 = vpop.f32.mrf.mxu0
          %v3098 = vadd.f32 %v3044, %v3097
          %3099 = vdwg.mxu0
          %3100 = vmatpush.msra.mxu0 0.0
          %3101 = vmatpush.msra.mxu0 0.0
          %3102 = vmatpush.msra.mxu0 0.0
          %3103 = vmatpush.msra.mxu0 0.0
          %3104 = vmatpush.msra.mxu0 0.0
          %3105 = vmatpush.msra.mxu0 0.0
          %3106 = vmatpush.msra.mxu0 0.0
          %3107 = vmatpush.msra.mxu0 0.0
          %3108 = vmatpush.msra.mxu0 0.0
          %3109 = vmatpush.msra.mxu0 0.0
          %3110 = vmatpush.msra.mxu0 0.0
          %3111 = vmatpush.msra.mxu0 0.0
          %3112 = vmatpush.msra.mxu0 0.0
          %3113 = vmatpush.msra.mxu0 0.0
          %3114 = vmatpush.msra.mxu0 0.0
          %v3115 = vand.u32 %v2962, 4294901760
          %v3116 = vsub.f32 %v2962, %v3115
          %3117 = vmatpush.msra.mxu0 %v3116
          %v3118 = vand.u32 %v2938, 4294901760
          %v3119 = vsub.f32 %v2938, %v3118
          %3120 = vmatmul.f32.gmra.mxu0 %v3119
          %v3121 = vpop.f32.mrf.mxu0
          %v3122 = vadd.f32 %v3070, %v3121
          %v3123 = vand.u32 %v2941, 4294901760
          %v3124 = vsub.f32 %v2941, %v3123
          %3125 = vmatmul.f32.gmra.mxu0 %v3124
          %v3126 = vpop.f32.mrf.mxu0
          %v3127 = vadd.f32 %v3074, %v3126
          %v3128 = vand.u32 %v2944, 4294901760
          %v3129 = vsub.f32 %v2944, %v3128
          %3130 = vmatmul.f32.gmra.mxu0 %v3129
          %v3131 = vpop.f32.mrf.mxu0
          %v3132 = vadd.f32 %v3078, %v3131
          %v3133 = vand.u32 %v2947, 4294901760
          %v3134 = vsub.f32 %v2947, %v3133
          %3135 = vmatmul.f32.gmra.mxu0 %v3134
          %v3136 = vpop.f32.mrf.mxu0
          %v3137 = vadd.f32 %v3082, %v3136
          %v3138 = vand.u32 %v2950, 4294901760
          %v3139 = vsub.f32 %v2950, %v3138
          %3140 = vmatmul.f32.gmra.mxu0 %v3139
          %v3141 = vpop.f32.mrf.mxu0
          %v3142 = vadd.f32 %v3086, %v3141
          %v3143 = vand.u32 %v2953, 4294901760
          %v3144 = vsub.f32 %v2953, %v3143
          %3145 = vmatmul.f32.gmra.mxu0 %v3144
          %v3146 = vpop.f32.mrf.mxu0
          %v3147 = vadd.f32 %v3090, %v3146
          %v3148 = vand.u32 %v2956, 4294901760
          %v3149 = vsub.f32 %v2956, %v3148
          %3150 = vmatmul.f32.gmra.mxu0 %v3149
          %v3151 = vpop.f32.mrf.mxu0
          %v3152 = vadd.f32 %v3094, %v3151
          %v3153 = vand.u32 %v2959, 4294901760
          %v3154 = vsub.f32 %v2959, %v3153
          %3155 = vmatmul.f32.gmra.mxu0 %v3154
          %v3156 = vpop.f32.mrf.mxu0
          %v3157 = vadd.f32 %v3098, %v3156
          %3158 = vdwg.mxu0
          %3159 = vmatpush.msra.mxu0 0.0
          %3160 = vmatpush.msra.mxu0 0.0
          %3161 = vmatpush.msra.mxu0 0.0
          %3162 = vmatpush.msra.mxu0 0.0
          %3163 = vmatpush.msra.mxu0 0.0
          %3164 = vmatpush.msra.mxu0 0.0
          %3165 = vmatpush.msra.mxu0 0.0
          %3166 = vmatpush.msra.mxu0 0.0
          %3167 = vmatpush.msra.mxu0 0.0
          %3168 = vmatpush.msra.mxu0 0.0
          %3169 = vmatpush.msra.mxu0 0.0
          %3170 = vmatpush.msra.mxu0 0.0
          %3171 = vmatpush.msra.mxu0 0.0
          %3172 = vmatpush.msra.mxu0 0.0
          %3173 = vmatpush.msra.mxu0 0.0
          %v3174 = vand.u32 %v2962, 4294901760
          %3175 = vmatpush.msra.mxu0 %v3174
          %v3176 = vand.u32 %v2938, 4294901760
          %v3177 = vsub.f32 %v2938, %v3176
          %v3178 = vand.u32 %v3177, 4294901760
          %3179 = vmatmul.f32.gmra.mxu0 %v3178
          %v3180 = vpop.f32.mrf.mxu0
          %v3181 = vadd.f32 %v3122, %v3180
          %v3182 = vand.u32 %v2941, 4294901760
          %v3183 = vsub.f32 %v2941, %v3182
          %v3184 = vand.u32 %v3183, 4294901760
          %3185 = vmatmul.f32.gmra.mxu0 %v3184
          %v3186 = vpop.f32.mrf.mxu0
          %v3187 = vadd.f32 %v3127, %v3186
          %v3188 = vand.u32 %v2944, 4294901760
          %v3189 = vsub.f32 %v2944, %v3188
          %v3190 = vand.u32 %v3189, 4294901760
          %3191 = vmatmul.f32.gmra.mxu0 %v3190
          %v3192 = vpop.f32.mrf.mxu0
          %v3193 = vadd.f32 %v3132, %v3192
          %v3194 = vand.u32 %v2947, 4294901760
          %v3195 = vsub.f32 %v2947, %v3194
          %v3196 = vand.u32 %v3195, 4294901760
          %3197 = vmatmul.f32.gmra.mxu0 %v3196
          %v3198 = vpop.f32.mrf.mxu0
          %v3199 = vadd.f32 %v3137, %v3198
          %v3200 = vand.u32 %v2950, 4294901760
          %v3201 = vsub.f32 %v2950, %v3200
          %v3202 = vand.u32 %v3201, 4294901760
          %3203 = vmatmul.f32.gmra.mxu0 %v3202
          %v3204 = vpop.f32.mrf.mxu0
          %v3205 = vadd.f32 %v3142, %v3204
          %v3206 = vand.u32 %v2953, 4294901760
          %v3207 = vsub.f32 %v2953, %v3206
          %v3208 = vand.u32 %v3207, 4294901760
          %3209 = vmatmul.f32.gmra.mxu0 %v3208
          %v3210 = vpop.f32.mrf.mxu0
          %v3211 = vadd.f32 %v3147, %v3210
          %v3212 = vand.u32 %v2956, 4294901760
          %v3213 = vsub.f32 %v2956, %v3212
          %v3214 = vand.u32 %v3213, 4294901760
          %3215 = vmatmul.f32.gmra.mxu0 %v3214
          %v3216 = vpop.f32.mrf.mxu0
          %v3217 = vadd.f32 %v3152, %v3216
          %v3218 = vand.u32 %v2959, 4294901760
          %v3219 = vsub.f32 %v2959, %v3218
          %v3220 = vand.u32 %v3219, 4294901760
          %3221 = vmatmul.f32.gmra.mxu0 %v3220
          %v3222 = vpop.f32.mrf.mxu0
          %v3223 = vadd.f32 %v3157, %v3222
          %3224 = vdwg.mxu0
          %3225 = vmatpush.msra.mxu0 0.0
          %3226 = vmatpush.msra.mxu0 0.0
          %3227 = vmatpush.msra.mxu0 0.0
          %3228 = vmatpush.msra.mxu0 0.0
          %3229 = vmatpush.msra.mxu0 0.0
          %3230 = vmatpush.msra.mxu0 0.0
          %3231 = vmatpush.msra.mxu0 0.0
          %3232 = vmatpush.msra.mxu0 0.0
          %3233 = vmatpush.msra.mxu0 0.0
          %3234 = vmatpush.msra.mxu0 0.0
          %3235 = vmatpush.msra.mxu0 0.0
          %3236 = vmatpush.msra.mxu0 0.0
          %3237 = vmatpush.msra.mxu0 0.0
          %3238 = vmatpush.msra.mxu0 0.0
          %3239 = vmatpush.msra.mxu0 0.0
          %v3240 = vand.u32 %v2962, 4294901760
          %v3241 = vsub.f32 %v2962, %v3240
          %v3242 = vand.u32 %v3241, 4294901760
          %3243 = vmatpush.msra.mxu0 %v3242
          %v3244 = vand.u32 %v2938, 4294901760
          %3245 = vmatmul.f32.gmra.mxu0 %v3244
          %v3246 = vpop.f32.mrf.mxu0
          %v3247 = vadd.f32 %v3181, %v3246
          %v3248 = vand.u32 %v2941, 4294901760
          %3249 = vmatmul.f32.gmra.mxu0 %v3248
          %v3250 = vpop.f32.mrf.mxu0
          %v3251 = vadd.f32 %v3187, %v3250
          %v3252 = vand.u32 %v2944, 4294901760
          %3253 = vmatmul.f32.gmra.mxu0 %v3252
          %v3254 = vpop.f32.mrf.mxu0
          %v3255 = vadd.f32 %v3193, %v3254
          %v3256 = vand.u32 %v2947, 4294901760
          %3257 = vmatmul.f32.gmra.mxu0 %v3256
          %v3258 = vpop.f32.mrf.mxu0
          %v3259 = vadd.f32 %v3199, %v3258
          %v3260 = vand.u32 %v2950, 4294901760
          %3261 = vmatmul.f32.gmra.mxu0 %v3260
          %v3262 = vpop.f32.mrf.mxu0
          %v3263 = vadd.f32 %v3205, %v3262
          %v3264 = vand.u32 %v2953, 4294901760
          %3265 = vmatmul.f32.gmra.mxu0 %v3264
          %v3266 = vpop.f32.mrf.mxu0
          %v3267 = vadd.f32 %v3211, %v3266
          %v3268 = vand.u32 %v2956, 4294901760
          %3269 = vmatmul.f32.gmra.mxu0 %v3268
          %v3270 = vpop.f32.mrf.mxu0
          %v3271 = vadd.f32 %v3217, %v3270
          %v3272 = vand.u32 %v2959, 4294901760
          %3273 = vmatmul.f32.gmra.mxu0 %v3272
          %v3274 = vpop.f32.mrf.mxu0
          %v3275 = vadd.f32 %v3223, %v3274
          %3276 = vdwg.mxu0
          %3277 = vmatpush.msra.mxu0 0.0
          %3278 = vmatpush.msra.mxu0 0.0
          %3279 = vmatpush.msra.mxu0 0.0
          %3280 = vmatpush.msra.mxu0 0.0
          %3281 = vmatpush.msra.mxu0 0.0
          %3282 = vmatpush.msra.mxu0 0.0
          %3283 = vmatpush.msra.mxu0 0.0
          %3284 = vmatpush.msra.mxu0 0.0
          %3285 = vmatpush.msra.mxu0 0.0
          %3286 = vmatpush.msra.mxu0 0.0
          %3287 = vmatpush.msra.mxu0 0.0
          %3288 = vmatpush.msra.mxu0 0.0
          %3289 = vmatpush.msra.mxu0 0.0
          %3290 = vmatpush.msra.mxu0 0.0
          %3291 = vmatpush.msra.mxu0 0.0
          %v3292 = vand.u32 %v2962, 4294901760
          %3293 = vmatpush.msra.mxu0 %v3292
          %v3294 = vand.u32 %v2938, 4294901760
          %3295 = vmatmul.f32.gmra.mxu0 %v3294
          %v3296 = vpop.f32.mrf.mxu0
          %v3297 = vadd.f32 %v3247, %v3296
          %v3298 = vand.u32 %v2941, 4294901760
          %3299 = vmatmul.f32.gmra.mxu0 %v3298
          %v3300 = vpop.f32.mrf.mxu0
          %v3301 = vadd.f32 %v3251, %v3300
          %v3302 = vand.u32 %v2944, 4294901760
          %3303 = vmatmul.f32.gmra.mxu0 %v3302
          %v3304 = vpop.f32.mrf.mxu0
          %v3305 = vadd.f32 %v3255, %v3304
          %v3306 = vand.u32 %v2947, 4294901760
          %3307 = vmatmul.f32.gmra.mxu0 %v3306
          %v3308 = vpop.f32.mrf.mxu0
          %v3309 = vadd.f32 %v3259, %v3308
          %v3310 = vand.u32 %v2950, 4294901760
          %3311 = vmatmul.f32.gmra.mxu0 %v3310
          %v3312 = vpop.f32.mrf.mxu0
          %v3313 = vadd.f32 %v3263, %v3312
          %v3314 = vand.u32 %v2953, 4294901760
          %3315 = vmatmul.f32.gmra.mxu0 %v3314
          %v3316 = vpop.f32.mrf.mxu0
          %v3317 = vadd.f32 %v3267, %v3316
          %v3318 = vand.u32 %v2956, 4294901760
          %3319 = vmatmul.f32.gmra.mxu0 %v3318
          %v3320 = vpop.f32.mrf.mxu0
          %v3321 = vadd.f32 %v3271, %v3320
          %v3322 = vand.u32 %v2959, 4294901760
          %3323 = vmatmul.f32.gmra.mxu0 %v3322
          %v3324 = vpop.f32.mrf.mxu0
          %v3325 = vadd.f32 %v3275, %v3324
          %3326 = vdwg.mxu0
          %v3327 = vadd.f32 %v2921, %v3297
          %v3328 = vadd.f32 %v2922, %v3301
          %v3329 = vadd.f32 %v2923, %v3305
          %v3330 = vadd.f32 %v2924, %v3309
          %v3331 = vadd.f32 %v2925, %v3313
          %v3332 = vadd.f32 %v2926, %v3317
          %v3333 = vadd.f32 %v2927, %v3321
          %v3334 = vadd.f32 %v2928, %v3325
          %s3335 = scalar_lea.vmem [#allocation3], 32
          %v3336 = vld [vmem:[%s3335] sm:$0xff]
          %v3337 = vld [vmem:[%s3335 + $0x10] sm:$0xff]
          %v3338 = vld [vmem:[%s3335 + $0x20] sm:$0xff]
          %v3339 = vld [vmem:[%s3335 + $0x30] sm:$0xff]
          %v3340 = vld [vmem:[%s3335 + $0x40] sm:$0xff]
          %v3341 = vld [vmem:[%s3335 + $0x50] sm:$0xff]
          %v3342 = vld [vmem:[%s3335 + $0x60] sm:$0xff]
          %v3343 = vld [vmem:[%s3335 + $0x70] sm:$0xff]
          %v3345 = vsel %vm872, %v3336, 0
          %v3348 = vsel %vm872, %v3337, 0
          %v3351 = vsel %vm872, %v3338, 0
          %v3354 = vsel %vm872, %v3339, 0
          %v3357 = vsel %vm872, %v3340, 0
          %v3360 = vsel %vm872, %v3341, 0
          %v3363 = vsel %vm872, %v3342, 0
          %v3366 = vsel %vm872, %v3343, 0
          %v3369 = vsel %vm930, %v887, 0
          %3371 = vmatpush.msra.mxu0 0.0
          %3372 = vmatpush.msra.mxu0 0.0
          %3373 = vmatpush.msra.mxu0 0.0
          %3374 = vmatpush.msra.mxu0 0.0
          %3375 = vmatpush.msra.mxu0 0.0
          %3376 = vmatpush.msra.mxu0 0.0
          %3377 = vmatpush.msra.mxu0 0.0
          %3378 = vmatpush.msra.mxu0 0.0
          %3379 = vmatpush.msra.mxu0 0.0
          %3380 = vmatpush.msra.mxu0 0.0
          %3381 = vmatpush.msra.mxu0 0.0
          %3382 = vmatpush.msra.mxu0 0.0
          %3383 = vmatpush.msra.mxu0 0.0
          %3384 = vmatpush.msra.mxu0 0.0
          %3385 = vmatpush.msra.mxu0 0.0
          %v3386 = vand.u32 %v3369, 4294901760
          %3387 = vmatpush.msra.mxu0 %v3386
          %v3388 = vand.u32 %v3345, 4294901760
          %v3389 = vsub.f32 %v3345, %v3388
          %v3390 = vand.u32 %v3389, 4294901760
          %v3391 = vsub.f32 %v3389, %v3390
          %v3392 = vand.u32 %v3391, 4294901760
          %3393 = vmatmul.f32.gmra.mxu0 %v3392
          %v3394 = vpop.f32.mrf.mxu0
          %v3395 = vadd.f32 0.0, %v3394
          %v3396 = vand.u32 %v3348, 4294901760
          %v3397 = vsub.f32 %v3348, %v3396
          %v3398 = vand.u32 %v3397, 4294901760
          %v3399 = vsub.f32 %v3397, %v3398
          %v3400 = vand.u32 %v3399, 4294901760
          %3401 = vmatmul.f32.gmra.mxu0 %v3400
          %v3402 = vpop.f32.mrf.mxu0
          %v3403 = vadd.f32 0.0, %v3402
          %v3404 = vand.u32 %v3351, 4294901760
          %v3405 = vsub.f32 %v3351, %v3404
          %v3406 = vand.u32 %v3405, 4294901760
          %v3407 = vsub.f32 %v3405, %v3406
          %v3408 = vand.u32 %v3407, 4294901760
          %3409 = vmatmul.f32.gmra.mxu0 %v3408
          %v3410 = vpop.f32.mrf.mxu0
          %v3411 = vadd.f32 0.0, %v3410
          %v3412 = vand.u32 %v3354, 4294901760
          %v3413 = vsub.f32 %v3354, %v3412
          %v3414 = vand.u32 %v3413, 4294901760
          %v3415 = vsub.f32 %v3413, %v3414
          %v3416 = vand.u32 %v3415, 4294901760
          %3417 = vmatmul.f32.gmra.mxu0 %v3416
          %v3418 = vpop.f32.mrf.mxu0
          %v3419 = vadd.f32 0.0, %v3418
          %v3420 = vand.u32 %v3357, 4294901760
          %v3421 = vsub.f32 %v3357, %v3420
          %v3422 = vand.u32 %v3421, 4294901760
          %v3423 = vsub.f32 %v3421, %v3422
          %v3424 = vand.u32 %v3423, 4294901760
          %3425 = vmatmul.f32.gmra.mxu0 %v3424
          %v3426 = vpop.f32.mrf.mxu0
          %v3427 = vadd.f32 0.0, %v3426
          %v3428 = vand.u32 %v3360, 4294901760
          %v3429 = vsub.f32 %v3360, %v3428
          %v3430 = vand.u32 %v3429, 4294901760
          %v3431 = vsub.f32 %v3429, %v3430
          %v3432 = vand.u32 %v3431, 4294901760
          %3433 = vmatmul.f32.gmra.mxu0 %v3432
          %v3434 = vpop.f32.mrf.mxu0
          %v3435 = vadd.f32 0.0, %v3434
          %v3436 = vand.u32 %v3363, 4294901760
          %v3437 = vsub.f32 %v3363, %v3436
          %v3438 = vand.u32 %v3437, 4294901760
          %v3439 = vsub.f32 %v3437, %v3438
          %v3440 = vand.u32 %v3439, 4294901760
          %3441 = vmatmul.f32.gmra.mxu0 %v3440
          %v3442 = vpop.f32.mrf.mxu0
          %v3443 = vadd.f32 0.0, %v3442
          %v3444 = vand.u32 %v3366, 4294901760
          %v3445 = vsub.f32 %v3366, %v3444
          %v3446 = vand.u32 %v3445, 4294901760
          %v3447 = vsub.f32 %v3445, %v3446
          %v3448 = vand.u32 %v3447, 4294901760
          %3449 = vmatmul.f32.gmra.mxu0 %v3448
          %v3450 = vpop.f32.mrf.mxu0
          %v3451 = vadd.f32 0.0, %v3450
          %3452 = vdwg.mxu0
          %3453 = vmatpush.msra.mxu0 0.0
          %3454 = vmatpush.msra.mxu0 0.0
          %3455 = vmatpush.msra.mxu0 0.0
          %3456 = vmatpush.msra.mxu0 0.0
          %3457 = vmatpush.msra.mxu0 0.0
          %3458 = vmatpush.msra.mxu0 0.0
          %3459 = vmatpush.msra.mxu0 0.0
          %3460 = vmatpush.msra.mxu0 0.0
          %3461 = vmatpush.msra.mxu0 0.0
          %3462 = vmatpush.msra.mxu0 0.0
          %3463 = vmatpush.msra.mxu0 0.0
          %3464 = vmatpush.msra.mxu0 0.0
          %3465 = vmatpush.msra.mxu0 0.0
          %3466 = vmatpush.msra.mxu0 0.0
          %3467 = vmatpush.msra.mxu0 0.0
          %v3468 = vand.u32 %v3369, 4294901760
          %v3469 = vsub.f32 %v3369, %v3468
          %v3470 = vand.u32 %v3469, 4294901760
          %v3471 = vsub.f32 %v3469, %v3470
          %v3472 = vand.u32 %v3471, 4294901760
          %3473 = vmatpush.msra.mxu0 %v3472
          %v3474 = vand.u32 %v3345, 4294901760
          %3475 = vmatmul.f32.gmra.mxu0 %v3474
          %v3476 = vpop.f32.mrf.mxu0
          %v3477 = vadd.f32 %v3395, %v3476
          %v3478 = vand.u32 %v3348, 4294901760
          %3479 = vmatmul.f32.gmra.mxu0 %v3478
          %v3480 = vpop.f32.mrf.mxu0
          %v3481 = vadd.f32 %v3403, %v3480
          %v3482 = vand.u32 %v3351, 4294901760
          %3483 = vmatmul.f32.gmra.mxu0 %v3482
          %v3484 = vpop.f32.mrf.mxu0
          %v3485 = vadd.f32 %v3411, %v3484
          %v3486 = vand.u32 %v3354, 4294901760
          %3487 = vmatmul.f32.gmra.mxu0 %v3486
          %v3488 = vpop.f32.mrf.mxu0
          %v3489 = vadd.f32 %v3419, %v3488
          %v3490 = vand.u32 %v3357, 4294901760
          %3491 = vmatmul.f32.gmra.mxu0 %v3490
          %v3492 = vpop.f32.mrf.mxu0
          %v3493 = vadd.f32 %v3427, %v3492
          %v3494 = vand.u32 %v3360, 4294901760
          %3495 = vmatmul.f32.gmra.mxu0 %v3494
          %v3496 = vpop.f32.mrf.mxu0
          %v3497 = vadd.f32 %v3435, %v3496
          %v3498 = vand.u32 %v3363, 4294901760
          %3499 = vmatmul.f32.gmra.mxu0 %v3498
          %v3500 = vpop.f32.mrf.mxu0
          %v3501 = vadd.f32 %v3443, %v3500
          %v3502 = vand.u32 %v3366, 4294901760
          %3503 = vmatmul.f32.gmra.mxu0 %v3502
          %v3504 = vpop.f32.mrf.mxu0
          %v3505 = vadd.f32 %v3451, %v3504
          %3506 = vdwg.mxu0
          %3507 = vmatpush.msra.mxu0 0.0
          %3508 = vmatpush.msra.mxu0 0.0
          %3509 = vmatpush.msra.mxu0 0.0
          %3510 = vmatpush.msra.mxu0 0.0
          %3511 = vmatpush.msra.mxu0 0.0
          %3512 = vmatpush.msra.mxu0 0.0
          %3513 = vmatpush.msra.mxu0 0.0
          %3514 = vmatpush.msra.mxu0 0.0
          %3515 = vmatpush.msra.mxu0 0.0
          %3516 = vmatpush.msra.mxu0 0.0
          %3517 = vmatpush.msra.mxu0 0.0
          %3518 = vmatpush.msra.mxu0 0.0
          %3519 = vmatpush.msra.mxu0 0.0
          %3520 = vmatpush.msra.mxu0 0.0
          %3521 = vmatpush.msra.mxu0 0.0
          %v3522 = vand.u32 %v3369, 4294901760
          %v3523 = vsub.f32 %v3369, %v3522
          %3524 = vmatpush.msra.mxu0 %v3523
          %v3525 = vand.u32 %v3345, 4294901760
          %v3526 = vsub.f32 %v3345, %v3525
          %3527 = vmatmul.f32.gmra.mxu0 %v3526
          %v3528 = vpop.f32.mrf.mxu0
          %v3529 = vadd.f32 %v3477, %v3528
          %v3530 = vand.u32 %v3348, 4294901760
          %v3531 = vsub.f32 %v3348, %v3530
          %3532 = vmatmul.f32.gmra.mxu0 %v3531
          %v3533 = vpop.f32.mrf.mxu0
          %v3534 = vadd.f32 %v3481, %v3533
          %v3535 = vand.u32 %v3351, 4294901760
          %v3536 = vsub.f32 %v3351, %v3535
          %3537 = vmatmul.f32.gmra.mxu0 %v3536
          %v3538 = vpop.f32.mrf.mxu0
          %v3539 = vadd.f32 %v3485, %v3538
          %v3540 = vand.u32 %v3354, 4294901760
          %v3541 = vsub.f32 %v3354, %v3540
          %3542 = vmatmul.f32.gmra.mxu0 %v3541
          %v3543 = vpop.f32.mrf.mxu0
          %v3544 = vadd.f32 %v3489, %v3543
          %v3545 = vand.u32 %v3357, 4294901760
          %v3546 = vsub.f32 %v3357, %v3545
          %3547 = vmatmul.f32.gmra.mxu0 %v3546
          %v3548 = vpop.f32.mrf.mxu0
          %v3549 = vadd.f32 %v3493, %v3548
          %v3550 = vand.u32 %v3360, 4294901760
          %v3551 = vsub.f32 %v3360, %v3550
          %3552 = vmatmul.f32.gmra.mxu0 %v3551
          %v3553 = vpop.f32.mrf.mxu0
          %v3554 = vadd.f32 %v3497, %v3553
          %v3555 = vand.u32 %v3363, 4294901760
          %v3556 = vsub.f32 %v3363, %v3555
          %3557 = vmatmul.f32.gmra.mxu0 %v3556
          %v3558 = vpop.f32.mrf.mxu0
          %v3559 = vadd.f32 %v3501, %v3558
          %v3560 = vand.u32 %v3366, 4294901760
          %v3561 = vsub.f32 %v3366, %v3560
          %3562 = vmatmul.f32.gmra.mxu0 %v3561
          %v3563 = vpop.f32.mrf.mxu0
          %v3564 = vadd.f32 %v3505, %v3563
          %3565 = vdwg.mxu0
          %3566 = vmatpush.msra.mxu0 0.0
          %3567 = vmatpush.msra.mxu0 0.0
          %3568 = vmatpush.msra.mxu0 0.0
          %3569 = vmatpush.msra.mxu0 0.0
          %3570 = vmatpush.msra.mxu0 0.0
          %3571 = vmatpush.msra.mxu0 0.0
          %3572 = vmatpush.msra.mxu0 0.0
          %3573 = vmatpush.msra.mxu0 0.0
          %3574 = vmatpush.msra.mxu0 0.0
          %3575 = vmatpush.msra.mxu0 0.0
          %3576 = vmatpush.msra.mxu0 0.0
          %3577 = vmatpush.msra.mxu0 0.0
          %3578 = vmatpush.msra.mxu0 0.0
          %3579 = vmatpush.msra.mxu0 0.0
          %3580 = vmatpush.msra.mxu0 0.0
          %v3581 = vand.u32 %v3369, 4294901760
          %3582 = vmatpush.msra.mxu0 %v3581
          %v3583 = vand.u32 %v3345, 4294901760
          %v3584 = vsub.f32 %v3345, %v3583
          %v3585 = vand.u32 %v3584, 4294901760
          %3586 = vmatmul.f32.gmra.mxu0 %v3585
          %v3587 = vpop.f32.mrf.mxu0
          %v3588 = vadd.f32 %v3529, %v3587
          %v3589 = vand.u32 %v3348, 4294901760
          %v3590 = vsub.f32 %v3348, %v3589
          %v3591 = vand.u32 %v3590, 4294901760
          %3592 = vmatmul.f32.gmra.mxu0 %v3591
          %v3593 = vpop.f32.mrf.mxu0
          %v3594 = vadd.f32 %v3534, %v3593
          %v3595 = vand.u32 %v3351, 4294901760
          %v3596 = vsub.f32 %v3351, %v3595
          %v3597 = vand.u32 %v3596, 4294901760
          %3598 = vmatmul.f32.gmra.mxu0 %v3597
          %v3599 = vpop.f32.mrf.mxu0
          %v3600 = vadd.f32 %v3539, %v3599
          %v3601 = vand.u32 %v3354, 4294901760
          %v3602 = vsub.f32 %v3354, %v3601
          %v3603 = vand.u32 %v3602, 4294901760
          %3604 = vmatmul.f32.gmra.mxu0 %v3603
          %v3605 = vpop.f32.mrf.mxu0
          %v3606 = vadd.f32 %v3544, %v3605
          %v3607 = vand.u32 %v3357, 4294901760
          %v3608 = vsub.f32 %v3357, %v3607
          %v3609 = vand.u32 %v3608, 4294901760
          %3610 = vmatmul.f32.gmra.mxu0 %v3609
          %v3611 = vpop.f32.mrf.mxu0
          %v3612 = vadd.f32 %v3549, %v3611
          %v3613 = vand.u32 %v3360, 4294901760
          %v3614 = vsub.f32 %v3360, %v3613
          %v3615 = vand.u32 %v3614, 4294901760
          %3616 = vmatmul.f32.gmra.mxu0 %v3615
          %v3617 = vpop.f32.mrf.mxu0
          %v3618 = vadd.f32 %v3554, %v3617
          %v3619 = vand.u32 %v3363, 4294901760
          %v3620 = vsub.f32 %v3363, %v3619
          %v3621 = vand.u32 %v3620, 4294901760
          %3622 = vmatmul.f32.gmra.mxu0 %v3621
          %v3623 = vpop.f32.mrf.mxu0
          %v3624 = vadd.f32 %v3559, %v3623
          %v3625 = vand.u32 %v3366, 4294901760
          %v3626 = vsub.f32 %v3366, %v3625
          %v3627 = vand.u32 %v3626, 4294901760
          %3628 = vmatmul.f32.gmra.mxu0 %v3627
          %v3629 = vpop.f32.mrf.mxu0
          %v3630 = vadd.f32 %v3564, %v3629
          %3631 = vdwg.mxu0
          %3632 = vmatpush.msra.mxu0 0.0
          %3633 = vmatpush.msra.mxu0 0.0
          %3634 = vmatpush.msra.mxu0 0.0
          %3635 = vmatpush.msra.mxu0 0.0
          %3636 = vmatpush.msra.mxu0 0.0
          %3637 = vmatpush.msra.mxu0 0.0
          %3638 = vmatpush.msra.mxu0 0.0
          %3639 = vmatpush.msra.mxu0 0.0
          %3640 = vmatpush.msra.mxu0 0.0
          %3641 = vmatpush.msra.mxu0 0.0
          %3642 = vmatpush.msra.mxu0 0.0
          %3643 = vmatpush.msra.mxu0 0.0
          %3644 = vmatpush.msra.mxu0 0.0
          %3645 = vmatpush.msra.mxu0 0.0
          %3646 = vmatpush.msra.mxu0 0.0
          %v3647 = vand.u32 %v3369, 4294901760
          %v3648 = vsub.f32 %v3369, %v3647
          %v3649 = vand.u32 %v3648, 4294901760
          %3650 = vmatpush.msra.mxu0 %v3649
          %v3651 = vand.u32 %v3345, 4294901760
          %3652 = vmatmul.f32.gmra.mxu0 %v3651
          %v3653 = vpop.f32.mrf.mxu0
          %v3654 = vadd.f32 %v3588, %v3653
          %v3655 = vand.u32 %v3348, 4294901760
          %3656 = vmatmul.f32.gmra.mxu0 %v3655
          %v3657 = vpop.f32.mrf.mxu0
          %v3658 = vadd.f32 %v3594, %v3657
          %v3659 = vand.u32 %v3351, 4294901760
          %3660 = vmatmul.f32.gmra.mxu0 %v3659
          %v3661 = vpop.f32.mrf.mxu0
          %v3662 = vadd.f32 %v3600, %v3661
          %v3663 = vand.u32 %v3354, 4294901760
          %3664 = vmatmul.f32.gmra.mxu0 %v3663
          %v3665 = vpop.f32.mrf.mxu0
          %v3666 = vadd.f32 %v3606, %v3665
          %v3667 = vand.u32 %v3357, 4294901760
          %3668 = vmatmul.f32.gmra.mxu0 %v3667
          %v3669 = vpop.f32.mrf.mxu0
          %v3670 = vadd.f32 %v3612, %v3669
          %v3671 = vand.u32 %v3360, 4294901760
          %3672 = vmatmul.f32.gmra.mxu0 %v3671
          %v3673 = vpop.f32.mrf.mxu0
          %v3674 = vadd.f32 %v3618, %v3673
          %v3675 = vand.u32 %v3363, 4294901760
          %3676 = vmatmul.f32.gmra.mxu0 %v3675
          %v3677 = vpop.f32.mrf.mxu0
          %v3678 = vadd.f32 %v3624, %v3677
          %v3679 = vand.u32 %v3366, 4294901760
          %3680 = vmatmul.f32.gmra.mxu0 %v3679
          %v3681 = vpop.f32.mrf.mxu0
          %v3682 = vadd.f32 %v3630, %v3681
          %3683 = vdwg.mxu0
          %3684 = vmatpush.msra.mxu0 0.0
          %3685 = vmatpush.msra.mxu0 0.0
          %3686 = vmatpush.msra.mxu0 0.0
          %3687 = vmatpush.msra.mxu0 0.0
          %3688 = vmatpush.msra.mxu0 0.0
          %3689 = vmatpush.msra.mxu0 0.0
          %3690 = vmatpush.msra.mxu0 0.0
          %3691 = vmatpush.msra.mxu0 0.0
          %3692 = vmatpush.msra.mxu0 0.0
          %3693 = vmatpush.msra.mxu0 0.0
          %3694 = vmatpush.msra.mxu0 0.0
          %3695 = vmatpush.msra.mxu0 0.0
          %3696 = vmatpush.msra.mxu0 0.0
          %3697 = vmatpush.msra.mxu0 0.0
          %3698 = vmatpush.msra.mxu0 0.0
          %v3699 = vand.u32 %v3369, 4294901760
          %3700 = vmatpush.msra.mxu0 %v3699
          %v3701 = vand.u32 %v3345, 4294901760
          %3702 = vmatmul.f32.gmra.mxu0 %v3701
          %v3703 = vpop.f32.mrf.mxu0
          %v3704 = vadd.f32 %v3654, %v3703
          %v3705 = vand.u32 %v3348, 4294901760
          %3706 = vmatmul.f32.gmra.mxu0 %v3705
          %v3707 = vpop.f32.mrf.mxu0
          %v3708 = vadd.f32 %v3658, %v3707
          %v3709 = vand.u32 %v3351, 4294901760
          %3710 = vmatmul.f32.gmra.mxu0 %v3709
          %v3711 = vpop.f32.mrf.mxu0
          %v3712 = vadd.f32 %v3662, %v3711
          %v3713 = vand.u32 %v3354, 4294901760
          %3714 = vmatmul.f32.gmra.mxu0 %v3713
          %v3715 = vpop.f32.mrf.mxu0
          %v3716 = vadd.f32 %v3666, %v3715
          %v3717 = vand.u32 %v3357, 4294901760
          %3718 = vmatmul.f32.gmra.mxu0 %v3717
          %v3719 = vpop.f32.mrf.mxu0
          %v3720 = vadd.f32 %v3670, %v3719
          %v3721 = vand.u32 %v3360, 4294901760
          %3722 = vmatmul.f32.gmra.mxu0 %v3721
          %v3723 = vpop.f32.mrf.mxu0
          %v3724 = vadd.f32 %v3674, %v3723
          %v3725 = vand.u32 %v3363, 4294901760
          %3726 = vmatmul.f32.gmra.mxu0 %v3725
          %v3727 = vpop.f32.mrf.mxu0
          %v3728 = vadd.f32 %v3678, %v3727
          %v3729 = vand.u32 %v3366, 4294901760
          %3730 = vmatmul.f32.gmra.mxu0 %v3729
          %v3731 = vpop.f32.mrf.mxu0
          %v3732 = vadd.f32 %v3682, %v3731
          %3733 = vdwg.mxu0
          %v3734 = vadd.f32 %v3327, %v3704
          %v3735 = vadd.f32 %v3328, %v3708
          %v3736 = vadd.f32 %v3329, %v3712
          %v3737 = vadd.f32 %v3330, %v3716
          %v3738 = vadd.f32 %v3331, %v3720
          %v3739 = vadd.f32 %v3332, %v3724
          %v3740 = vadd.f32 %v3333, %v3728
          %v3741 = vadd.f32 %v3334, %v3732
          %v3742 = vld [vmem:[%s3335 + $0x1] sm:$0xff]
          %v3743 = vld [vmem:[%s3335 + $0x11] sm:$0xff]
          %v3744 = vld [vmem:[%s3335 + $0x21] sm:$0xff]
          %v3745 = vld [vmem:[%s3335 + $0x31] sm:$0xff]
          %v3746 = vld [vmem:[%s3335 + $0x41] sm:$0xff]
          %v3747 = vld [vmem:[%s3335 + $0x51] sm:$0xff]
          %v3748 = vld [vmem:[%s3335 + $0x61] sm:$0xff]
          %v3749 = vld [vmem:[%s3335 + $0x71] sm:$0xff]
          %v3751 = vsel %vm872, %v3742, 0
          %v3754 = vsel %vm872, %v3743, 0
          %v3757 = vsel %vm872, %v3744, 0
          %v3760 = vsel %vm872, %v3745, 0
          %v3763 = vsel %vm872, %v3746, 0
          %v3766 = vsel %vm872, %v3747, 0
          %v3769 = vsel %vm872, %v3748, 0
          %v3772 = vsel %vm872, %v3749, 0
          %v3775 = vsel %vm930, %v888, 0
          %3777 = vmatpush.msra.mxu0 0.0
          %3778 = vmatpush.msra.mxu0 0.0
          %3779 = vmatpush.msra.mxu0 0.0
          %3780 = vmatpush.msra.mxu0 0.0
          %3781 = vmatpush.msra.mxu0 0.0
          %3782 = vmatpush.msra.mxu0 0.0
          %3783 = vmatpush.msra.mxu0 0.0
          %3784 = vmatpush.msra.mxu0 0.0
          %3785 = vmatpush.msra.mxu0 0.0
          %3786 = vmatpush.msra.mxu0 0.0
          %3787 = vmatpush.msra.mxu0 0.0
          %3788 = vmatpush.msra.mxu0 0.0
          %3789 = vmatpush.msra.mxu0 0.0
          %3790 = vmatpush.msra.mxu0 0.0
          %3791 = vmatpush.msra.mxu0 0.0
          %v3792 = vand.u32 %v3775, 4294901760
          %3793 = vmatpush.msra.mxu0 %v3792
          %v3794 = vand.u32 %v3751, 4294901760
          %v3795 = vsub.f32 %v3751, %v3794
          %v3796 = vand.u32 %v3795, 4294901760
          %v3797 = vsub.f32 %v3795, %v3796
          %v3798 = vand.u32 %v3797, 4294901760
          %3799 = vmatmul.f32.gmra.mxu0 %v3798
          %v3800 = vpop.f32.mrf.mxu0
          %v3801 = vadd.f32 0.0, %v3800
          %v3802 = vand.u32 %v3754, 4294901760
          %v3803 = vsub.f32 %v3754, %v3802
          %v3804 = vand.u32 %v3803, 4294901760
          %v3805 = vsub.f32 %v3803, %v3804
          %v3806 = vand.u32 %v3805, 4294901760
          %3807 = vmatmul.f32.gmra.mxu0 %v3806
          %v3808 = vpop.f32.mrf.mxu0
          %v3809 = vadd.f32 0.0, %v3808
          %v3810 = vand.u32 %v3757, 4294901760
          %v3811 = vsub.f32 %v3757, %v3810
          %v3812 = vand.u32 %v3811, 4294901760
          %v3813 = vsub.f32 %v3811, %v3812
          %v3814 = vand.u32 %v3813, 4294901760
          %3815 = vmatmul.f32.gmra.mxu0 %v3814
          %v3816 = vpop.f32.mrf.mxu0
          %v3817 = vadd.f32 0.0, %v3816
          %v3818 = vand.u32 %v3760, 4294901760
          %v3819 = vsub.f32 %v3760, %v3818
          %v3820 = vand.u32 %v3819, 4294901760
          %v3821 = vsub.f32 %v3819, %v3820
          %v3822 = vand.u32 %v3821, 4294901760
          %3823 = vmatmul.f32.gmra.mxu0 %v3822
          %v3824 = vpop.f32.mrf.mxu0
          %v3825 = vadd.f32 0.0, %v3824
          %v3826 = vand.u32 %v3763, 4294901760
          %v3827 = vsub.f32 %v3763, %v3826
          %v3828 = vand.u32 %v3827, 4294901760
          %v3829 = vsub.f32 %v3827, %v3828
          %v3830 = vand.u32 %v3829, 4294901760
          %3831 = vmatmul.f32.gmra.mxu0 %v3830
          %v3832 = vpop.f32.mrf.mxu0
          %v3833 = vadd.f32 0.0, %v3832
          %v3834 = vand.u32 %v3766, 4294901760
          %v3835 = vsub.f32 %v3766, %v3834
          %v3836 = vand.u32 %v3835, 4294901760
          %v3837 = vsub.f32 %v3835, %v3836
          %v3838 = vand.u32 %v3837, 4294901760
          %3839 = vmatmul.f32.gmra.mxu0 %v3838
          %v3840 = vpop.f32.mrf.mxu0
          %v3841 = vadd.f32 0.0, %v3840
          %v3842 = vand.u32 %v3769, 4294901760
          %v3843 = vsub.f32 %v3769, %v3842
          %v3844 = vand.u32 %v3843, 4294901760
          %v3845 = vsub.f32 %v3843, %v3844
          %v3846 = vand.u32 %v3845, 4294901760
          %3847 = vmatmul.f32.gmra.mxu0 %v3846
          %v3848 = vpop.f32.mrf.mxu0
          %v3849 = vadd.f32 0.0, %v3848
          %v3850 = vand.u32 %v3772, 4294901760
          %v3851 = vsub.f32 %v3772, %v3850
          %v3852 = vand.u32 %v3851, 4294901760
          %v3853 = vsub.f32 %v3851, %v3852
          %v3854 = vand.u32 %v3853, 4294901760
          %3855 = vmatmul.f32.gmra.mxu0 %v3854
          %v3856 = vpop.f32.mrf.mxu0
          %v3857 = vadd.f32 0.0, %v3856
          %3858 = vdwg.mxu0
          %3859 = vmatpush.msra.mxu0 0.0
          %3860 = vmatpush.msra.mxu0 0.0
          %3861 = vmatpush.msra.mxu0 0.0
          %3862 = vmatpush.msra.mxu0 0.0
          %3863 = vmatpush.msra.mxu0 0.0
          %3864 = vmatpush.msra.mxu0 0.0
          %3865 = vmatpush.msra.mxu0 0.0
          %3866 = vmatpush.msra.mxu0 0.0
          %3867 = vmatpush.msra.mxu0 0.0
          %3868 = vmatpush.msra.mxu0 0.0
          %3869 = vmatpush.msra.mxu0 0.0
          %3870 = vmatpush.msra.mxu0 0.0
          %3871 = vmatpush.msra.mxu0 0.0
          %3872 = vmatpush.msra.mxu0 0.0
          %3873 = vmatpush.msra.mxu0 0.0
          %v3874 = vand.u32 %v3775, 4294901760
          %v3875 = vsub.f32 %v3775, %v3874
          %v3876 = vand.u32 %v3875, 4294901760
          %v3877 = vsub.f32 %v3875, %v3876
          %v3878 = vand.u32 %v3877, 4294901760
          %3879 = vmatpush.msra.mxu0 %v3878
          %v3880 = vand.u32 %v3751, 4294901760
          %3881 = vmatmul.f32.gmra.mxu0 %v3880
          %v3882 = vpop.f32.mrf.mxu0
          %v3883 = vadd.f32 %v3801, %v3882
          %v3884 = vand.u32 %v3754, 4294901760
          %3885 = vmatmul.f32.gmra.mxu0 %v3884
          %v3886 = vpop.f32.mrf.mxu0
          %v3887 = vadd.f32 %v3809, %v3886
          %v3888 = vand.u32 %v3757, 4294901760
          %3889 = vmatmul.f32.gmra.mxu0 %v3888
          %v3890 = vpop.f32.mrf.mxu0
          %v3891 = vadd.f32 %v3817, %v3890
          %v3892 = vand.u32 %v3760, 4294901760
          %3893 = vmatmul.f32.gmra.mxu0 %v3892
          %v3894 = vpop.f32.mrf.mxu0
          %v3895 = vadd.f32 %v3825, %v3894
          %v3896 = vand.u32 %v3763, 4294901760
          %3897 = vmatmul.f32.gmra.mxu0 %v3896
          %v3898 = vpop.f32.mrf.mxu0
          %v3899 = vadd.f32 %v3833, %v3898
          %v3900 = vand.u32 %v3766, 4294901760
          %3901 = vmatmul.f32.gmra.mxu0 %v3900
          %v3902 = vpop.f32.mrf.mxu0
          %v3903 = vadd.f32 %v3841, %v3902
          %v3904 = vand.u32 %v3769, 4294901760
          %3905 = vmatmul.f32.gmra.mxu0 %v3904
          %v3906 = vpop.f32.mrf.mxu0
          %v3907 = vadd.f32 %v3849, %v3906
          %v3908 = vand.u32 %v3772, 4294901760
          %3909 = vmatmul.f32.gmra.mxu0 %v3908
          %v3910 = vpop.f32.mrf.mxu0
          %v3911 = vadd.f32 %v3857, %v3910
          %3912 = vdwg.mxu0
          %3913 = vmatpush.msra.mxu0 0.0
          %3914 = vmatpush.msra.mxu0 0.0
          %3915 = vmatpush.msra.mxu0 0.0
          %3916 = vmatpush.msra.mxu0 0.0
          %3917 = vmatpush.msra.mxu0 0.0
          %3918 = vmatpush.msra.mxu0 0.0
          %3919 = vmatpush.msra.mxu0 0.0
          %3920 = vmatpush.msra.mxu0 0.0
          %3921 = vmatpush.msra.mxu0 0.0
          %3922 = vmatpush.msra.mxu0 0.0
          %3923 = vmatpush.msra.mxu0 0.0
          %3924 = vmatpush.msra.mxu0 0.0
          %3925 = vmatpush.msra.mxu0 0.0
          %3926 = vmatpush.msra.mxu0 0.0
          %3927 = vmatpush.msra.mxu0 0.0
          %v3928 = vand.u32 %v3775, 4294901760
          %v3929 = vsub.f32 %v3775, %v3928
          %3930 = vmatpush.msra.mxu0 %v3929
          %v3931 = vand.u32 %v3751, 4294901760
          %v3932 = vsub.f32 %v3751, %v3931
          %3933 = vmatmul.f32.gmra.mxu0 %v3932
          %v3934 = vpop.f32.mrf.mxu0
          %v3935 = vadd.f32 %v3883, %v3934
          %v3936 = vand.u32 %v3754, 4294901760
          %v3937 = vsub.f32 %v3754, %v3936
          %3938 = vmatmul.f32.gmra.mxu0 %v3937
          %v3939 = vpop.f32.mrf.mxu0
          %v3940 = vadd.f32 %v3887, %v3939
          %v3941 = vand.u32 %v3757, 4294901760
          %v3942 = vsub.f32 %v3757, %v3941
          %3943 = vmatmul.f32.gmra.mxu0 %v3942
          %v3944 = vpop.f32.mrf.mxu0
          %v3945 = vadd.f32 %v3891, %v3944
          %v3946 = vand.u32 %v3760, 4294901760
          %v3947 = vsub.f32 %v3760, %v3946
          %3948 = vmatmul.f32.gmra.mxu0 %v3947
          %v3949 = vpop.f32.mrf.mxu0
          %v3950 = vadd.f32 %v3895, %v3949
          %v3951 = vand.u32 %v3763, 4294901760
          %v3952 = vsub.f32 %v3763, %v3951
          %3953 = vmatmul.f32.gmra.mxu0 %v3952
          %v3954 = vpop.f32.mrf.mxu0
          %v3955 = vadd.f32 %v3899, %v3954
          %v3956 = vand.u32 %v3766, 4294901760
          %v3957 = vsub.f32 %v3766, %v3956
          %3958 = vmatmul.f32.gmra.mxu0 %v3957
          %v3959 = vpop.f32.mrf.mxu0
          %v3960 = vadd.f32 %v3903, %v3959
          %v3961 = vand.u32 %v3769, 4294901760
          %v3962 = vsub.f32 %v3769, %v3961
          %3963 = vmatmul.f32.gmra.mxu0 %v3962
          %v3964 = vpop.f32.mrf.mxu0
          %v3965 = vadd.f32 %v3907, %v3964
          %v3966 = vand.u32 %v3772, 4294901760
          %v3967 = vsub.f32 %v3772, %v3966
          %3968 = vmatmul.f32.gmra.mxu0 %v3967
          %v3969 = vpop.f32.mrf.mxu0
          %v3970 = vadd.f32 %v3911, %v3969
          %3971 = vdwg.mxu0
          %3972 = vmatpush.msra.mxu0 0.0
          %3973 = vmatpush.msra.mxu0 0.0
          %3974 = vmatpush.msra.mxu0 0.0
          %3975 = vmatpush.msra.mxu0 0.0
          %3976 = vmatpush.msra.mxu0 0.0
          %3977 = vmatpush.msra.mxu0 0.0
          %3978 = vmatpush.msra.mxu0 0.0
          %3979 = vmatpush.msra.mxu0 0.0
          %3980 = vmatpush.msra.mxu0 0.0
          %3981 = vmatpush.msra.mxu0 0.0
          %3982 = vmatpush.msra.mxu0 0.0
          %3983 = vmatpush.msra.mxu0 0.0
          %3984 = vmatpush.msra.mxu0 0.0
          %3985 = vmatpush.msra.mxu0 0.0
          %3986 = vmatpush.msra.mxu0 0.0
          %v3987 = vand.u32 %v3775, 4294901760
          %3988 = vmatpush.msra.mxu0 %v3987
          %v3989 = vand.u32 %v3751, 4294901760
          %v3990 = vsub.f32 %v3751, %v3989
          %v3991 = vand.u32 %v3990, 4294901760
          %3992 = vmatmul.f32.gmra.mxu0 %v3991
          %v3993 = vpop.f32.mrf.mxu0
          %v3994 = vadd.f32 %v3935, %v3993
          %v3995 = vand.u32 %v3754, 4294901760
          %v3996 = vsub.f32 %v3754, %v3995
          %v3997 = vand.u32 %v3996, 4294901760
          %3998 = vmatmul.f32.gmra.mxu0 %v3997
          %v3999 = vpop.f32.mrf.mxu0
          %v4000 = vadd.f32 %v3940, %v3999
          %v4001 = vand.u32 %v3757, 4294901760
          %v4002 = vsub.f32 %v3757, %v4001
          %v4003 = vand.u32 %v4002, 4294901760
          %4004 = vmatmul.f32.gmra.mxu0 %v4003
          %v4005 = vpop.f32.mrf.mxu0
          %v4006 = vadd.f32 %v3945, %v4005
          %v4007 = vand.u32 %v3760, 4294901760
          %v4008 = vsub.f32 %v3760, %v4007
          %v4009 = vand.u32 %v4008, 4294901760
          %4010 = vmatmul.f32.gmra.mxu0 %v4009
          %v4011 = vpop.f32.mrf.mxu0
          %v4012 = vadd.f32 %v3950, %v4011
          %v4013 = vand.u32 %v3763, 4294901760
          %v4014 = vsub.f32 %v3763, %v4013
          %v4015 = vand.u32 %v4014, 4294901760
          %4016 = vmatmul.f32.gmra.mxu0 %v4015
          %v4017 = vpop.f32.mrf.mxu0
          %v4018 = vadd.f32 %v3955, %v4017
          %v4019 = vand.u32 %v3766, 4294901760
          %v4020 = vsub.f32 %v3766, %v4019
          %v4021 = vand.u32 %v4020, 4294901760
          %4022 = vmatmul.f32.gmra.mxu0 %v4021
          %v4023 = vpop.f32.mrf.mxu0
          %v4024 = vadd.f32 %v3960, %v4023
          %v4025 = vand.u32 %v3769, 4294901760
          %v4026 = vsub.f32 %v3769, %v4025
          %v4027 = vand.u32 %v4026, 4294901760
          %4028 = vmatmul.f32.gmra.mxu0 %v4027
          %v4029 = vpop.f32.mrf.mxu0
          %v4030 = vadd.f32 %v3965, %v4029
          %v4031 = vand.u32 %v3772, 4294901760
          %v4032 = vsub.f32 %v3772, %v4031
          %v4033 = vand.u32 %v4032, 4294901760
          %4034 = vmatmul.f32.gmra.mxu0 %v4033
          %v4035 = vpop.f32.mrf.mxu0
          %v4036 = vadd.f32 %v3970, %v4035
          %4037 = vdwg.mxu0
          %4038 = vmatpush.msra.mxu0 0.0
          %4039 = vmatpush.msra.mxu0 0.0
          %4040 = vmatpush.msra.mxu0 0.0
          %4041 = vmatpush.msra.mxu0 0.0
          %4042 = vmatpush.msra.mxu0 0.0
          %4043 = vmatpush.msra.mxu0 0.0
          %4044 = vmatpush.msra.mxu0 0.0
          %4045 = vmatpush.msra.mxu0 0.0
          %4046 = vmatpush.msra.mxu0 0.0
          %4047 = vmatpush.msra.mxu0 0.0
          %4048 = vmatpush.msra.mxu0 0.0
          %4049 = vmatpush.msra.mxu0 0.0
          %4050 = vmatpush.msra.mxu0 0.0
          %4051 = vmatpush.msra.mxu0 0.0
          %4052 = vmatpush.msra.mxu0 0.0
          %v4053 = vand.u32 %v3775, 4294901760
          %v4054 = vsub.f32 %v3775, %v4053
          %v4055 = vand.u32 %v4054, 4294901760
          %4056 = vmatpush.msra.mxu0 %v4055
          %v4057 = vand.u32 %v3751, 4294901760
          %4058 = vmatmul.f32.gmra.mxu0 %v4057
          %v4059 = vpop.f32.mrf.mxu0
          %v4060 = vadd.f32 %v3994, %v4059
          %v4061 = vand.u32 %v3754, 4294901760
          %4062 = vmatmul.f32.gmra.mxu0 %v4061
          %v4063 = vpop.f32.mrf.mxu0
          %v4064 = vadd.f32 %v4000, %v4063
          %v4065 = vand.u32 %v3757, 4294901760
          %4066 = vmatmul.f32.gmra.mxu0 %v4065
          %v4067 = vpop.f32.mrf.mxu0
          %v4068 = vadd.f32 %v4006, %v4067
          %v4069 = vand.u32 %v3760, 4294901760
          %4070 = vmatmul.f32.gmra.mxu0 %v4069
          %v4071 = vpop.f32.mrf.mxu0
          %v4072 = vadd.f32 %v4012, %v4071
          %v4073 = vand.u32 %v3763, 4294901760
          %4074 = vmatmul.f32.gmra.mxu0 %v4073
          %v4075 = vpop.f32.mrf.mxu0
          %v4076 = vadd.f32 %v4018, %v4075
          %v4077 = vand.u32 %v3766, 4294901760
          %4078 = vmatmul.f32.gmra.mxu0 %v4077
          %v4079 = vpop.f32.mrf.mxu0
          %v4080 = vadd.f32 %v4024, %v4079
          %v4081 = vand.u32 %v3769, 4294901760
          %4082 = vmatmul.f32.gmra.mxu0 %v4081
          %v4083 = vpop.f32.mrf.mxu0
          %v4084 = vadd.f32 %v4030, %v4083
          %v4085 = vand.u32 %v3772, 4294901760
          %4086 = vmatmul.f32.gmra.mxu0 %v4085
          %v4087 = vpop.f32.mrf.mxu0
          %v4088 = vadd.f32 %v4036, %v4087
          %4089 = vdwg.mxu0
          %4090 = vmatpush.msra.mxu0 0.0
          %4091 = vmatpush.msra.mxu0 0.0
          %4092 = vmatpush.msra.mxu0 0.0
          %4093 = vmatpush.msra.mxu0 0.0
          %4094 = vmatpush.msra.mxu0 0.0
          %4095 = vmatpush.msra.mxu0 0.0
          %4096 = vmatpush.msra.mxu0 0.0
          %4097 = vmatpush.msra.mxu0 0.0
          %4098 = vmatpush.msra.mxu0 0.0
          %4099 = vmatpush.msra.mxu0 0.0
          %4100 = vmatpush.msra.mxu0 0.0
          %4101 = vmatpush.msra.mxu0 0.0
          %4102 = vmatpush.msra.mxu0 0.0
          %4103 = vmatpush.msra.mxu0 0.0
          %4104 = vmatpush.msra.mxu0 0.0
          %v4105 = vand.u32 %v3775, 4294901760
          %4106 = vmatpush.msra.mxu0 %v4105
          %v4107 = vand.u32 %v3751, 4294901760
          %4108 = vmatmul.f32.gmra.mxu0 %v4107
          %v4109 = vpop.f32.mrf.mxu0
          %v4110 = vadd.f32 %v4060, %v4109
          %v4111 = vand.u32 %v3754, 4294901760
          %4112 = vmatmul.f32.gmra.mxu0 %v4111
          %v4113 = vpop.f32.mrf.mxu0
          %v4114 = vadd.f32 %v4064, %v4113
          %v4115 = vand.u32 %v3757, 4294901760
          %4116 = vmatmul.f32.gmra.mxu0 %v4115
          %v4117 = vpop.f32.mrf.mxu0
          %v4118 = vadd.f32 %v4068, %v4117
          %v4119 = vand.u32 %v3760, 4294901760
          %4120 = vmatmul.f32.gmra.mxu0 %v4119
          %v4121 = vpop.f32.mrf.mxu0
          %v4122 = vadd.f32 %v4072, %v4121
          %v4123 = vand.u32 %v3763, 4294901760
          %4124 = vmatmul.f32.gmra.mxu0 %v4123
          %v4125 = vpop.f32.mrf.mxu0
          %v4126 = vadd.f32 %v4076, %v4125
          %v4127 = vand.u32 %v3766, 4294901760
          %4128 = vmatmul.f32.gmra.mxu0 %v4127
          %v4129 = vpop.f32.mrf.mxu0
          %v4130 = vadd.f32 %v4080, %v4129
          %v4131 = vand.u32 %v3769, 4294901760
          %4132 = vmatmul.f32.gmra.mxu0 %v4131
          %v4133 = vpop.f32.mrf.mxu0
          %v4134 = vadd.f32 %v4084, %v4133
          %v4135 = vand.u32 %v3772, 4294901760
          %4136 = vmatmul.f32.gmra.mxu0 %v4135
          %v4137 = vpop.f32.mrf.mxu0
          %v4138 = vadd.f32 %v4088, %v4137
          %4139 = vdwg.mxu0
          %v4140 = vadd.f32 %v3734, %v4110
          %v4141 = vadd.f32 %v3735, %v4114
          %v4142 = vadd.f32 %v3736, %v4118
          %v4143 = vadd.f32 %v3737, %v4122
          %v4144 = vadd.f32 %v3738, %v4126
          %v4145 = vadd.f32 %v3739, %v4130
          %v4146 = vadd.f32 %v3740, %v4134
          %v4147 = vadd.f32 %v3741, %v4138
          %v4148 = vld [vmem:[%s3335 + $0x2] sm:$0xff]
          %v4149 = vld [vmem:[%s3335 + $0x12] sm:$0xff]
          %v4150 = vld [vmem:[%s3335 + $0x22] sm:$0xff]
          %v4151 = vld [vmem:[%s3335 + $0x32] sm:$0xff]
          %v4152 = vld [vmem:[%s3335 + $0x42] sm:$0xff]
          %v4153 = vld [vmem:[%s3335 + $0x52] sm:$0xff]
          %v4154 = vld [vmem:[%s3335 + $0x62] sm:$0xff]
          %v4155 = vld [vmem:[%s3335 + $0x72] sm:$0xff]
          %v4157 = vsel %vm872, %v4148, 0
          %v4160 = vsel %vm872, %v4149, 0
          %v4163 = vsel %vm872, %v4150, 0
          %v4166 = vsel %vm872, %v4151, 0
          %v4169 = vsel %vm872, %v4152, 0
          %v4172 = vsel %vm872, %v4153, 0
          %v4175 = vsel %vm872, %v4154, 0
          %v4178 = vsel %vm872, %v4155, 0
          %v4181 = vsel %vm930, %v889, 0
          %4183 = vmatpush.msra.mxu0 0.0
          %4184 = vmatpush.msra.mxu0 0.0
          %4185 = vmatpush.msra.mxu0 0.0
          %4186 = vmatpush.msra.mxu0 0.0
          %4187 = vmatpush.msra.mxu0 0.0
          %4188 = vmatpush.msra.mxu0 0.0
          %4189 = vmatpush.msra.mxu0 0.0
          %4190 = vmatpush.msra.mxu0 0.0
          %4191 = vmatpush.msra.mxu0 0.0
          %4192 = vmatpush.msra.mxu0 0.0
          %4193 = vmatpush.msra.mxu0 0.0
          %4194 = vmatpush.msra.mxu0 0.0
          %4195 = vmatpush.msra.mxu0 0.0
          %4196 = vmatpush.msra.mxu0 0.0
          %4197 = vmatpush.msra.mxu0 0.0
          %v4198 = vand.u32 %v4181, 4294901760
          %4199 = vmatpush.msra.mxu0 %v4198
          %v4200 = vand.u32 %v4157, 4294901760
          %v4201 = vsub.f32 %v4157, %v4200
          %v4202 = vand.u32 %v4201, 4294901760
          %v4203 = vsub.f32 %v4201, %v4202
          %v4204 = vand.u32 %v4203, 4294901760
          %4205 = vmatmul.f32.gmra.mxu0 %v4204
          %v4206 = vpop.f32.mrf.mxu0
          %v4207 = vadd.f32 0.0, %v4206
          %v4208 = vand.u32 %v4160, 4294901760
          %v4209 = vsub.f32 %v4160, %v4208
          %v4210 = vand.u32 %v4209, 4294901760
          %v4211 = vsub.f32 %v4209, %v4210
          %v4212 = vand.u32 %v4211, 4294901760
          %4213 = vmatmul.f32.gmra.mxu0 %v4212
          %v4214 = vpop.f32.mrf.mxu0
          %v4215 = vadd.f32 0.0, %v4214
          %v4216 = vand.u32 %v4163, 4294901760
          %v4217 = vsub.f32 %v4163, %v4216
          %v4218 = vand.u32 %v4217, 4294901760
          %v4219 = vsub.f32 %v4217, %v4218
          %v4220 = vand.u32 %v4219, 4294901760
          %4221 = vmatmul.f32.gmra.mxu0 %v4220
          %v4222 = vpop.f32.mrf.mxu0
          %v4223 = vadd.f32 0.0, %v4222
          %v4224 = vand.u32 %v4166, 4294901760
          %v4225 = vsub.f32 %v4166, %v4224
          %v4226 = vand.u32 %v4225, 4294901760
          %v4227 = vsub.f32 %v4225, %v4226
          %v4228 = vand.u32 %v4227, 4294901760
          %4229 = vmatmul.f32.gmra.mxu0 %v4228
          %v4230 = vpop.f32.mrf.mxu0
          %v4231 = vadd.f32 0.0, %v4230
          %v4232 = vand.u32 %v4169, 4294901760
          %v4233 = vsub.f32 %v4169, %v4232
          %v4234 = vand.u32 %v4233, 4294901760
          %v4235 = vsub.f32 %v4233, %v4234
          %v4236 = vand.u32 %v4235, 4294901760
          %4237 = vmatmul.f32.gmra.mxu0 %v4236
          %v4238 = vpop.f32.mrf.mxu0
          %v4239 = vadd.f32 0.0, %v4238
          %v4240 = vand.u32 %v4172, 4294901760
          %v4241 = vsub.f32 %v4172, %v4240
          %v4242 = vand.u32 %v4241, 4294901760
          %v4243 = vsub.f32 %v4241, %v4242
          %v4244 = vand.u32 %v4243, 4294901760
          %4245 = vmatmul.f32.gmra.mxu0 %v4244
          %v4246 = vpop.f32.mrf.mxu0
          %v4247 = vadd.f32 0.0, %v4246
          %v4248 = vand.u32 %v4175, 4294901760
          %v4249 = vsub.f32 %v4175, %v4248
          %v4250 = vand.u32 %v4249, 4294901760
          %v4251 = vsub.f32 %v4249, %v4250
          %v4252 = vand.u32 %v4251, 4294901760
          %4253 = vmatmul.f32.gmra.mxu0 %v4252
          %v4254 = vpop.f32.mrf.mxu0
          %v4255 = vadd.f32 0.0, %v4254
          %v4256 = vand.u32 %v4178, 4294901760
          %v4257 = vsub.f32 %v4178, %v4256
          %v4258 = vand.u32 %v4257, 4294901760
          %v4259 = vsub.f32 %v4257, %v4258
          %v4260 = vand.u32 %v4259, 4294901760
          %4261 = vmatmul.f32.gmra.mxu0 %v4260
          %v4262 = vpop.f32.mrf.mxu0
          %v4263 = vadd.f32 0.0, %v4262
          %4264 = vdwg.mxu0
          %4265 = vmatpush.msra.mxu0 0.0
          %4266 = vmatpush.msra.mxu0 0.0
          %4267 = vmatpush.msra.mxu0 0.0
          %4268 = vmatpush.msra.mxu0 0.0
          %4269 = vmatpush.msra.mxu0 0.0
          %4270 = vmatpush.msra.mxu0 0.0
          %4271 = vmatpush.msra.mxu0 0.0
          %4272 = vmatpush.msra.mxu0 0.0
          %4273 = vmatpush.msra.mxu0 0.0
          %4274 = vmatpush.msra.mxu0 0.0
          %4275 = vmatpush.msra.mxu0 0.0
          %4276 = vmatpush.msra.mxu0 0.0
          %4277 = vmatpush.msra.mxu0 0.0
          %4278 = vmatpush.msra.mxu0 0.0
          %4279 = vmatpush.msra.mxu0 0.0
          %v4280 = vand.u32 %v4181, 4294901760
          %v4281 = vsub.f32 %v4181, %v4280
          %v4282 = vand.u32 %v4281, 4294901760
          %v4283 = vsub.f32 %v4281, %v4282
          %v4284 = vand.u32 %v4283, 4294901760
          %4285 = vmatpush.msra.mxu0 %v4284
          %v4286 = vand.u32 %v4157, 4294901760
          %4287 = vmatmul.f32.gmra.mxu0 %v4286
          %v4288 = vpop.f32.mrf.mxu0
          %v4289 = vadd.f32 %v4207, %v4288
          %v4290 = vand.u32 %v4160, 4294901760
          %4291 = vmatmul.f32.gmra.mxu0 %v4290
          %v4292 = vpop.f32.mrf.mxu0
          %v4293 = vadd.f32 %v4215, %v4292
          %v4294 = vand.u32 %v4163, 4294901760
          %4295 = vmatmul.f32.gmra.mxu0 %v4294
          %v4296 = vpop.f32.mrf.mxu0
          %v4297 = vadd.f32 %v4223, %v4296
          %v4298 = vand.u32 %v4166, 4294901760
          %4299 = vmatmul.f32.gmra.mxu0 %v4298
          %v4300 = vpop.f32.mrf.mxu0
          %v4301 = vadd.f32 %v4231, %v4300
          %v4302 = vand.u32 %v4169, 4294901760
          %4303 = vmatmul.f32.gmra.mxu0 %v4302
          %v4304 = vpop.f32.mrf.mxu0
          %v4305 = vadd.f32 %v4239, %v4304
          %v4306 = vand.u32 %v4172, 4294901760
          %4307 = vmatmul.f32.gmra.mxu0 %v4306
          %v4308 = vpop.f32.mrf.mxu0
          %v4309 = vadd.f32 %v4247, %v4308
          %v4310 = vand.u32 %v4175, 4294901760
          %4311 = vmatmul.f32.gmra.mxu0 %v4310
          %v4312 = vpop.f32.mrf.mxu0
          %v4313 = vadd.f32 %v4255, %v4312
          %v4314 = vand.u32 %v4178, 4294901760
          %4315 = vmatmul.f32.gmra.mxu0 %v4314
          %v4316 = vpop.f32.mrf.mxu0
          %v4317 = vadd.f32 %v4263, %v4316
          %4318 = vdwg.mxu0
          %4319 = vmatpush.msra.mxu0 0.0
          %4320 = vmatpush.msra.mxu0 0.0
          %4321 = vmatpush.msra.mxu0 0.0
          %4322 = vmatpush.msra.mxu0 0.0
          %4323 = vmatpush.msra.mxu0 0.0
          %4324 = vmatpush.msra.mxu0 0.0
          %4325 = vmatpush.msra.mxu0 0.0
          %4326 = vmatpush.msra.mxu0 0.0
          %4327 = vmatpush.msra.mxu0 0.0
          %4328 = vmatpush.msra.mxu0 0.0
          %4329 = vmatpush.msra.mxu0 0.0
          %4330 = vmatpush.msra.mxu0 0.0
          %4331 = vmatpush.msra.mxu0 0.0
          %4332 = vmatpush.msra.mxu0 0.0
          %4333 = vmatpush.msra.mxu0 0.0
          %v4334 = vand.u32 %v4181, 4294901760
          %v4335 = vsub.f32 %v4181, %v4334
          %4336 = vmatpush.msra.mxu0 %v4335
          %v4337 = vand.u32 %v4157, 4294901760
          %v4338 = vsub.f32 %v4157, %v4337
          %4339 = vmatmul.f32.gmra.mxu0 %v4338
          %v4340 = vpop.f32.mrf.mxu0
          %v4341 = vadd.f32 %v4289, %v4340
          %v4342 = vand.u32 %v4160, 4294901760
          %v4343 = vsub.f32 %v4160, %v4342
          %4344 = vmatmul.f32.gmra.mxu0 %v4343
          %v4345 = vpop.f32.mrf.mxu0
          %v4346 = vadd.f32 %v4293, %v4345
          %v4347 = vand.u32 %v4163, 4294901760
          %v4348 = vsub.f32 %v4163, %v4347
          %4349 = vmatmul.f32.gmra.mxu0 %v4348
          %v4350 = vpop.f32.mrf.mxu0
          %v4351 = vadd.f32 %v4297, %v4350
          %v4352 = vand.u32 %v4166, 4294901760
          %v4353 = vsub.f32 %v4166, %v4352
          %4354 = vmatmul.f32.gmra.mxu0 %v4353
          %v4355 = vpop.f32.mrf.mxu0
          %v4356 = vadd.f32 %v4301, %v4355
          %v4357 = vand.u32 %v4169, 4294901760
          %v4358 = vsub.f32 %v4169, %v4357
          %4359 = vmatmul.f32.gmra.mxu0 %v4358
          %v4360 = vpop.f32.mrf.mxu0
          %v4361 = vadd.f32 %v4305, %v4360
          %v4362 = vand.u32 %v4172, 4294901760
          %v4363 = vsub.f32 %v4172, %v4362
          %4364 = vmatmul.f32.gmra.mxu0 %v4363
          %v4365 = vpop.f32.mrf.mxu0
          %v4366 = vadd.f32 %v4309, %v4365
          %v4367 = vand.u32 %v4175, 4294901760
          %v4368 = vsub.f32 %v4175, %v4367
          %4369 = vmatmul.f32.gmra.mxu0 %v4368
          %v4370 = vpop.f32.mrf.mxu0
          %v4371 = vadd.f32 %v4313, %v4370
          %v4372 = vand.u32 %v4178, 4294901760
          %v4373 = vsub.f32 %v4178, %v4372
          %4374 = vmatmul.f32.gmra.mxu0 %v4373
          %v4375 = vpop.f32.mrf.mxu0
          %v4376 = vadd.f32 %v4317, %v4375
          %4377 = vdwg.mxu0
          %4378 = vmatpush.msra.mxu0 0.0
          %4379 = vmatpush.msra.mxu0 0.0
          %4380 = vmatpush.msra.mxu0 0.0
          %4381 = vmatpush.msra.mxu0 0.0
          %4382 = vmatpush.msra.mxu0 0.0
          %4383 = vmatpush.msra.mxu0 0.0
          %4384 = vmatpush.msra.mxu0 0.0
          %4385 = vmatpush.msra.mxu0 0.0
          %4386 = vmatpush.msra.mxu0 0.0
          %4387 = vmatpush.msra.mxu0 0.0
          %4388 = vmatpush.msra.mxu0 0.0
          %4389 = vmatpush.msra.mxu0 0.0
          %4390 = vmatpush.msra.mxu0 0.0
          %4391 = vmatpush.msra.mxu0 0.0
          %4392 = vmatpush.msra.mxu0 0.0
          %v4393 = vand.u32 %v4181, 4294901760
          %4394 = vmatpush.msra.mxu0 %v4393
          %v4395 = vand.u32 %v4157, 4294901760
          %v4396 = vsub.f32 %v4157, %v4395
          %v4397 = vand.u32 %v4396, 4294901760
          %4398 = vmatmul.f32.gmra.mxu0 %v4397
          %v4399 = vpop.f32.mrf.mxu0
          %v4400 = vadd.f32 %v4341, %v4399
          %v4401 = vand.u32 %v4160, 4294901760
          %v4402 = vsub.f32 %v4160, %v4401
          %v4403 = vand.u32 %v4402, 4294901760
          %4404 = vmatmul.f32.gmra.mxu0 %v4403
          %v4405 = vpop.f32.mrf.mxu0
          %v4406 = vadd.f32 %v4346, %v4405
          %v4407 = vand.u32 %v4163, 4294901760
          %v4408 = vsub.f32 %v4163, %v4407
          %v4409 = vand.u32 %v4408, 4294901760
          %4410 = vmatmul.f32.gmra.mxu0 %v4409
          %v4411 = vpop.f32.mrf.mxu0
          %v4412 = vadd.f32 %v4351, %v4411
          %v4413 = vand.u32 %v4166, 4294901760
          %v4414 = vsub.f32 %v4166, %v4413
          %v4415 = vand.u32 %v4414, 4294901760
          %4416 = vmatmul.f32.gmra.mxu0 %v4415
          %v4417 = vpop.f32.mrf.mxu0
          %v4418 = vadd.f32 %v4356, %v4417
          %v4419 = vand.u32 %v4169, 4294901760
          %v4420 = vsub.f32 %v4169, %v4419
          %v4421 = vand.u32 %v4420, 4294901760
          %4422 = vmatmul.f32.gmra.mxu0 %v4421
          %v4423 = vpop.f32.mrf.mxu0
          %v4424 = vadd.f32 %v4361, %v4423
          %v4425 = vand.u32 %v4172, 4294901760
          %v4426 = vsub.f32 %v4172, %v4425
          %v4427 = vand.u32 %v4426, 4294901760
          %4428 = vmatmul.f32.gmra.mxu0 %v4427
          %v4429 = vpop.f32.mrf.mxu0
          %v4430 = vadd.f32 %v4366, %v4429
          %v4431 = vand.u32 %v4175, 4294901760
          %v4432 = vsub.f32 %v4175, %v4431
          %v4433 = vand.u32 %v4432, 4294901760
          %4434 = vmatmul.f32.gmra.mxu0 %v4433
          %v4435 = vpop.f32.mrf.mxu0
          %v4436 = vadd.f32 %v4371, %v4435
          %v4437 = vand.u32 %v4178, 4294901760
          %v4438 = vsub.f32 %v4178, %v4437
          %v4439 = vand.u32 %v4438, 4294901760
          %4440 = vmatmul.f32.gmra.mxu0 %v4439
          %v4441 = vpop.f32.mrf.mxu0
          %v4442 = vadd.f32 %v4376, %v4441
          %4443 = vdwg.mxu0
          %4444 = vmatpush.msra.mxu0 0.0
          %4445 = vmatpush.msra.mxu0 0.0
          %4446 = vmatpush.msra.mxu0 0.0
          %4447 = vmatpush.msra.mxu0 0.0
          %4448 = vmatpush.msra.mxu0 0.0
          %4449 = vmatpush.msra.mxu0 0.0
          %4450 = vmatpush.msra.mxu0 0.0
          %4451 = vmatpush.msra.mxu0 0.0
          %4452 = vmatpush.msra.mxu0 0.0
          %4453 = vmatpush.msra.mxu0 0.0
          %4454 = vmatpush.msra.mxu0 0.0
          %4455 = vmatpush.msra.mxu0 0.0
          %4456 = vmatpush.msra.mxu0 0.0
          %4457 = vmatpush.msra.mxu0 0.0
          %4458 = vmatpush.msra.mxu0 0.0
          %v4459 = vand.u32 %v4181, 4294901760
          %v4460 = vsub.f32 %v4181, %v4459
          %v4461 = vand.u32 %v4460, 4294901760
          %4462 = vmatpush.msra.mxu0 %v4461
          %v4463 = vand.u32 %v4157, 4294901760
          %4464 = vmatmul.f32.gmra.mxu0 %v4463
          %v4465 = vpop.f32.mrf.mxu0
          %v4466 = vadd.f32 %v4400, %v4465
          %v4467 = vand.u32 %v4160, 4294901760
          %4468 = vmatmul.f32.gmra.mxu0 %v4467
          %v4469 = vpop.f32.mrf.mxu0
          %v4470 = vadd.f32 %v4406, %v4469
          %v4471 = vand.u32 %v4163, 4294901760
          %4472 = vmatmul.f32.gmra.mxu0 %v4471
          %v4473 = vpop.f32.mrf.mxu0
          %v4474 = vadd.f32 %v4412, %v4473
          %v4475 = vand.u32 %v4166, 4294901760
          %4476 = vmatmul.f32.gmra.mxu0 %v4475
          %v4477 = vpop.f32.mrf.mxu0
          %v4478 = vadd.f32 %v4418, %v4477
          %v4479 = vand.u32 %v4169, 4294901760
          %4480 = vmatmul.f32.gmra.mxu0 %v4479
          %v4481 = vpop.f32.mrf.mxu0
          %v4482 = vadd.f32 %v4424, %v4481
          %v4483 = vand.u32 %v4172, 4294901760
          %4484 = vmatmul.f32.gmra.mxu0 %v4483
          %v4485 = vpop.f32.mrf.mxu0
          %v4486 = vadd.f32 %v4430, %v4485
          %v4487 = vand.u32 %v4175, 4294901760
          %4488 = vmatmul.f32.gmra.mxu0 %v4487
          %v4489 = vpop.f32.mrf.mxu0
          %v4490 = vadd.f32 %v4436, %v4489
          %v4491 = vand.u32 %v4178, 4294901760
          %4492 = vmatmul.f32.gmra.mxu0 %v4491
          %v4493 = vpop.f32.mrf.mxu0
          %v4494 = vadd.f32 %v4442, %v4493
          %4495 = vdwg.mxu0
          %4496 = vmatpush.msra.mxu0 0.0
          %4497 = vmatpush.msra.mxu0 0.0
          %4498 = vmatpush.msra.mxu0 0.0
          %4499 = vmatpush.msra.mxu0 0.0
          %4500 = vmatpush.msra.mxu0 0.0
          %4501 = vmatpush.msra.mxu0 0.0
          %4502 = vmatpush.msra.mxu0 0.0
          %4503 = vmatpush.msra.mxu0 0.0
          %4504 = vmatpush.msra.mxu0 0.0
          %4505 = vmatpush.msra.mxu0 0.0
          %4506 = vmatpush.msra.mxu0 0.0
          %4507 = vmatpush.msra.mxu0 0.0
          %4508 = vmatpush.msra.mxu0 0.0
          %4509 = vmatpush.msra.mxu0 0.0
          %4510 = vmatpush.msra.mxu0 0.0
          %v4511 = vand.u32 %v4181, 4294901760
          %4512 = vmatpush.msra.mxu0 %v4511
          %v4513 = vand.u32 %v4157, 4294901760
          %4514 = vmatmul.f32.gmra.mxu0 %v4513
          %v4515 = vpop.f32.mrf.mxu0
          %v4516 = vadd.f32 %v4466, %v4515
          %v4517 = vand.u32 %v4160, 4294901760
          %4518 = vmatmul.f32.gmra.mxu0 %v4517
          %v4519 = vpop.f32.mrf.mxu0
          %v4520 = vadd.f32 %v4470, %v4519
          %v4521 = vand.u32 %v4163, 4294901760
          %4522 = vmatmul.f32.gmra.mxu0 %v4521
          %v4523 = vpop.f32.mrf.mxu0
          %v4524 = vadd.f32 %v4474, %v4523
          %v4525 = vand.u32 %v4166, 4294901760
          %4526 = vmatmul.f32.gmra.mxu0 %v4525
          %v4527 = vpop.f32.mrf.mxu0
          %v4528 = vadd.f32 %v4478, %v4527
          %v4529 = vand.u32 %v4169, 4294901760
          %4530 = vmatmul.f32.gmra.mxu0 %v4529
          %v4531 = vpop.f32.mrf.mxu0
          %v4532 = vadd.f32 %v4482, %v4531
          %v4533 = vand.u32 %v4172, 4294901760
          %4534 = vmatmul.f32.gmra.mxu0 %v4533
          %v4535 = vpop.f32.mrf.mxu0
          %v4536 = vadd.f32 %v4486, %v4535
          %v4537 = vand.u32 %v4175, 4294901760
          %4538 = vmatmul.f32.gmra.mxu0 %v4537
          %v4539 = vpop.f32.mrf.mxu0
          %v4540 = vadd.f32 %v4490, %v4539
          %v4541 = vand.u32 %v4178, 4294901760
          %4542 = vmatmul.f32.gmra.mxu0 %v4541
          %v4543 = vpop.f32.mrf.mxu0
          %v4544 = vadd.f32 %v4494, %v4543
          %4545 = vdwg.mxu0
          %v4546 = vadd.f32 %v4140, %v4516
          %v4547 = vadd.f32 %v4141, %v4520
          %v4548 = vadd.f32 %v4142, %v4524
          %v4549 = vadd.f32 %v4143, %v4528
          %v4550 = vadd.f32 %v4144, %v4532
          %v4551 = vadd.f32 %v4145, %v4536
          %v4552 = vadd.f32 %v4146, %v4540
          %v4553 = vadd.f32 %v4147, %v4544
          %4554 = vst.msk [vmem:[#allocation2] sm:$0xff] %vm872, %v4546
          %4555 = vst.msk [vmem:[#allocation2 + $0x8] sm:$0xff] %vm872, %v4547
          %4556 = vst.msk [vmem:[#allocation2 + $0x10] sm:$0xff] %vm872, %v4548
          %4557 = vst.msk [vmem:[#allocation2 + $0x18] sm:$0xff] %vm872, %v4549
          %4558 = vst.msk [vmem:[#allocation2 + $0x20] sm:$0xff] %vm872, %v4550
          %4559 = vst.msk [vmem:[#allocation2 + $0x28] sm:$0xff] %vm872, %v4551
          %4560 = vst.msk [vmem:[#allocation2 + $0x30] sm:$0xff] %vm872, %v4552
          %4561 = vst.msk [vmem:[#allocation2 + $0x38] sm:$0xff] %vm872, %v4553
        $region64: #{tpu_custom_call.1} parent=47 // pred_fallthru
          _
        %p4562 = scmp.eq.s32.totalorder %s31, 2
        // Predicated region
        $region65: #{tpu_custom_call.1} parent=47 // pred_check
          %p4563 = pneg %p4562
        $region66: #{tpu_custom_call.1} parent=47 // pred_check_branch
          %4565 = sbr.rel (%p4563) target = $region68
        $region67: #{tpu_custom_call.1} parent=47 // pred_region
          %v4566 = vld [vmem:[#allocation2] sm:$0xff]
          %v4567 = vld [vmem:[#allocation2 + $0x8] sm:$0xff]
          %v4568 = vld [vmem:[#allocation2 + $0x10] sm:$0xff]
          %v4569 = vld [vmem:[#allocation2 + $0x18] sm:$0xff]
          %v4570 = vld [vmem:[#allocation2 + $0x20] sm:$0xff]
          %v4571 = vld [vmem:[#allocation2 + $0x28] sm:$0xff]
          %v4572 = vld [vmem:[#allocation2 + $0x30] sm:$0xff]
          %v4573 = vld [vmem:[#allocation2 + $0x38] sm:$0xff]
          %v4574 = vld [vmem:[%s5] sm:$0x1]
          %v4576 = vperm.slane %v4574, 0
          %v4578 = vmul.f32 %v4566, %v4576
          %v4579 = vmul.f32 %v4567, %v4576
          %v4580 = vmul.f32 %v4568, %v4576
          %v4581 = vmul.f32 %v4569, %v4576
          %v4582 = vmul.f32 %v4570, %v4576
          %v4583 = vmul.f32 %v4571, %v4576
          %v4584 = vmul.f32 %v4572, %v4576
          %v4585 = vmul.f32 %v4573, %v4576
          %v4586 = vld [vmem:[%s6] sm:$0x1]
          %v4588 = vperm.slane %v4586, 0
          %v4590 = vadd.f32 %v4578, %v4588
          %v4591 = vadd.f32 %v4579, %v4588
          %v4592 = vadd.f32 %v4580, %v4588
          %v4593 = vadd.f32 %v4581, %v4588
          %v4594 = vadd.f32 %v4582, %v4588
          %v4595 = vadd.f32 %v4583, %v4588
          %v4596 = vadd.f32 %v4584, %v4588
          %v4597 = vadd.f32 %v4585, %v4588
          %v4598 = vmax.f32 %v4590, 0.0
          %v4599 = vmax.f32 %v4591, 0.0
          %v4600 = vmax.f32 %v4592, 0.0
          %v4601 = vmax.f32 %v4593, 0.0
          %v4602 = vmax.f32 %v4594, 0.0
          %v4603 = vmax.f32 %v4595, 0.0
          %v4604 = vmax.f32 %v4596, 0.0
          %v4605 = vmax.f32 %v4597, 0.0
          %vm4606 = vcmask 31744
          %4607 = vst.msk [vmem:[%s399] sm:$0xff] %vm4606, %v4598
          %4608 = vst.msk [vmem:[%s399 + $0x8] sm:$0xff] %vm4606, %v4599
          %4609 = vst.msk [vmem:[%s399 + $0x10] sm:$0xff] %vm4606, %v4600
          %4610 = vst.msk [vmem:[%s399 + $0x18] sm:$0xff] %vm4606, %v4601
          %4611 = vst.msk [vmem:[%s399 + $0x20] sm:$0xff] %vm4606, %v4602
          %4612 = vst.msk [vmem:[%s399 + $0x28] sm:$0xff] %vm4606, %v4603
          %4613 = vst.msk [vmem:[%s399 + $0x30] sm:$0xff] %vm4606, %v4604
          %4614 = vst.msk [vmem:[%s399 + $0x38] sm:$0xff] %vm4606, %v4605
        $region68: #{tpu_custom_call.1} parent=47 // pred_fallthru
          _
        %p4615 = scmp.lt.s32.totalorder %s29, 1
        %s4616 = scalar_select %p4615, %s29, 1
        %p4617 = scmp.lt.s32.totalorder %s30, 3
        %s4618 = scalar_select %p4617, %s30, 3
        %s4619 = smul.addr %s4618, 8
        %s4620 = smul.addr %s4616, 32
        %s4621 = sadd.s32 %s4619, %s4620
        %s4622 = smul.addr %s4621, 8
        %s4623 = scalar_lea.vmem %s7, %s4622
        // Predicated region
        $region69: #{tpu_custom_call.1} parent=47 // pred_check
          %p4624 = pneg %p234
        $region70: #{tpu_custom_call.1} parent=47 // pred_check_branch
          %4626 = sbr.rel (%p4624) target = $region72
        $region71: #{tpu_custom_call.1} parent=47 // pred_region
          _
        $region72: #{tpu_custom_call.1} parent=47 // pred_fallthru
          _
      $region48: #{tpu_custom_call.1} parent=5 // pred_fallthru
        _
      %p4627 = scmp.le.s32.totalorder 2, %s19
      // Predicated region
      $region73: #{tpu_custom_call.1} parent=5 // pred_check
        %p4628 = pneg %p4627
      $region74: #{tpu_custom_call.1} parent=5 // pred_check_branch
        %4630 = sbr.rel (%p4628) target = $region76
      $region75: #{tpu_custom_call.1} parent=5 // pred_region
        %s4631 = ssub.s32 %s19, 2
        // Predicated region
        $region77: #{tpu_custom_call.1} parent=75 // pred_check
          %p4632 = pneg %p240
        $region78: #{tpu_custom_call.1} parent=75 // pred_check_branch
          %4634 = sbr.rel (%p4632) target = $region80
        $region79: #{tpu_custom_call.1} parent=75 // pred_region
          %p4635 = scmp.lt.s32.totalorder %s32, 1
          %s4636 = scalar_select %p4635, %s32, 1
          %p4637 = scmp.lt.s32.totalorder %s33, 3
          %s4638 = scalar_select %p4637, %s33, 3
          %s4639 = smul.addr %s4638, 8
          %s4640 = smul.addr %s4636, 32
          %s4641 = sadd.s32 %s4639, %s4640
          %s4642 = smul.addr %s4641, 8
          %s4643 = scalar_lea.vmem %s7, %s4642
        $region80: #{tpu_custom_call.1} parent=75 // pred_fallthru
          _
      $region76: #{tpu_custom_call.1} parent=5 // pred_fallthru
        _
    $region6: #{tpu_custom_call.1} parent=1 // loop_footer
      %s23 = sadd.s32 1, %s19
    $region7: #{tpu_custom_call.1} parent=1 // loop_footer_branch
      %18 = sbr.rel target = $region3
    $region8: #{tpu_custom_call.1} parent=1 // loop_exit
      _
    %4644 = vsyncpa [#allocation5], 1
    %s4645 = scalar_lea.sflag [#allocation5], 1
    %4646 = vsyncpa %s4645, 1
    %4647 = vsyncpa [#allocation7], 1
    %s4648 = scalar_lea.sflag [#allocation7], 1
    %4649 = vsyncpa %s4648, 1

</llo_original>
